<compile_context>
chip_gen: v6e
topology: v6e:2x2x1
jax: 0.10.0
libtpu: 0.0.40
codegen_flags: <defaults>
</compile_context>

<pallas_src>
import math
import jax
import jax.numpy as jnp
from jax.experimental import pallas as pl
from jax.experimental.pallas import tpu as pltpu

SIZE = 512          # `size`
ENT = 512           # hard-coded 512 entity dim in the module
INTER = 512         # `intermediate_size` (must equal SIZE == ENT for the forward to work)
EPS = 1e-6
_INV_SQRT2 = 1.0 / math.sqrt(2.0)


def _gelu(x):
    # exact erf-based gelu, matching the reference `gelu`
    return x * 0.5 * (1.0 + jax.lax.erf(x * _INV_SQRT2))


def _layernorm_ref(h, a, b, feat):
    # torch Tensor.std(-1) is the *unbiased* (N-1) estimator, and eps is added to std.
    mean = jnp.mean(h, axis=-1, keepdims=True)
    var = jnp.sum((h - mean) ** 2, axis=-1, keepdims=True) / (feat - 1)
    std = jnp.sqrt(var)
    return a * (h - mean) / (std + EPS) + b


def _layernorm_kernel(h, a, b, feat):
    # Same math as _layernorm_ref, but the divide goes through pl.reciprocal (EUP slot).
    mean = jnp.mean(h, axis=-1, keepdims=True)
    d = h - mean
    var = jnp.sum(d * d, axis=-1, keepdims=True) * (1.0 / (feat - 1))
    inv = pl.reciprocal(jnp.sqrt(var) + EPS, approx=False)
    return a * d * inv + b


def sublayer_kernel(x_ref, e_ref,
                    w1_ref, b1_ref, w2_ref, b2_ref,
                    a_ref, b_ref, ae_ref, be_ref,
                    out_ref, out_ent_ref):
    x = x_ref[...]                                   # (TM, SIZE)  f32
    e = e_ref[...]                                   # (TM, ENT)   f32

    # IntermediateLayer: gelu( x @ Wi + bi + e @ Wie + bie )
    # Fused as a single MXU call on concat([x, e]) with W1 = [Wi; Wie], b1 = bi + bie.
    xe = jnp.concatenate([x, e], axis=-1).astype(jnp.bfloat16)          # (TM, SIZE+ENT)
    s = jnp.dot(xe, w1_ref[...], preferred_element_type=jnp.float32) + b1_ref[...]
    io = _gelu(s).astype(jnp.bfloat16)                                  # (TM, INTER)

    # dense / dense_ent fused: io @ [Wd, Wde] + [bd, bde]  -> (TM, SIZE+ENT)
    hh = jnp.dot(io, w2_ref[...], preferred_element_type=jnp.float32) + b2_ref[...]

    # word branch: +residual -> LayerNorm(size);  dropout is identity (inference)
    h = hh[:, :SIZE] + x
    out_ref[...] = _layernorm_kernel(h, a_ref[...], b_ref[...], SIZE).astype(out_ref.dtype)

    # entity branch: +residual -> LayerNorm(512)
    he = hh[:, SIZE:] + e
    out_ent_ref[...] = _layernorm_kernel(he, ae_ref[...], be_ref[...], ENT).astype(out_ent_ref.dtype)


def sublayer_connection_4kg(attn_out, attn_out_ent, params, *, tm=512):
    """attn_out: (B, S, SIZE) f32, attn_out_ent: (B, S, ENT) f32.

    tm guidance: ~256-512 on v5e (16 MiB scoped default / 128x128 MXU),
    512-1024 on v6e / v7x (vmem_limit_bytes is raised below).
    """
    B, S, D = attn_out.shape
    assert D == SIZE and attn_out_ent.shape == (B, S, ENT)
    N = B * S

    # Clamp the row tile to the (8-rounded) problem size and pad N up to a multiple of it.
    n8 = -(-N // 8) * 8
    tm_eff = max(8, min(int(tm), n8))
    tm_eff = -(-tm_eff // 8) * 8
    n_pad = -(-N // tm_eff) * tm_eff
    grid = n_pad // tm_eff

    x2 = attn_out.reshape(N, SIZE).astype(jnp.float32)
    e2 = attn_out_ent.reshape(N, ENT).astype(jnp.float32)
    if n_pad != N:
        pad = n_pad - N
        x2 = jnp.pad(x2, ((0, pad), (0, 0)))     # zero rows are LayerNorm-safe (0/(0+eps)=0)
        e2 = jnp.pad(e2, ((0, pad), (0, 0)))

    (wi, bi, wie, bie, wd, bd, wde, bde, a2, b2, a2e, b2e) = params

    # Fused weights in bf16 (native MXU path, f32 accumulation); biases/norm params stay f32.
    w1 = jnp.concatenate([wi, wie], axis=0).astype(jnp.bfloat16)      # (SIZE+ENT, INTER)
    b1 = (bi + bie).astype(jnp.float32)                               # (1, INTER)
    w2 = jnp.concatenate([wd, wde], axis=1).astype(jnp.bfloat16)      # (INTER, SIZE+ENT)
    b2c = jnp.concatenate([bd, bde], axis=1).astype(jnp.float32)      # (1, SIZE+ENT)

    row_spec = lambda c: pl.BlockSpec((tm_eff, c), lambda i: (i, 0))
    full_spec = lambda r, c: pl.BlockSpec((r, c), lambda i: (0, 0))

    flops = 2 * n_pad * (SIZE + ENT) * INTER + 2 * n_pad * INTER * (SIZE + ENT)
    bytes_accessed = (4 * n_pad * (SIZE + ENT) * 2                    # activations in + out (f32)
                      + 2 * 2 * (SIZE + ENT) * INTER                  # bf16 fused weights
                      + 4 * (INTER + (SIZE + ENT) + 2 * SIZE + 2 * ENT))
    cost = pl.CostEstimate(flops=int(flops),
                           transcendentals=int(n_pad * INTER),
                           bytes_accessed=int(bytes_accessed))

    out, out_ent = pl.pallas_call(
        sublayer_kernel,
        out_shape=(jax.ShapeDtypeStruct((n_pad, SIZE), jnp.float32),
                   jax.ShapeDtypeStruct((n_pad, ENT), jnp.float32)),
        grid_spec=pltpu.PrefetchScalarGridSpec(
            num_scalar_prefetch=0,
            grid=(grid,),
            in_specs=[
                row_spec(SIZE),                        # x
                row_spec(ENT),                         # e
                full_spec(SIZE + ENT, INTER),          # W1 = [Wi; Wie]
                full_spec(1, INTER),                   # b1 = bi + bie
                full_spec(INTER, SIZE + ENT),          # W2 = [Wd, Wde]
                full_spec(1, SIZE + ENT),              # [bd, bde]
                full_spec(1, SIZE), full_spec(1, SIZE),    # norm a_2, b_2
                full_spec(1, ENT), full_spec(1, ENT),      # norm_ent a_2, b_2
            ],
            out_specs=[row_spec(SIZE), row_spec(ENT)],
        ),
        compiler_params=pltpu.CompilerParams(
            dimension_semantics=("parallel",),
            vmem_limit_bytes=48 * 1024 * 1024),
        cost_estimate=cost,
    )(x2, e2, w1, b1, w2, b2c, a2, b2, a2e, b2e)

    if n_pad != N:
        out = out[:N]
        out_ent = out_ent[:N]
    return out.reshape(B, S, SIZE), out_ent.reshape(B, S, ENT)


def init_params(key):
    """Deterministic synthetic params. Linear weights stored as (in, out) = W.T."""
    ks = jax.random.split(key, 8)
    scale = 0.02
    wi = scale * jax.random.normal(ks[0], (SIZE, INTER), jnp.float32)
    bi = scale * jax.random.normal(ks[1], (1, INTER), jnp.float32)
    wie = scale * jax.random.normal(ks[2], (ENT, INTER), jnp.float32)
    bie = scale * jax.random.normal(ks[3], (1, INTER), jnp.float32)
    wd = scale * jax.random.normal(ks[4], (INTER, SIZE), jnp.float32)
    bd = scale * jax.random.normal(ks[5], (1, SIZE), jnp.float32)
    wde = scale * jax.random.normal(ks[6], (INTER, ENT), jnp.float32)
    bde = scale * jax.random.normal(ks[7], (1, ENT), jnp.float32)
    a2 = jnp.ones((1, SIZE), jnp.float32)    # norm.a_2
    b2 = jnp.zeros((1, SIZE), jnp.float32)   # norm.b_2
    a2e = jnp.ones((1, ENT), jnp.float32)    # norm_ent.a_2
    b2e = jnp.zeros((1, ENT), jnp.float32)   # norm_ent.b_2
    return (wi, bi, wie, bie, wd, bd, wde, bde, a2, b2, a2e, b2e)


def reference(attn_out, attn_out_ent, params):
    """Plain-JAX f32 reference of the PyTorch forward (dropout = identity)."""
    (wi, bi, wie, bie, wd, bd, wde, bde, a2, b2, a2e, b2e) = params
    io = _gelu(attn_out @ wi + bi[0] + attn_out_ent @ wie + bie[0])
    h = io @ wd + bd[0] + attn_out
    he = io @ wde + bde[0] + attn_out_ent
    return (_layernorm_ref(h, a2[0], b2[0], SIZE),
            _layernorm_ref(he, a2e[0], b2e[0], ENT))


if __name__ == "__main__":
    key = jax.random.PRNGKey(0)
    kx, ke, kp = jax.random.split(key, 3)

    B, S = 2, 8
    attention_output = jax.random.normal(kx, (B, S, SIZE), jnp.float32)
    attention_output_ent = jax.random.normal(ke, (B, S, ENT), jnp.float32)
    params = init_params(kp)

    out, out_ent = sublayer_connection_4kg(attention_output, attention_output_ent, params)
    jax.block_until_ready((out, out_ent))

    ref_out, ref_out_ent = reference(attention_output, attention_output_ent, params)
    # bf16 matmul operands with f32 accumulation -> slightly looser tolerance vs f32 reference.
    assert jnp.allclose(out, ref_out, atol=2e-2, rtol=2e-2)
    assert jnp.allclose(out_ent, ref_out_ent, atol=2e-2, rtol=2e-2)

    print("KERNEL_OK")
</pallas_src>

<mosaic_0001>
module attributes {stable_mosaic.version = 11 : i64} {
  func.func @sublayer_kernel(%arg0: i32, %arg1: memref<16x512xf32, #tpu.memory_space<vmem>>, %arg2: memref<16x512xf32, #tpu.memory_space<vmem>>, %arg3: memref<1024x512xbf16, #tpu.memory_space<vmem>>, %arg4: memref<1x512xf32, #tpu.memory_space<vmem>>, %arg5: memref<512x1024xbf16, #tpu.memory_space<vmem>>, %arg6: memref<1x1024xf32, #tpu.memory_space<vmem>>, %arg7: memref<1x512xf32, #tpu.memory_space<vmem>>, %arg8: memref<1x512xf32, #tpu.memory_space<vmem>>, %arg9: memref<1x512xf32, #tpu.memory_space<vmem>>, %arg10: memref<1x512xf32, #tpu.memory_space<vmem>>, %arg11: memref<16x512xf32, #tpu.memory_space<vmem>>, %arg12: memref<16x512xf32, #tpu.memory_space<vmem>>) attributes {dimension_semantics = [#tpu.dimension_semantics<parallel>], iteration_bounds = array<i64: 1>, scalar_prefetch = 0 : i64, scratch_operands = 0 : i64, tpu.core_type = #tpu.core_type<tc>, window_params = [{transform_indices = @transform_0, window_bounds = array<i64: 16, 512>}, {transform_indices = @transform_1, window_bounds = array<i64: 16, 512>}, {pipeline_mode = #tpu.pipeline_mode<synchronous>, transform_indices = @transform_2, window_bounds = array<i64: 1024, 512>}, {pipeline_mode = #tpu.pipeline_mode<synchronous>, transform_indices = @transform_3, window_bounds = array<i64: 1, 512>}, {pipeline_mode = #tpu.pipeline_mode<synchronous>, transform_indices = @transform_4, window_bounds = array<i64: 512, 1024>}, {pipeline_mode = #tpu.pipeline_mode<synchronous>, transform_indices = @transform_5, window_bounds = array<i64: 1, 1024>}, {pipeline_mode = #tpu.pipeline_mode<synchronous>, transform_indices = @transform_6, window_bounds = array<i64: 1, 512>}, {pipeline_mode = #tpu.pipeline_mode<synchronous>, transform_indices = @transform_7, window_bounds = array<i64: 1, 512>}, {pipeline_mode = #tpu.pipeline_mode<synchronous>, transform_indices = @transform_8, window_bounds = array<i64: 1, 512>}, {pipeline_mode = #tpu.pipeline_mode<synchronous>, transform_indices = @transform_9, window_bounds = array<i64: 1, 512>}, {transform_indices = @transform_10, window_bounds = array<i64: 16, 512>}, {transform_indices = @transform_11, window_bounds = array<i64: 16, 512>}]} {
    %c0 = arith.constant 0 : index
    %c0_0 = arith.constant 0 : index
    %0 = vector.load %arg1[%c0, %c0_0] : memref<16x512xf32, #tpu.memory_space<vmem>>, vector<16x512xf32>
    %c0_1 = arith.constant 0 : index
    %c0_2 = arith.constant 0 : index
    %1 = vector.load %arg2[%c0_1, %c0_2] : memref<16x512xf32, #tpu.memory_space<vmem>>, vector<16x512xf32>
    %2 = tpu.concatenate %0, %1 in 1 : vector<16x512xf32>, vector<16x512xf32> -> vector<16x1024xf32>
    %3 = arith.truncf %2 : vector<16x1024xf32> to vector<16x1024xbf16>
    %c0_3 = arith.constant 0 : index
    %c0_4 = arith.constant 0 : index
    %4 = vector.load %arg3[%c0_3, %c0_4] : memref<1024x512xbf16, #tpu.memory_space<vmem>>, vector<1024x512xbf16>
    %cst = arith.constant dense<0.000000e+00> : vector<16x512xf32>
    %5 = tpu.matmul %3, %4, %cst {dimension_numbers = #tpu.dot_dimension_numbers<[1], [0], [0], [1], [0, 0, 1, 1], [], []>} : vector<16x1024xbf16>, vector<1024x512xbf16>, vector<16x512xf32> -> vector<16x512xf32>
    %c0_5 = arith.constant 0 : index
    %c0_6 = arith.constant 0 : index
    %6 = vector.load %arg4[%c0_5, %c0_6] : memref<1x512xf32, #tpu.memory_space<vmem>>, vector<1x512xf32>
    %7 = vector.broadcast %6 : vector<1x512xf32> to vector<16x512xf32>
    %8 = arith.addf %5, %7 : vector<16x512xf32>
    %cst_7 = arith.constant 5.000000e-01 : f32
    %9 = vector.broadcast %cst_7 : f32 to vector<16x512xf32>
    %10 = arith.mulf %8, %9 : vector<16x512xf32>
    %cst_8 = arith.constant 0.707106769 : f32
    %11 = vector.broadcast %cst_8 : f32 to vector<16x512xf32>
    %12 = arith.mulf %8, %11 : vector<16x512xf32>
    %13 = math.erf %12 : vector<16x512xf32>
    %cst_9 = arith.constant 1.000000e+00 : f32
    %14 = vector.broadcast %cst_9 : f32 to vector<16x512xf32>
    %15 = arith.addf %14, %13 : vector<16x512xf32>
    %16 = arith.mulf %10, %15 : vector<16x512xf32>
    %17 = arith.truncf %16 : vector<16x512xf32> to vector<16x512xbf16>
    %c0_10 = arith.constant 0 : index
    %c0_11 = arith.constant 0 : index
    %18 = vector.load %arg5[%c0_10, %c0_11] : memref<512x1024xbf16, #tpu.memory_space<vmem>>, vector<512x1024xbf16>
    %cst_12 = arith.constant dense<0.000000e+00> : vector<16x1024xf32>
    %19 = tpu.matmul %17, %18, %cst_12 {dimension_numbers = #tpu.dot_dimension_numbers<[1], [0], [0], [1], [0, 0, 1, 1], [], []>} : vector<16x512xbf16>, vector<512x1024xbf16>, vector<16x1024xf32> -> vector<16x1024xf32>
    %c0_13 = arith.constant 0 : index
    %c0_14 = arith.constant 0 : index
    %20 = vector.load %arg6[%c0_13, %c0_14] : memref<1x1024xf32, #tpu.memory_space<vmem>>, vector<1x1024xf32>
    %21 = vector.broadcast %20 : vector<1x1024xf32> to vector<16x1024xf32>
    %22 = arith.addf %19, %21 : vector<16x1024xf32>
    %23 = vector.extract_strided_slice %22 {offsets = [0, 0], sizes = [16, 512], strides = [1, 1]} : vector<16x1024xf32> to vector<16x512xf32>
    %24 = arith.addf %23, %0 : vector<16x512xf32>
    %c0_15 = arith.constant 0 : index
    %c0_16 = arith.constant 0 : index
    %25 = vector.load %arg7[%c0_15, %c0_16] : memref<1x512xf32, #tpu.memory_space<vmem>>, vector<1x512xf32>
    %c0_17 = arith.constant 0 : index
    %c0_18 = arith.constant 0 : index
    %26 = vector.load %arg8[%c0_17, %c0_18] : memref<1x512xf32, #tpu.memory_space<vmem>>, vector<1x512xf32>
    %cst_19 = arith.constant dense<0.000000e+00> : vector<16xf32>
    %27 = vector.multi_reduction <add>, %24, %cst_19 [1] : vector<16x512xf32> to vector<16xf32>
    %28 = vector.shape_cast %27 : vector<16xf32> to vector<16x1xf32>
    %cst_20 = arith.constant 5.120000e+02 : f32
    %29 = vector.broadcast %cst_20 : f32 to vector<16x1xf32>
    %30 = arith.divf %28, %29 : vector<16x1xf32>
    %31 = vector.broadcast %30 : vector<16x1xf32> to vector<16x512xf32>
    %32 = arith.subf %24, %31 : vector<16x512xf32>
    %33 = arith.mulf %32, %32 : vector<16x512xf32>
    %cst_21 = arith.constant dense<0.000000e+00> : vector<16xf32>
    %34 = vector.multi_reduction <add>, %33, %cst_21 [1] : vector<16x512xf32> to vector<16xf32>
    %35 = vector.shape_cast %34 : vector<16xf32> to vector<16x1xf32>
    %cst_22 = arith.constant 0.00195694715 : f32
    %36 = vector.broadcast %cst_22 : f32 to vector<16x1xf32>
    %37 = arith.mulf %35, %36 : vector<16x1xf32>
    %38 = math.sqrt %37 : vector<16x1xf32>
    %cst_23 = arith.constant 9.99999997E-7 : f32
    %39 = vector.broadcast %cst_23 : f32 to vector<16x1xf32>
    %40 = arith.addf %38, %39 : vector<16x1xf32>
    %41 = tpu.reciprocal %40 : vector<16x1xf32> -> vector<16x1xf32>
    %42 = vector.broadcast %25 : vector<1x512xf32> to vector<16x512xf32>
    %43 = arith.mulf %42, %32 : vector<16x512xf32>
    %44 = vector.broadcast %41 : vector<16x1xf32> to vector<16x512xf32>
    %45 = arith.mulf %43, %44 : vector<16x512xf32>
    %46 = vector.broadcast %26 : vector<1x512xf32> to vector<16x512xf32>
    %47 = arith.addf %45, %46 : vector<16x512xf32>
    %c0_24 = arith.constant 0 : index
    %c0_25 = arith.constant 0 : index
    %48 = vector.load %arg11[%c0_24, %c0_25] : memref<16x512xf32, #tpu.memory_space<vmem>>, vector<16x512xf32>
    tpu.vector_store %arg11[%c0_24, %c0_25], %47 {strides = array<i32>} : memref<16x512xf32, #tpu.memory_space<vmem>>, vector<16x512xf32>,
    %49 = vector.extract_strided_slice %22 {offsets = [0, 512], sizes = [16, 512], strides = [1, 1]} : vector<16x1024xf32> to vector<16x512xf32>
    %50 = arith.addf %49, %1 : vector<16x512xf32>
    %c0_26 = arith.constant 0 : index
    %c0_27 = arith.constant 0 : index
    %51 = vector.load %arg9[%c0_26, %c0_27] : memref<1x512xf32, #tpu.memory_space<vmem>>, vector<1x512xf32>
    %c0_28 = arith.constant 0 : index
    %c0_29 = arith.constant 0 : index
    %52 = vector.load %arg10[%c0_28, %c0_29] : memref<1x512xf32, #tpu.memory_space<vmem>>, vector<1x512xf32>
    %cst_30 = arith.constant dense<0.000000e+00> : vector<16xf32>
    %53 = vector.multi_reduction <add>, %50, %cst_30 [1] : vector<16x512xf32> to vector<16xf32>
    %54 = vector.shape_cast %53 : vector<16xf32> to vector<16x1xf32>
    %cst_31 = arith.constant 5.120000e+02 : f32
    %55 = vector.broadcast %cst_31 : f32 to vector<16x1xf32>
    %56 = arith.divf %54, %55 : vector<16x1xf32>
    %57 = vector.broadcast %56 : vector<16x1xf32> to vector<16x512xf32>
    %58 = arith.subf %50, %57 : vector<16x512xf32>
    %59 = arith.mulf %58, %58 : vector<16x512xf32>
    %cst_32 = arith.constant dense<0.000000e+00> : vector<16xf32>
    %60 = vector.multi_reduction <add>, %59, %cst_32 [1] : vector<16x512xf32> to vector<16xf32>
    %61 = vector.shape_cast %60 : vector<16xf32> to vector<16x1xf32>
    %cst_33 = arith.constant 0.00195694715 : f32
    %62 = vector.broadcast %cst_33 : f32 to vector<16x1xf32>
    %63 = arith.mulf %61, %62 : vector<16x1xf32>
    %64 = math.sqrt %63 : vector<16x1xf32>
    %cst_34 = arith.constant 9.99999997E-7 : f32
    %65 = vector.broadcast %cst_34 : f32 to vector<16x1xf32>
    %66 = arith.addf %64, %65 : vector<16x1xf32>
    %67 = tpu.reciprocal %66 : vector<16x1xf32> -> vector<16x1xf32>
    %68 = vector.broadcast %51 : vector<1x512xf32> to vector<16x512xf32>
    %69 = arith.mulf %68, %58 : vector<16x512xf32>
    %70 = vector.broadcast %67 : vector<16x1xf32> to vector<16x512xf32>
    %71 = arith.mulf %69, %70 : vector<16x512xf32>
    %72 = vector.broadcast %52 : vector<1x512xf32> to vector<16x512xf32>
    %73 = arith.addf %71, %72 : vector<16x512xf32>
    %c0_35 = arith.constant 0 : index
    %c0_36 = arith.constant 0 : index
    %74 = vector.load %arg12[%c0_35, %c0_36] : memref<16x512xf32, #tpu.memory_space<vmem>>, vector<16x512xf32>
    tpu.vector_store %arg12[%c0_35, %c0_36], %73 {strides = array<i32>} : memref<16x512xf32, #tpu.memory_space<vmem>>, vector<16x512xf32>,
    return
  }
  func.func @transform_0(%arg0: i32) -> (i32, i32) {
    %c0_i32 = arith.constant 0 : i32
    %c0_i32_0 = arith.constant 0 : i32
    return %arg0, %c0_i32 : i32, i32
  }
  func.func @transform_1(%arg0: i32) -> (i32, i32) {
    %c0_i32 = arith.constant 0 : i32
    %c0_i32_0 = arith.constant 0 : i32
    return %arg0, %c0_i32 : i32, i32
  }
  func.func @transform_2(%arg0: i32) -> (i32, i32) {
    %c0_i32 = arith.constant 0 : i32
    %c0_i32_0 = arith.constant 0 : i32
    %c0_i32_1 = arith.constant 0 : i32
    return %c0_i32, %c0_i32_0 : i32, i32
  }
  func.func @transform_3(%arg0: i32) -> (i32, i32) {
    %c0_i32 = arith.constant 0 : i32
    %c0_i32_0 = arith.constant 0 : i32
    %c0_i32_1 = arith.constant 0 : i32
    return %c0_i32, %c0_i32_0 : i32, i32
  }
  func.func @transform_4(%arg0: i32) -> (i32, i32) {
    %c0_i32 = arith.constant 0 : i32
    %c0_i32_0 = arith.constant 0 : i32
    %c0_i32_1 = arith.constant 0 : i32
    return %c0_i32, %c0_i32_0 : i32, i32
  }
  func.func @transform_5(%arg0: i32) -> (i32, i32) {
    %c0_i32 = arith.constant 0 : i32
    %c0_i32_0 = arith.constant 0 : i32
    %c0_i32_1 = arith.constant 0 : i32
    return %c0_i32, %c0_i32_0 : i32, i32
  }
  func.func @transform_6(%arg0: i32) -> (i32, i32) {
    %c0_i32 = arith.constant 0 : i32
    %c0_i32_0 = arith.constant 0 : i32
    %c0_i32_1 = arith.constant 0 : i32
    return %c0_i32, %c0_i32_0 : i32, i32
  }
  func.func @transform_7(%arg0: i32) -> (i32, i32) {
    %c0_i32 = arith.constant 0 : i32
    %c0_i32_0 = arith.constant 0 : i32
    %c0_i32_1 = arith.constant 0 : i32
    return %c0_i32, %c0_i32_0 : i32, i32
  }
  func.func @transform_8(%arg0: i32) -> (i32, i32) {
    %c0_i32 = arith.constant 0 : i32
    %c0_i32_0 = arith.constant 0 : i32
    %c0_i32_1 = arith.constant 0 : i32
    return %c0_i32, %c0_i32_0 : i32, i32
  }
  func.func @transform_9(%arg0: i32) -> (i32, i32) {
    %c0_i32 = arith.constant 0 : i32
    %c0_i32_0 = arith.constant 0 : i32
    %c0_i32_1 = arith.constant 0 : i32
    return %c0_i32, %c0_i32_0 : i32, i32
  }
  func.func @transform_10(%arg0: i32) -> (i32, i32) {
    %c0_i32 = arith.constant 0 : i32
    %c0_i32_0 = arith.constant 0 : i32
    return %arg0, %c0_i32 : i32, i32
  }
  func.func @transform_11(%arg0: i32) -> (i32, i32) {
    %c0_i32 = arith.constant 0 : i32
    %c0_i32_0 = arith.constant 0 : i32
    return %arg0, %c0_i32 : i32, i32
  }
}

</mosaic_0001>

<llo_original>
// kernel: tpu_custom_call.1
$region0: #{tpu_custom_call.1}
  #allocation0 [shape = 'u32[]', space=smem, size = 0x4, offset = 0x4, fixed_abs, tag = 'smem constant byte address 0x4 - core index']
  #allocation1 [shape = 'u32[144,128]{1,0:T(1,128)}', space=vmem, size = 0x12000, scoped, tag = 'internal scratch']
  %s0 = inlined_call_operand.hbm [shape: f32[16,512], index: 0, kind: input, shape index: {}]
  %s1 = inlined_call_operand.hbm [shape: f32[16,512], index: 1, kind: input, shape index: {}]
  %s2 = inlined_call_operand.hbm [shape: bf16[1024,512], index: 2, kind: input, shape index: {}]
  %s3 = inlined_call_operand.hbm [shape: f32[1,512], index: 3, kind: input, shape index: {}]
  %s4 = inlined_call_operand.hbm [shape: bf16[512,1024], index: 4, kind: input, shape index: {}]
  %s5 = inlined_call_operand.vmem [shape: f32[1,1024], index: 5, kind: input, shape index: {}]
  %s6 = inlined_call_operand.hbm [shape: f32[1,512], index: 6, kind: input, shape index: {}]
  %s7 = inlined_call_operand.vmem [shape: f32[1,512], index: 7, kind: input, shape index: {}]
  %s8 = inlined_call_operand.hbm [shape: f32[1,512], index: 8, kind: input, shape index: {}]
  %s9 = inlined_call_operand.vmem [shape: f32[1,512], index: 9, kind: input, shape index: {}]
  %s10 = inlined_call_operand.hbm [shape: f32[16,512], index: 10, kind: output, shape index: {0}]
  %s11 = inlined_call_operand.hbm [shape: f32[16,512], index: 11, kind: output, shape index: {1}]
  %12 = xla_tuple %s10, %s11
  %s13 = sld [smem:[#allocation0]]
  $region86: #{tpu_custom_call.1} parent=0
    _
  %s15 = ssub.s32 1, %s13
  %s16 = scalar_select 0, %s15, %s13
  $region1: #{tpu_custom_call.1} parent=0
    #allocation2 [shape = 'u8[32768]{0}', space=vmem, size = 0x8000, scoped, tag = 'input window, operand 0, single buffered']
    #allocation3 [shape = 's32[1]{0}', space=sflag, size = 0x4, scoped, tag = 'scoped memory for tpu_custom_call.1']
    #allocation4 [shape = 's32[1]{0}', space=sflag, size = 0x4, scoped, tag = 'scoped memory for tpu_custom_call.1']
    #allocation5 [shape = 'u8[32768]{0}', space=vmem, size = 0x8000, scoped, tag = 'input window, operand 1, single buffered']
    #allocation6 [shape = 's32[1]{0}', space=sflag, size = 0x4, scoped, tag = 'scoped memory for tpu_custom_call.1']
    #allocation7 [shape = 'u8[1048576]{0}', space=vmem, size = 0x100000, scoped, tag = 'input window, operand 2, single buffered']
    #allocation8 [shape = 'u8[2048]{0}', space=vmem, size = 0x800, scoped, tag = 'input window, operand 3, single buffered']
    #allocation9 [shape = 's32[1]{0}', space=sflag, size = 0x4, scoped, tag = 'scoped memory for tpu_custom_call.1']
    #allocation10 [shape = 'u8[1048576]{0}', space=vmem, size = 0x100000, scoped, tag = 'input window, operand 4, single buffered']
    #allocation11 [shape = 'u8[2048]{0}', space=vmem, size = 0x800, scoped, tag = 'input window, operand 6, single buffered']
    #allocation12 [shape = 's32[1]{0}', space=sflag, size = 0x4, scoped, tag = 'scoped memory for tpu_custom_call.1']
    #allocation13 [shape = 'u8[2048]{0}', space=vmem, size = 0x800, scoped, tag = 'input window, operand 8, single buffered']
    #allocation14 [shape = 'u8[32768]{0}', space=vmem, size = 0x8000, scoped, tag = 'output window, operand 0, single buffered']
    #allocation15 [shape = 'u8[32768]{0}', space=vmem, size = 0x8000, scoped, tag = 'output window, operand 1, single buffered']
    #allocation16 [shape = 's32[1]{0}', space=sflag, size = 0x4, scoped, tag = 'scoped memory for tpu_custom_call.1']
    %17 = vsyncpa [#allocation3], 0
    %18 = vsyncpa [#allocation6], 0
    %19 = vsyncpa [#allocation9], 0
    %20 = vsyncpa [#allocation12], 0
    %21 = vsyncpa [#allocation4], 0
    %22 = vsyncpa [#allocation16], 0
    // Predicated region
    $region2: #{tpu_custom_call.1} parent=1 // pred_check
      _
    $region3: #{tpu_custom_call.1} parent=1 // pred_check_branch
      %24 = sbr.rel (0) target = $region5
    $region4: #{tpu_custom_call.1} parent=1 // pred_region
      %s26 = ssub.s32 1024, 1024
      %27 = vsyncadd [#allocation3], %s26
      %s28 = sshll.u32 [#allocation2], 4
      %s29 = int_to_ptr.vmem [resolvable:$true] %s28
      %34 = dma.hbm_to_vmem [thread:$0]  %s0, 1024, %s29, [#allocation3], 512, 512, 32
    $region5: #{tpu_custom_call.1} parent=1 // pred_fallthru
      _
    // Predicated region
    $region6: #{tpu_custom_call.1} parent=1 // pred_check
      _
    $region7: #{tpu_custom_call.1} parent=1 // pred_check_branch
      %36 = sbr.rel (0) target = $region9
    $region8: #{tpu_custom_call.1} parent=1 // pred_region
      %s38 = ssub.s32 1024, 1024
      %39 = vsyncadd [#allocation6], %s38
      %s40 = sshll.u32 [#allocation5], 4
      %s41 = int_to_ptr.vmem [resolvable:$true] %s40
      %46 = dma.hbm_to_vmem [thread:$0]  %s1, 1024, %s41, [#allocation6], 512, 512, 32
    $region9: #{tpu_custom_call.1} parent=1 // pred_fallthru
      _
    // Predicated region
    $region10: #{tpu_custom_call.1} parent=1 // pred_check
      _
    $region11: #{tpu_custom_call.1} parent=1 // pred_check_branch
      %48 = sbr.rel (0) target = $region13
    $region12: #{tpu_custom_call.1} parent=1 // pred_region
      %s50 = ssub.s32 32768, 32768
      %51 = vsyncadd [#allocation6], %s50
      %s52 = sshll.u32 [#allocation7], 4
      %s53 = int_to_ptr.vmem [resolvable:$true] %s52
      %58 = dma.hbm_to_vmem [thread:$0]  %s2, 32768, %s53, [#allocation6], 256, 256, 16
    $region13: #{tpu_custom_call.1} parent=1 // pred_fallthru
      _
    // Predicated region
    $region14: #{tpu_custom_call.1} parent=1 // pred_check
      _
    $region15: #{tpu_custom_call.1} parent=1 // pred_check_branch
      %60 = sbr.rel (0) target = $region17
    $region16: #{tpu_custom_call.1} parent=1 // pred_region
      %s62 = ssub.s32 64, 64
      %63 = vsyncadd [#allocation9], %s62
      %s65 = sshll.u32 [#allocation8], 4
      %s66 = int_to_ptr.vmem [resolvable:$true] %s65
      %68 = dma.hbm_to_vmem [thread:$0]  %s3, 64, %s66, [#allocation9]
    $region17: #{tpu_custom_call.1} parent=1 // pred_fallthru
      _
    // Predicated region
    $region18: #{tpu_custom_call.1} parent=1 // pred_check
      _
    $region19: #{tpu_custom_call.1} parent=1 // pred_check_branch
      %70 = sbr.rel (0) target = $region21
    $region20: #{tpu_custom_call.1} parent=1 // pred_region
      %s72 = ssub.s32 32768, 32768
      %73 = vsyncadd [#allocation9], %s72
      %s74 = sshll.u32 [#allocation10], 4
      %s75 = int_to_ptr.vmem [resolvable:$true] %s74
      %80 = dma.hbm_to_vmem [thread:$0]  %s4, 32768, %s75, [#allocation9], 512, 512, 32
    $region21: #{tpu_custom_call.1} parent=1 // pred_fallthru
      _
    // Predicated region
    $region22: #{tpu_custom_call.1} parent=1 // pred_check
      _
    $region23: #{tpu_custom_call.1} parent=1 // pred_check_branch
      %82 = sbr.rel (0) target = $region25
    $region24: #{tpu_custom_call.1} parent=1 // pred_region
      _
    $region25: #{tpu_custom_call.1} parent=1 // pred_fallthru
      _
    // Predicated region
    $region26: #{tpu_custom_call.1} parent=1 // pred_check
      _
    $region27: #{tpu_custom_call.1} parent=1 // pred_check_branch
      %84 = sbr.rel (0) target = $region29
    $region28: #{tpu_custom_call.1} parent=1 // pred_region
      %s86 = ssub.s32 64, 64
      %87 = vsyncadd [#allocation12], %s86
      %s89 = sshll.u32 [#allocation11], 4
      %s90 = int_to_ptr.vmem [resolvable:$true] %s89
      %92 = dma.hbm_to_vmem [thread:$0]  %s6, 64, %s90, [#allocation12]
    $region29: #{tpu_custom_call.1} parent=1 // pred_fallthru
      _
    // Predicated region
    $region30: #{tpu_custom_call.1} parent=1 // pred_check
      _
    $region31: #{tpu_custom_call.1} parent=1 // pred_check_branch
      %94 = sbr.rel (0) target = $region33
    $region32: #{tpu_custom_call.1} parent=1 // pred_region
      _
    $region33: #{tpu_custom_call.1} parent=1 // pred_fallthru
      _
    // Predicated region
    $region34: #{tpu_custom_call.1} parent=1 // pred_check
      _
    $region35: #{tpu_custom_call.1} parent=1 // pred_check_branch
      %96 = sbr.rel (0) target = $region37
    $region36: #{tpu_custom_call.1} parent=1 // pred_region
      %s98 = ssub.s32 64, 64
      %99 = vsyncadd [#allocation12], %s98
      %s101 = sshll.u32 [#allocation13], 4
      %s102 = int_to_ptr.vmem [resolvable:$true] %s101
      %104 = dma.hbm_to_vmem [thread:$0]  %s8, 64, %s102, [#allocation12]
    $region37: #{tpu_custom_call.1} parent=1 // pred_fallthru
      _
    // Predicated region
    $region38: #{tpu_custom_call.1} parent=1 // pred_check
      _
    $region39: #{tpu_custom_call.1} parent=1 // pred_check_branch
      %106 = sbr.rel (0) target = $region41
    $region40: #{tpu_custom_call.1} parent=1 // pred_region
      _
    $region41: #{tpu_custom_call.1} parent=1 // pred_fallthru
      _
    // Predicated region
    $region42: #{tpu_custom_call.1} parent=1 // pred_check
      _
    $region43: #{tpu_custom_call.1} parent=1 // pred_check_branch
      %108 = sbr.rel (0) target = $region45
    $region44: #{tpu_custom_call.1} parent=1 // pred_region
      %109 = dma.done [#allocation3], 1024
    $region45: #{tpu_custom_call.1} parent=1 // pred_fallthru
      _
    // Predicated region
    $region46: #{tpu_custom_call.1} parent=1 // pred_check
      _
    $region47: #{tpu_custom_call.1} parent=1 // pred_check_branch
      %111 = sbr.rel (0) target = $region49
    $region48: #{tpu_custom_call.1} parent=1 // pred_region
      %112 = dma.done [#allocation6], 1024
    $region49: #{tpu_custom_call.1} parent=1 // pred_fallthru
      _
    // Predicated region
    $region50: #{tpu_custom_call.1} parent=1 // pred_check
      _
    $region51: #{tpu_custom_call.1} parent=1 // pred_check_branch
      %114 = sbr.rel (0) target = $region53
    $region52: #{tpu_custom_call.1} parent=1 // pred_region
      %115 = dma.done [#allocation6], 32768
    $region53: #{tpu_custom_call.1} parent=1 // pred_fallthru
      _
    // Predicated region
    $region54: #{tpu_custom_call.1} parent=1 // pred_check
      _
    $region55: #{tpu_custom_call.1} parent=1 // pred_check_branch
      %117 = sbr.rel (0) target = $region57
    $region56: #{tpu_custom_call.1} parent=1 // pred_region
      %118 = dma.done [#allocation9], 64
    $region57: #{tpu_custom_call.1} parent=1 // pred_fallthru
      _
    // Predicated region
    $region58: #{tpu_custom_call.1} parent=1 // pred_check
      _
    $region59: #{tpu_custom_call.1} parent=1 // pred_check_branch
      %120 = sbr.rel (0) target = $region61
    $region60: #{tpu_custom_call.1} parent=1 // pred_region
      %121 = dma.done [#allocation9], 32768
    $region61: #{tpu_custom_call.1} parent=1 // pred_fallthru
      _
    // Predicated region
    $region62: #{tpu_custom_call.1} parent=1 // pred_check
      _
    $region63: #{tpu_custom_call.1} parent=1 // pred_check_branch
      %123 = sbr.rel (0) target = $region65
    $region64: #{tpu_custom_call.1} parent=1 // pred_region
      %124 = dma.done [#allocation12], 64
    $region65: #{tpu_custom_call.1} parent=1 // pred_fallthru
      _
    // Predicated region
    $region66: #{tpu_custom_call.1} parent=1 // pred_check
      _
    $region67: #{tpu_custom_call.1} parent=1 // pred_check_branch
      %126 = sbr.rel (0) target = $region69
    $region68: #{tpu_custom_call.1} parent=1 // pred_region
      %127 = dma.done [#allocation12], 64
    $region69: #{tpu_custom_call.1} parent=1 // pred_fallthru
      _
    %v128 = vld [vmem:[#allocation2] sm:$0xff]
    %v129 = vld [vmem:[#allocation2 + $0x8] sm:$0xff]
    %v130 = vld [vmem:[#allocation2 + $0x10] sm:$0xff]
    %v131 = vld [vmem:[#allocation2 + $0x18] sm:$0xff]
    %v132 = vld [vmem:[#allocation2 + $0x20] sm:$0xff]
    %v133 = vld [vmem:[#allocation2 + $0x28] sm:$0xff]
    %v134 = vld [vmem:[#allocation2 + $0x30] sm:$0xff]
    %v135 = vld [vmem:[#allocation2 + $0x38] sm:$0xff]
    %v136 = vld [vmem:[#allocation5] sm:$0xff]
    %v137 = vld [vmem:[#allocation5 + $0x8] sm:$0xff]
    %v138 = vld [vmem:[#allocation5 + $0x10] sm:$0xff]
    %v139 = vld [vmem:[#allocation5 + $0x18] sm:$0xff]
    %v140 = vld [vmem:[#allocation5 + $0x20] sm:$0xff]
    %v141 = vld [vmem:[#allocation5 + $0x28] sm:$0xff]
    %v142 = vld [vmem:[#allocation5 + $0x30] sm:$0xff]
    %v143 = vld [vmem:[#allocation5 + $0x38] sm:$0xff]
    %v144 = vpack.c.bf16 %v132, %v128
    %v145 = vpack.c.bf16 %v133, %v129
    %v146 = vpack.c.bf16 %v134, %v130
    %v147 = vpack.c.bf16 %v135, %v131
    %v148 = vpack.c.bf16 %v140, %v136
    %v149 = vpack.c.bf16 %v141, %v137
    %v150 = vpack.c.bf16 %v142, %v138
    %v151 = vpack.c.bf16 %v143, %v139
    %v152 = vld [vmem:[#allocation7] sm:$0xff]
    %v153 = vld [vmem:[#allocation7 + $0x8] sm:$0xff]
    %v154 = vld [vmem:[#allocation7 + $0x10] sm:$0xff]
    %v155 = vld [vmem:[#allocation7 + $0x18] sm:$0xff]
    %v156 = vld [vmem:[#allocation7 + $0x20] sm:$0xff]
    %v157 = vld [vmem:[#allocation7 + $0x28] sm:$0xff]
    %v158 = vld [vmem:[#allocation7 + $0x30] sm:$0xff]
    %v159 = vld [vmem:[#allocation7 + $0x38] sm:$0xff]
    %v160 = vld [vmem:[#allocation7 + $0x40] sm:$0xff]
    %v161 = vld [vmem:[#allocation7 + $0x48] sm:$0xff]
    %v162 = vld [vmem:[#allocation7 + $0x50] sm:$0xff]
    %v163 = vld [vmem:[#allocation7 + $0x58] sm:$0xff]
    %v164 = vld [vmem:[#allocation7 + $0x60] sm:$0xff]
    %v165 = vld [vmem:[#allocation7 + $0x68] sm:$0xff]
    %v166 = vld [vmem:[#allocation7 + $0x70] sm:$0xff]
    %v167 = vld [vmem:[#allocation7 + $0x78] sm:$0xff]
    %v168 = vld [vmem:[#allocation7 + $0x80] sm:$0xff]
    %v169 = vld [vmem:[#allocation7 + $0x88] sm:$0xff]
    %v170 = vld [vmem:[#allocation7 + $0x90] sm:$0xff]
    %v171 = vld [vmem:[#allocation7 + $0x98] sm:$0xff]
    %v172 = vld [vmem:[#allocation7 + $0xa0] sm:$0xff]
    %v173 = vld [vmem:[#allocation7 + $0xa8] sm:$0xff]
    %v174 = vld [vmem:[#allocation7 + $0xb0] sm:$0xff]
    %v175 = vld [vmem:[#allocation7 + $0xb8] sm:$0xff]
    %v176 = vld [vmem:[#allocation7 + $0xc0] sm:$0xff]
    %v177 = vld [vmem:[#allocation7 + $0xc8] sm:$0xff]
    %v178 = vld [vmem:[#allocation7 + $0xd0] sm:$0xff]
    %v179 = vld [vmem:[#allocation7 + $0xd8] sm:$0xff]
    %v180 = vld [vmem:[#allocation7 + $0xe0] sm:$0xff]
    %v181 = vld [vmem:[#allocation7 + $0xe8] sm:$0xff]
    %v182 = vld [vmem:[#allocation7 + $0xf0] sm:$0xff]
    %v183 = vld [vmem:[#allocation7 + $0xf8] sm:$0xff]
    %v184 = vld [vmem:[#allocation7 + $0x100] sm:$0xff]
    %v185 = vld [vmem:[#allocation7 + $0x108] sm:$0xff]
    %v186 = vld [vmem:[#allocation7 + $0x110] sm:$0xff]
    %v187 = vld [vmem:[#allocation7 + $0x118] sm:$0xff]
    %v188 = vld [vmem:[#allocation7 + $0x120] sm:$0xff]
    %v189 = vld [vmem:[#allocation7 + $0x128] sm:$0xff]
    %v190 = vld [vmem:[#allocation7 + $0x130] sm:$0xff]
    %v191 = vld [vmem:[#allocation7 + $0x138] sm:$0xff]
    %v192 = vld [vmem:[#allocation7 + $0x140] sm:$0xff]
    %v193 = vld [vmem:[#allocation7 + $0x148] sm:$0xff]
    %v194 = vld [vmem:[#allocation7 + $0x150] sm:$0xff]
    %v195 = vld [vmem:[#allocation7 + $0x158] sm:$0xff]
    %v196 = vld [vmem:[#allocation7 + $0x160] sm:$0xff]
    %v197 = vld [vmem:[#allocation7 + $0x168] sm:$0xff]
    %v198 = vld [vmem:[#allocation7 + $0x170] sm:$0xff]
    %v199 = vld [vmem:[#allocation7 + $0x178] sm:$0xff]
    %v200 = vld [vmem:[#allocation7 + $0x180] sm:$0xff]
    %v201 = vld [vmem:[#allocation7 + $0x188] sm:$0xff]
    %v202 = vld [vmem:[#allocation7 + $0x190] sm:$0xff]
    %v203 = vld [vmem:[#allocation7 + $0x198] sm:$0xff]
    %v204 = vld [vmem:[#allocation7 + $0x1a0] sm:$0xff]
    %v205 = vld [vmem:[#allocation7 + $0x1a8] sm:$0xff]
    %v206 = vld [vmem:[#allocation7 + $0x1b0] sm:$0xff]
    %v207 = vld [vmem:[#allocation7 + $0x1b8] sm:$0xff]
    %v208 = vld [vmem:[#allocation7 + $0x1c0] sm:$0xff]
    %v209 = vld [vmem:[#allocation7 + $0x1c8] sm:$0xff]
    %v210 = vld [vmem:[#allocation7 + $0x1d0] sm:$0xff]
    %v211 = vld [vmem:[#allocation7 + $0x1d8] sm:$0xff]
    %v212 = vld [vmem:[#allocation7 + $0x1e0] sm:$0xff]
    %v213 = vld [vmem:[#allocation7 + $0x1e8] sm:$0xff]
    %v214 = vld [vmem:[#allocation7 + $0x1f0] sm:$0xff]
    %v215 = vld [vmem:[#allocation7 + $0x1f8] sm:$0xff]
    %v216 = vld [vmem:[#allocation7 + $0x200] sm:$0xff]
    %v217 = vld [vmem:[#allocation7 + $0x208] sm:$0xff]
    %v218 = vld [vmem:[#allocation7 + $0x210] sm:$0xff]
    %v219 = vld [vmem:[#allocation7 + $0x218] sm:$0xff]
    %v220 = vld [vmem:[#allocation7 + $0x220] sm:$0xff]
    %v221 = vld [vmem:[#allocation7 + $0x228] sm:$0xff]
    %v222 = vld [vmem:[#allocation7 + $0x230] sm:$0xff]
    %v223 = vld [vmem:[#allocation7 + $0x238] sm:$0xff]
    %v224 = vld [vmem:[#allocation7 + $0x240] sm:$0xff]
    %v225 = vld [vmem:[#allocation7 + $0x248] sm:$0xff]
    %v226 = vld [vmem:[#allocation7 + $0x250] sm:$0xff]
    %v227 = vld [vmem:[#allocation7 + $0x258] sm:$0xff]
    %v228 = vld [vmem:[#allocation7 + $0x260] sm:$0xff]
    %v229 = vld [vmem:[#allocation7 + $0x268] sm:$0xff]
    %v230 = vld [vmem:[#allocation7 + $0x270] sm:$0xff]
    %v231 = vld [vmem:[#allocation7 + $0x278] sm:$0xff]
    %v232 = vld [vmem:[#allocation7 + $0x280] sm:$0xff]
    %v233 = vld [vmem:[#allocation7 + $0x288] sm:$0xff]
    %v234 = vld [vmem:[#allocation7 + $0x290] sm:$0xff]
    %v235 = vld [vmem:[#allocation7 + $0x298] sm:$0xff]
    %v236 = vld [vmem:[#allocation7 + $0x2a0] sm:$0xff]
    %v237 = vld [vmem:[#allocation7 + $0x2a8] sm:$0xff]
    %v238 = vld [vmem:[#allocation7 + $0x2b0] sm:$0xff]
    %v239 = vld [vmem:[#allocation7 + $0x2b8] sm:$0xff]
    %v240 = vld [vmem:[#allocation7 + $0x2c0] sm:$0xff]
    %v241 = vld [vmem:[#allocation7 + $0x2c8] sm:$0xff]
    %v242 = vld [vmem:[#allocation7 + $0x2d0] sm:$0xff]
    %v243 = vld [vmem:[#allocation7 + $0x2d8] sm:$0xff]
    %v244 = vld [vmem:[#allocation7 + $0x2e0] sm:$0xff]
    %v245 = vld [vmem:[#allocation7 + $0x2e8] sm:$0xff]
    %v246 = vld [vmem:[#allocation7 + $0x2f0] sm:$0xff]
    %v247 = vld [vmem:[#allocation7 + $0x2f8] sm:$0xff]
    %v248 = vld [vmem:[#allocation7 + $0x300] sm:$0xff]
    %v249 = vld [vmem:[#allocation7 + $0x308] sm:$0xff]
    %v250 = vld [vmem:[#allocation7 + $0x310] sm:$0xff]
    %v251 = vld [vmem:[#allocation7 + $0x318] sm:$0xff]
    %v252 = vld [vmem:[#allocation7 + $0x320] sm:$0xff]
    %v253 = vld [vmem:[#allocation7 + $0x328] sm:$0xff]
    %v254 = vld [vmem:[#allocation7 + $0x330] sm:$0xff]
    %v255 = vld [vmem:[#allocation7 + $0x338] sm:$0xff]
    %v256 = vld [vmem:[#allocation7 + $0x340] sm:$0xff]
    %v257 = vld [vmem:[#allocation7 + $0x348] sm:$0xff]
    %v258 = vld [vmem:[#allocation7 + $0x350] sm:$0xff]
    %v259 = vld [vmem:[#allocation7 + $0x358] sm:$0xff]
    %v260 = vld [vmem:[#allocation7 + $0x360] sm:$0xff]
    %v261 = vld [vmem:[#allocation7 + $0x368] sm:$0xff]
    %v262 = vld [vmem:[#allocation7 + $0x370] sm:$0xff]
    %v263 = vld [vmem:[#allocation7 + $0x378] sm:$0xff]
    %v264 = vld [vmem:[#allocation7 + $0x380] sm:$0xff]
    %v265 = vld [vmem:[#allocation7 + $0x388] sm:$0xff]
    %v266 = vld [vmem:[#allocation7 + $0x390] sm:$0xff]
    %v267 = vld [vmem:[#allocation7 + $0x398] sm:$0xff]
    %v268 = vld [vmem:[#allocation7 + $0x3a0] sm:$0xff]
    %v269 = vld [vmem:[#allocation7 + $0x3a8] sm:$0xff]
    %v270 = vld [vmem:[#allocation7 + $0x3b0] sm:$0xff]
    %v271 = vld [vmem:[#allocation7 + $0x3b8] sm:$0xff]
    %v272 = vld [vmem:[#allocation7 + $0x3c0] sm:$0xff]
    %v273 = vld [vmem:[#allocation7 + $0x3c8] sm:$0xff]
    %v274 = vld [vmem:[#allocation7 + $0x3d0] sm:$0xff]
    %v275 = vld [vmem:[#allocation7 + $0x3d8] sm:$0xff]
    %v276 = vld [vmem:[#allocation7 + $0x3e0] sm:$0xff]
    %v277 = vld [vmem:[#allocation7 + $0x3e8] sm:$0xff]
    %v278 = vld [vmem:[#allocation7 + $0x3f0] sm:$0xff]
    %v279 = vld [vmem:[#allocation7 + $0x3f8] sm:$0xff]
    %v280 = vld [vmem:[#allocation7 + $0x400] sm:$0xff]
    %v281 = vld [vmem:[#allocation7 + $0x408] sm:$0xff]
    %v282 = vld [vmem:[#allocation7 + $0x410] sm:$0xff]
    %v283 = vld [vmem:[#allocation7 + $0x418] sm:$0xff]
    %v284 = vld [vmem:[#allocation7 + $0x420] sm:$0xff]
    %v285 = vld [vmem:[#allocation7 + $0x428] sm:$0xff]
    %v286 = vld [vmem:[#allocation7 + $0x430] sm:$0xff]
    %v287 = vld [vmem:[#allocation7 + $0x438] sm:$0xff]
    %v288 = vld [vmem:[#allocation7 + $0x440] sm:$0xff]
    %v289 = vld [vmem:[#allocation7 + $0x448] sm:$0xff]
    %v290 = vld [vmem:[#allocation7 + $0x450] sm:$0xff]
    %v291 = vld [vmem:[#allocation7 + $0x458] sm:$0xff]
    %v292 = vld [vmem:[#allocation7 + $0x460] sm:$0xff]
    %v293 = vld [vmem:[#allocation7 + $0x468] sm:$0xff]
    %v294 = vld [vmem:[#allocation7 + $0x470] sm:$0xff]
    %v295 = vld [vmem:[#allocation7 + $0x478] sm:$0xff]
    %v296 = vld [vmem:[#allocation7 + $0x480] sm:$0xff]
    %v297 = vld [vmem:[#allocation7 + $0x488] sm:$0xff]
    %v298 = vld [vmem:[#allocation7 + $0x490] sm:$0xff]
    %v299 = vld [vmem:[#allocation7 + $0x498] sm:$0xff]
    %v300 = vld [vmem:[#allocation7 + $0x4a0] sm:$0xff]
    %v301 = vld [vmem:[#allocation7 + $0x4a8] sm:$0xff]
    %v302 = vld [vmem:[#allocation7 + $0x4b0] sm:$0xff]
    %v303 = vld [vmem:[#allocation7 + $0x4b8] sm:$0xff]
    %v304 = vld [vmem:[#allocation7 + $0x4c0] sm:$0xff]
    %v305 = vld [vmem:[#allocation7 + $0x4c8] sm:$0xff]
    %v306 = vld [vmem:[#allocation7 + $0x4d0] sm:$0xff]
    %v307 = vld [vmem:[#allocation7 + $0x4d8] sm:$0xff]
    %v308 = vld [vmem:[#allocation7 + $0x4e0] sm:$0xff]
    %v309 = vld [vmem:[#allocation7 + $0x4e8] sm:$0xff]
    %v310 = vld [vmem:[#allocation7 + $0x4f0] sm:$0xff]
    %v311 = vld [vmem:[#allocation7 + $0x4f8] sm:$0xff]
    %v312 = vld [vmem:[#allocation7 + $0x500] sm:$0xff]
    %v313 = vld [vmem:[#allocation7 + $0x508] sm:$0xff]
    %v314 = vld [vmem:[#allocation7 + $0x510] sm:$0xff]
    %v315 = vld [vmem:[#allocation7 + $0x518] sm:$0xff]
    %v316 = vld [vmem:[#allocation7 + $0x520] sm:$0xff]
    %v317 = vld [vmem:[#allocation7 + $0x528] sm:$0xff]
    %v318 = vld [vmem:[#allocation7 + $0x530] sm:$0xff]
    %v319 = vld [vmem:[#allocation7 + $0x538] sm:$0xff]
    %v320 = vld [vmem:[#allocation7 + $0x540] sm:$0xff]
    %v321 = vld [vmem:[#allocation7 + $0x548] sm:$0xff]
    %v322 = vld [vmem:[#allocation7 + $0x550] sm:$0xff]
    %v323 = vld [vmem:[#allocation7 + $0x558] sm:$0xff]
    %v324 = vld [vmem:[#allocation7 + $0x560] sm:$0xff]
    %v325 = vld [vmem:[#allocation7 + $0x568] sm:$0xff]
    %v326 = vld [vmem:[#allocation7 + $0x570] sm:$0xff]
    %v327 = vld [vmem:[#allocation7 + $0x578] sm:$0xff]
    %v328 = vld [vmem:[#allocation7 + $0x580] sm:$0xff]
    %v329 = vld [vmem:[#allocation7 + $0x588] sm:$0xff]
    %v330 = vld [vmem:[#allocation7 + $0x590] sm:$0xff]
    %v331 = vld [vmem:[#allocation7 + $0x598] sm:$0xff]
    %v332 = vld [vmem:[#allocation7 + $0x5a0] sm:$0xff]
    %v333 = vld [vmem:[#allocation7 + $0x5a8] sm:$0xff]
    %v334 = vld [vmem:[#allocation7 + $0x5b0] sm:$0xff]
    %v335 = vld [vmem:[#allocation7 + $0x5b8] sm:$0xff]
    %v336 = vld [vmem:[#allocation7 + $0x5c0] sm:$0xff]
    %v337 = vld [vmem:[#allocation7 + $0x5c8] sm:$0xff]
    %v338 = vld [vmem:[#allocation7 + $0x5d0] sm:$0xff]
    %v339 = vld [vmem:[#allocation7 + $0x5d8] sm:$0xff]
    %v340 = vld [vmem:[#allocation7 + $0x5e0] sm:$0xff]
    %v341 = vld [vmem:[#allocation7 + $0x5e8] sm:$0xff]
    %v342 = vld [vmem:[#allocation7 + $0x5f0] sm:$0xff]
    %v343 = vld [vmem:[#allocation7 + $0x5f8] sm:$0xff]
    %v344 = vld [vmem:[#allocation7 + $0x600] sm:$0xff]
    %v345 = vld [vmem:[#allocation7 + $0x608] sm:$0xff]
    %v346 = vld [vmem:[#allocation7 + $0x610] sm:$0xff]
    %v347 = vld [vmem:[#allocation7 + $0x618] sm:$0xff]
    %v348 = vld [vmem:[#allocation7 + $0x620] sm:$0xff]
    %v349 = vld [vmem:[#allocation7 + $0x628] sm:$0xff]
    %v350 = vld [vmem:[#allocation7 + $0x630] sm:$0xff]
    %v351 = vld [vmem:[#allocation7 + $0x638] sm:$0xff]
    %v352 = vld [vmem:[#allocation7 + $0x640] sm:$0xff]
    %v353 = vld [vmem:[#allocation7 + $0x648] sm:$0xff]
    %v354 = vld [vmem:[#allocation7 + $0x650] sm:$0xff]
    %v355 = vld [vmem:[#allocation7 + $0x658] sm:$0xff]
    %v356 = vld [vmem:[#allocation7 + $0x660] sm:$0xff]
    %v357 = vld [vmem:[#allocation7 + $0x668] sm:$0xff]
    %v358 = vld [vmem:[#allocation7 + $0x670] sm:$0xff]
    %v359 = vld [vmem:[#allocation7 + $0x678] sm:$0xff]
    %v360 = vld [vmem:[#allocation7 + $0x680] sm:$0xff]
    %v361 = vld [vmem:[#allocation7 + $0x688] sm:$0xff]
    %v362 = vld [vmem:[#allocation7 + $0x690] sm:$0xff]
    %v363 = vld [vmem:[#allocation7 + $0x698] sm:$0xff]
    %v364 = vld [vmem:[#allocation7 + $0x6a0] sm:$0xff]
    %v365 = vld [vmem:[#allocation7 + $0x6a8] sm:$0xff]
    %v366 = vld [vmem:[#allocation7 + $0x6b0] sm:$0xff]
    %v367 = vld [vmem:[#allocation7 + $0x6b8] sm:$0xff]
    %v368 = vld [vmem:[#allocation7 + $0x6c0] sm:$0xff]
    %v369 = vld [vmem:[#allocation7 + $0x6c8] sm:$0xff]
    %v370 = vld [vmem:[#allocation7 + $0x6d0] sm:$0xff]
    %v371 = vld [vmem:[#allocation7 + $0x6d8] sm:$0xff]
    %v372 = vld [vmem:[#allocation7 + $0x6e0] sm:$0xff]
    %v373 = vld [vmem:[#allocation7 + $0x6e8] sm:$0xff]
    %v374 = vld [vmem:[#allocation7 + $0x6f0] sm:$0xff]
    %v375 = vld [vmem:[#allocation7 + $0x6f8] sm:$0xff]
    %v376 = vld [vmem:[#allocation7 + $0x700] sm:$0xff]
    %v377 = vld [vmem:[#allocation7 + $0x708] sm:$0xff]
    %v378 = vld [vmem:[#allocation7 + $0x710] sm:$0xff]
    %v379 = vld [vmem:[#allocation7 + $0x718] sm:$0xff]
    %v380 = vld [vmem:[#allocation7 + $0x720] sm:$0xff]
    %v381 = vld [vmem:[#allocation7 + $0x728] sm:$0xff]
    %v382 = vld [vmem:[#allocation7 + $0x730] sm:$0xff]
    %v383 = vld [vmem:[#allocation7 + $0x738] sm:$0xff]
    %v384 = vld [vmem:[#allocation7 + $0x740] sm:$0xff]
    %v385 = vld [vmem:[#allocation7 + $0x748] sm:$0xff]
    %v386 = vld [vmem:[#allocation7 + $0x750] sm:$0xff]
    %v387 = vld [vmem:[#allocation7 + $0x758] sm:$0xff]
    %v388 = vld [vmem:[#allocation7 + $0x760] sm:$0xff]
    %v389 = vld [vmem:[#allocation7 + $0x768] sm:$0xff]
    %v390 = vld [vmem:[#allocation7 + $0x770] sm:$0xff]
    %v391 = vld [vmem:[#allocation7 + $0x778] sm:$0xff]
    %v392 = vld [vmem:[#allocation7 + $0x780] sm:$0xff]
    %v393 = vld [vmem:[#allocation7 + $0x788] sm:$0xff]
    %v394 = vld [vmem:[#allocation7 + $0x790] sm:$0xff]
    %v395 = vld [vmem:[#allocation7 + $0x798] sm:$0xff]
    %v396 = vld [vmem:[#allocation7 + $0x7a0] sm:$0xff]
    %v397 = vld [vmem:[#allocation7 + $0x7a8] sm:$0xff]
    %v398 = vld [vmem:[#allocation7 + $0x7b0] sm:$0xff]
    %v399 = vld [vmem:[#allocation7 + $0x7b8] sm:$0xff]
    %v400 = vld [vmem:[#allocation7 + $0x7c0] sm:$0xff]
    %v401 = vld [vmem:[#allocation7 + $0x7c8] sm:$0xff]
    %v402 = vld [vmem:[#allocation7 + $0x7d0] sm:$0xff]
    %v403 = vld [vmem:[#allocation7 + $0x7d8] sm:$0xff]
    %v404 = vld [vmem:[#allocation7 + $0x7e0] sm:$0xff]
    %v405 = vld [vmem:[#allocation7 + $0x7e8] sm:$0xff]
    %v406 = vld [vmem:[#allocation7 + $0x7f0] sm:$0xff]
    %v407 = vld [vmem:[#allocation7 + $0x7f8] sm:$0xff]
    %v408 = vld [vmem:[#allocation8] sm:$0xf]
    %v410 = vlaneseq
    %v411 = vshrl.u32 %v410, 7
    %v412 = vsub.s32 0, %v411
    %v413 = vrot.slane %v408, %v412
    %v414 = vlaneseq
    %v415 = vshrl.u32 %v414, 7
    %v416 = vsub.s32 1, %v415
    %v417 = vrot.slane %v408, %v416
    %v418 = vlaneseq
    %v419 = vshrl.u32 %v418, 7
    %v420 = vsub.s32 2, %v419
    %v421 = vrot.slane %v408, %v420
    %v422 = vlaneseq
    %v423 = vshrl.u32 %v422, 7
    %v424 = vsub.s32 3, %v423
    %v425 = vrot.slane %v408, %v424
    %v686 = vunpack.c.l.b16 %v152
    %v687 = vunpack.c.h.b16 %v152
    %v688 = vunpack.c.l.b16 %v153
    %v689 = vunpack.c.h.b16 %v153
    %v690 = vunpack.c.l.b16 %v154
    %v691 = vunpack.c.h.b16 %v154
    %v692 = vunpack.c.l.b16 %v155
    %v693 = vunpack.c.h.b16 %v155
    %v694 = vunpack.c.l.b16 %v156
    %v695 = vunpack.c.h.b16 %v156
    %v696 = vunpack.c.l.b16 %v157
    %v697 = vunpack.c.h.b16 %v157
    %v698 = vunpack.c.l.b16 %v158
    %v699 = vunpack.c.h.b16 %v158
    %v700 = vunpack.c.l.b16 %v159
    %v701 = vunpack.c.h.b16 %v159
    %v702 = vunpack.c.l.b16 %v160
    %v703 = vunpack.c.h.b16 %v160
    %v704 = vunpack.c.l.b16 %v161
    %v705 = vunpack.c.h.b16 %v161
    %v706 = vunpack.c.l.b16 %v162
    %v707 = vunpack.c.h.b16 %v162
    %v708 = vunpack.c.l.b16 %v163
    %v709 = vunpack.c.h.b16 %v163
    %v710 = vunpack.c.l.b16 %v164
    %v711 = vunpack.c.h.b16 %v164
    %v712 = vunpack.c.l.b16 %v165
    %v713 = vunpack.c.h.b16 %v165
    %v714 = vunpack.c.l.b16 %v166
    %v715 = vunpack.c.h.b16 %v166
    %v716 = vunpack.c.l.b16 %v167
    %v717 = vunpack.c.h.b16 %v167
    %v718 = vunpack.c.l.b16 %v168
    %v719 = vunpack.c.h.b16 %v168
    %v720 = vunpack.c.l.b16 %v169
    %v721 = vunpack.c.h.b16 %v169
    %v722 = vunpack.c.l.b16 %v170
    %v723 = vunpack.c.h.b16 %v170
    %v724 = vunpack.c.l.b16 %v171
    %v725 = vunpack.c.h.b16 %v171
    %v726 = vunpack.c.l.b16 %v172
    %v727 = vunpack.c.h.b16 %v172
    %v728 = vunpack.c.l.b16 %v173
    %v729 = vunpack.c.h.b16 %v173
    %v730 = vunpack.c.l.b16 %v174
    %v731 = vunpack.c.h.b16 %v174
    %v732 = vunpack.c.l.b16 %v175
    %v733 = vunpack.c.h.b16 %v175
    %v734 = vunpack.c.l.b16 %v176
    %v735 = vunpack.c.h.b16 %v176
    %v736 = vunpack.c.l.b16 %v177
    %v737 = vunpack.c.h.b16 %v177
    %v738 = vunpack.c.l.b16 %v178
    %v739 = vunpack.c.h.b16 %v178
    %v740 = vunpack.c.l.b16 %v179
    %v741 = vunpack.c.h.b16 %v179
    %v742 = vunpack.c.l.b16 %v180
    %v743 = vunpack.c.h.b16 %v180
    %v744 = vunpack.c.l.b16 %v181
    %v745 = vunpack.c.h.b16 %v181
    %v746 = vunpack.c.l.b16 %v182
    %v747 = vunpack.c.h.b16 %v182
    %v748 = vunpack.c.l.b16 %v183
    %v749 = vunpack.c.h.b16 %v183
    %v750 = vunpack.c.l.b16 %v184
    %v751 = vunpack.c.h.b16 %v184
    %v752 = vunpack.c.l.b16 %v185
    %v753 = vunpack.c.h.b16 %v185
    %v754 = vunpack.c.l.b16 %v186
    %v755 = vunpack.c.h.b16 %v186
    %v756 = vunpack.c.l.b16 %v187
    %v757 = vunpack.c.h.b16 %v187
    %v758 = vunpack.c.l.b16 %v188
    %v759 = vunpack.c.h.b16 %v188
    %v760 = vunpack.c.l.b16 %v189
    %v761 = vunpack.c.h.b16 %v189
    %v762 = vunpack.c.l.b16 %v190
    %v763 = vunpack.c.h.b16 %v190
    %v764 = vunpack.c.l.b16 %v191
    %v765 = vunpack.c.h.b16 %v191
    %v766 = vunpack.c.l.b16 %v192
    %v767 = vunpack.c.h.b16 %v192
    %v768 = vunpack.c.l.b16 %v193
    %v769 = vunpack.c.h.b16 %v193
    %v770 = vunpack.c.l.b16 %v194
    %v771 = vunpack.c.h.b16 %v194
    %v772 = vunpack.c.l.b16 %v195
    %v773 = vunpack.c.h.b16 %v195
    %v774 = vunpack.c.l.b16 %v196
    %v775 = vunpack.c.h.b16 %v196
    %v776 = vunpack.c.l.b16 %v197
    %v777 = vunpack.c.h.b16 %v197
    %v778 = vunpack.c.l.b16 %v198
    %v779 = vunpack.c.h.b16 %v198
    %v780 = vunpack.c.l.b16 %v199
    %v781 = vunpack.c.h.b16 %v199
    %v782 = vunpack.c.l.b16 %v200
    %v783 = vunpack.c.h.b16 %v200
    %v784 = vunpack.c.l.b16 %v201
    %v785 = vunpack.c.h.b16 %v201
    %v786 = vunpack.c.l.b16 %v202
    %v787 = vunpack.c.h.b16 %v202
    %v788 = vunpack.c.l.b16 %v203
    %v789 = vunpack.c.h.b16 %v203
    %v790 = vunpack.c.l.b16 %v204
    %v791 = vunpack.c.h.b16 %v204
    %v792 = vunpack.c.l.b16 %v205
    %v793 = vunpack.c.h.b16 %v205
    %v794 = vunpack.c.l.b16 %v206
    %v795 = vunpack.c.h.b16 %v206
    %v796 = vunpack.c.l.b16 %v207
    %v797 = vunpack.c.h.b16 %v207
    %v798 = vunpack.c.l.b16 %v208
    %v799 = vunpack.c.h.b16 %v208
    %v800 = vunpack.c.l.b16 %v209
    %v801 = vunpack.c.h.b16 %v209
    %v802 = vunpack.c.l.b16 %v210
    %v803 = vunpack.c.h.b16 %v210
    %v804 = vunpack.c.l.b16 %v211
    %v805 = vunpack.c.h.b16 %v211
    %v806 = vunpack.c.l.b16 %v212
    %v807 = vunpack.c.h.b16 %v212
    %v808 = vunpack.c.l.b16 %v213
    %v809 = vunpack.c.h.b16 %v213
    %v810 = vunpack.c.l.b16 %v214
    %v811 = vunpack.c.h.b16 %v214
    %v812 = vunpack.c.l.b16 %v215
    %v813 = vunpack.c.h.b16 %v215
    %v814 = vunpack.c.l.b16 %v216
    %v815 = vunpack.c.h.b16 %v216
    %v816 = vunpack.c.l.b16 %v217
    %v817 = vunpack.c.h.b16 %v217
    %v818 = vunpack.c.l.b16 %v218
    %v819 = vunpack.c.h.b16 %v218
    %v820 = vunpack.c.l.b16 %v219
    %v821 = vunpack.c.h.b16 %v219
    %v822 = vunpack.c.l.b16 %v220
    %v823 = vunpack.c.h.b16 %v220
    %v824 = vunpack.c.l.b16 %v221
    %v825 = vunpack.c.h.b16 %v221
    %v826 = vunpack.c.l.b16 %v222
    %v827 = vunpack.c.h.b16 %v222
    %v828 = vunpack.c.l.b16 %v223
    %v829 = vunpack.c.h.b16 %v223
    %v830 = vunpack.c.l.b16 %v224
    %v831 = vunpack.c.h.b16 %v224
    %v832 = vunpack.c.l.b16 %v225
    %v833 = vunpack.c.h.b16 %v225
    %v834 = vunpack.c.l.b16 %v226
    %v835 = vunpack.c.h.b16 %v226
    %v836 = vunpack.c.l.b16 %v227
    %v837 = vunpack.c.h.b16 %v227
    %v838 = vunpack.c.l.b16 %v228
    %v839 = vunpack.c.h.b16 %v228
    %v840 = vunpack.c.l.b16 %v229
    %v841 = vunpack.c.h.b16 %v229
    %v842 = vunpack.c.l.b16 %v230
    %v843 = vunpack.c.h.b16 %v230
    %v844 = vunpack.c.l.b16 %v231
    %v845 = vunpack.c.h.b16 %v231
    %v846 = vunpack.c.l.b16 %v232
    %v847 = vunpack.c.h.b16 %v232
    %v848 = vunpack.c.l.b16 %v233
    %v849 = vunpack.c.h.b16 %v233
    %v850 = vunpack.c.l.b16 %v234
    %v851 = vunpack.c.h.b16 %v234
    %v852 = vunpack.c.l.b16 %v235
    %v853 = vunpack.c.h.b16 %v235
    %v854 = vunpack.c.l.b16 %v236
    %v855 = vunpack.c.h.b16 %v236
    %v856 = vunpack.c.l.b16 %v237
    %v857 = vunpack.c.h.b16 %v237
    %v858 = vunpack.c.l.b16 %v238
    %v859 = vunpack.c.h.b16 %v238
    %v860 = vunpack.c.l.b16 %v239
    %v861 = vunpack.c.h.b16 %v239
    %v862 = vunpack.c.l.b16 %v240
    %v863 = vunpack.c.h.b16 %v240
    %v864 = vunpack.c.l.b16 %v241
    %v865 = vunpack.c.h.b16 %v241
    %v866 = vunpack.c.l.b16 %v242
    %v867 = vunpack.c.h.b16 %v242
    %v868 = vunpack.c.l.b16 %v243
    %v869 = vunpack.c.h.b16 %v243
    %v870 = vunpack.c.l.b16 %v244
    %v871 = vunpack.c.h.b16 %v244
    %v872 = vunpack.c.l.b16 %v245
    %v873 = vunpack.c.h.b16 %v245
    %v874 = vunpack.c.l.b16 %v246
    %v875 = vunpack.c.h.b16 %v246
    %v876 = vunpack.c.l.b16 %v247
    %v877 = vunpack.c.h.b16 %v247
    %v878 = vunpack.c.l.b16 %v248
    %v879 = vunpack.c.h.b16 %v248
    %v880 = vunpack.c.l.b16 %v249
    %v881 = vunpack.c.h.b16 %v249
    %v882 = vunpack.c.l.b16 %v250
    %v883 = vunpack.c.h.b16 %v250
    %v884 = vunpack.c.l.b16 %v251
    %v885 = vunpack.c.h.b16 %v251
    %v886 = vunpack.c.l.b16 %v252
    %v887 = vunpack.c.h.b16 %v252
    %v888 = vunpack.c.l.b16 %v253
    %v889 = vunpack.c.h.b16 %v253
    %v890 = vunpack.c.l.b16 %v254
    %v891 = vunpack.c.h.b16 %v254
    %v892 = vunpack.c.l.b16 %v255
    %v893 = vunpack.c.h.b16 %v255
    %v894 = vunpack.c.l.b16 %v256
    %v895 = vunpack.c.h.b16 %v256
    %v896 = vunpack.c.l.b16 %v257
    %v897 = vunpack.c.h.b16 %v257
    %v898 = vunpack.c.l.b16 %v258
    %v899 = vunpack.c.h.b16 %v258
    %v900 = vunpack.c.l.b16 %v259
    %v901 = vunpack.c.h.b16 %v259
    %v902 = vunpack.c.l.b16 %v260
    %v903 = vunpack.c.h.b16 %v260
    %v904 = vunpack.c.l.b16 %v261
    %v905 = vunpack.c.h.b16 %v261
    %v906 = vunpack.c.l.b16 %v262
    %v907 = vunpack.c.h.b16 %v262
    %v908 = vunpack.c.l.b16 %v263
    %v909 = vunpack.c.h.b16 %v263
    %v910 = vunpack.c.l.b16 %v264
    %v911 = vunpack.c.h.b16 %v264
    %v912 = vunpack.c.l.b16 %v265
    %v913 = vunpack.c.h.b16 %v265
    %v914 = vunpack.c.l.b16 %v266
    %v915 = vunpack.c.h.b16 %v266
    %v916 = vunpack.c.l.b16 %v267
    %v917 = vunpack.c.h.b16 %v267
    %v918 = vunpack.c.l.b16 %v268
    %v919 = vunpack.c.h.b16 %v268
    %v920 = vunpack.c.l.b16 %v269
    %v921 = vunpack.c.h.b16 %v269
    %v922 = vunpack.c.l.b16 %v270
    %v923 = vunpack.c.h.b16 %v270
    %v924 = vunpack.c.l.b16 %v271
    %v925 = vunpack.c.h.b16 %v271
    %v926 = vunpack.c.l.b16 %v272
    %v927 = vunpack.c.h.b16 %v272
    %v928 = vunpack.c.l.b16 %v273
    %v929 = vunpack.c.h.b16 %v273
    %v930 = vunpack.c.l.b16 %v274
    %v931 = vunpack.c.h.b16 %v274
    %v932 = vunpack.c.l.b16 %v275
    %v933 = vunpack.c.h.b16 %v275
    %v934 = vunpack.c.l.b16 %v276
    %v935 = vunpack.c.h.b16 %v276
    %v936 = vunpack.c.l.b16 %v277
    %v937 = vunpack.c.h.b16 %v277
    %v938 = vunpack.c.l.b16 %v278
    %v939 = vunpack.c.h.b16 %v278
    %v940 = vunpack.c.l.b16 %v279
    %v941 = vunpack.c.h.b16 %v279
    %v942 = vunpack.c.l.b16 %v280
    %v943 = vunpack.c.h.b16 %v280
    %v944 = vunpack.c.l.b16 %v281
    %v945 = vunpack.c.h.b16 %v281
    %v946 = vunpack.c.l.b16 %v282
    %v947 = vunpack.c.h.b16 %v282
    %v948 = vunpack.c.l.b16 %v283
    %v949 = vunpack.c.h.b16 %v283
    %v950 = vunpack.c.l.b16 %v284
    %v951 = vunpack.c.h.b16 %v284
    %v952 = vunpack.c.l.b16 %v285
    %v953 = vunpack.c.h.b16 %v285
    %v954 = vunpack.c.l.b16 %v286
    %v955 = vunpack.c.h.b16 %v286
    %v956 = vunpack.c.l.b16 %v287
    %v957 = vunpack.c.h.b16 %v287
    %v958 = vunpack.c.l.b16 %v288
    %v959 = vunpack.c.h.b16 %v288
    %v960 = vunpack.c.l.b16 %v289
    %v961 = vunpack.c.h.b16 %v289
    %v962 = vunpack.c.l.b16 %v290
    %v963 = vunpack.c.h.b16 %v290
    %v964 = vunpack.c.l.b16 %v291
    %v965 = vunpack.c.h.b16 %v291
    %v966 = vunpack.c.l.b16 %v292
    %v967 = vunpack.c.h.b16 %v292
    %v968 = vunpack.c.l.b16 %v293
    %v969 = vunpack.c.h.b16 %v293
    %v970 = vunpack.c.l.b16 %v294
    %v971 = vunpack.c.h.b16 %v294
    %v972 = vunpack.c.l.b16 %v295
    %v973 = vunpack.c.h.b16 %v295
    %v974 = vunpack.c.l.b16 %v296
    %v975 = vunpack.c.h.b16 %v296
    %v976 = vunpack.c.l.b16 %v297
    %v977 = vunpack.c.h.b16 %v297
    %v978 = vunpack.c.l.b16 %v298
    %v979 = vunpack.c.h.b16 %v298
    %v980 = vunpack.c.l.b16 %v299
    %v981 = vunpack.c.h.b16 %v299
    %v982 = vunpack.c.l.b16 %v300
    %v983 = vunpack.c.h.b16 %v300
    %v984 = vunpack.c.l.b16 %v301
    %v985 = vunpack.c.h.b16 %v301
    %v986 = vunpack.c.l.b16 %v302
    %v987 = vunpack.c.h.b16 %v302
    %v988 = vunpack.c.l.b16 %v303
    %v989 = vunpack.c.h.b16 %v303
    %v990 = vunpack.c.l.b16 %v304
    %v991 = vunpack.c.h.b16 %v304
    %v992 = vunpack.c.l.b16 %v305
    %v993 = vunpack.c.h.b16 %v305
    %v994 = vunpack.c.l.b16 %v306
    %v995 = vunpack.c.h.b16 %v306
    %v996 = vunpack.c.l.b16 %v307
    %v997 = vunpack.c.h.b16 %v307
    %v998 = vunpack.c.l.b16 %v308
    %v999 = vunpack.c.h.b16 %v308
    %v1000 = vunpack.c.l.b16 %v309
    %v1001 = vunpack.c.h.b16 %v309
    %v1002 = vunpack.c.l.b16 %v310
    %v1003 = vunpack.c.h.b16 %v310
    %v1004 = vunpack.c.l.b16 %v311
    %v1005 = vunpack.c.h.b16 %v311
    %v1006 = vunpack.c.l.b16 %v312
    %v1007 = vunpack.c.h.b16 %v312
    %v1008 = vunpack.c.l.b16 %v313
    %v1009 = vunpack.c.h.b16 %v313
    %v1010 = vunpack.c.l.b16 %v314
    %v1011 = vunpack.c.h.b16 %v314
    %v1012 = vunpack.c.l.b16 %v315
    %v1013 = vunpack.c.h.b16 %v315
    %v1014 = vunpack.c.l.b16 %v316
    %v1015 = vunpack.c.h.b16 %v316
    %v1016 = vunpack.c.l.b16 %v317
    %v1017 = vunpack.c.h.b16 %v317
    %v1018 = vunpack.c.l.b16 %v318
    %v1019 = vunpack.c.h.b16 %v318
    %v1020 = vunpack.c.l.b16 %v319
    %v1021 = vunpack.c.h.b16 %v319
    %v1022 = vunpack.c.l.b16 %v320
    %v1023 = vunpack.c.h.b16 %v320
    %v1024 = vunpack.c.l.b16 %v321
    %v1025 = vunpack.c.h.b16 %v321
    %v1026 = vunpack.c.l.b16 %v322
    %v1027 = vunpack.c.h.b16 %v322
    %v1028 = vunpack.c.l.b16 %v323
    %v1029 = vunpack.c.h.b16 %v323
    %v1030 = vunpack.c.l.b16 %v324
    %v1031 = vunpack.c.h.b16 %v324
    %v1032 = vunpack.c.l.b16 %v325
    %v1033 = vunpack.c.h.b16 %v325
    %v1034 = vunpack.c.l.b16 %v326
    %v1035 = vunpack.c.h.b16 %v326
    %v1036 = vunpack.c.l.b16 %v327
    %v1037 = vunpack.c.h.b16 %v327
    %v1038 = vunpack.c.l.b16 %v328
    %v1039 = vunpack.c.h.b16 %v328
    %v1040 = vunpack.c.l.b16 %v329
    %v1041 = vunpack.c.h.b16 %v329
    %v1042 = vunpack.c.l.b16 %v330
    %v1043 = vunpack.c.h.b16 %v330
    %v1044 = vunpack.c.l.b16 %v331
    %v1045 = vunpack.c.h.b16 %v331
    %v1046 = vunpack.c.l.b16 %v332
    %v1047 = vunpack.c.h.b16 %v332
    %v1048 = vunpack.c.l.b16 %v333
    %v1049 = vunpack.c.h.b16 %v333
    %v1050 = vunpack.c.l.b16 %v334
    %v1051 = vunpack.c.h.b16 %v334
    %v1052 = vunpack.c.l.b16 %v335
    %v1053 = vunpack.c.h.b16 %v335
    %v1054 = vunpack.c.l.b16 %v336
    %v1055 = vunpack.c.h.b16 %v336
    %v1056 = vunpack.c.l.b16 %v337
    %v1057 = vunpack.c.h.b16 %v337
    %v1058 = vunpack.c.l.b16 %v338
    %v1059 = vunpack.c.h.b16 %v338
    %v1060 = vunpack.c.l.b16 %v339
    %v1061 = vunpack.c.h.b16 %v339
    %v1062 = vunpack.c.l.b16 %v340
    %v1063 = vunpack.c.h.b16 %v340
    %v1064 = vunpack.c.l.b16 %v341
    %v1065 = vunpack.c.h.b16 %v341
    %v1066 = vunpack.c.l.b16 %v342
    %v1067 = vunpack.c.h.b16 %v342
    %v1068 = vunpack.c.l.b16 %v343
    %v1069 = vunpack.c.h.b16 %v343
    %v1070 = vunpack.c.l.b16 %v344
    %v1071 = vunpack.c.h.b16 %v344
    %v1072 = vunpack.c.l.b16 %v345
    %v1073 = vunpack.c.h.b16 %v345
    %v1074 = vunpack.c.l.b16 %v346
    %v1075 = vunpack.c.h.b16 %v346
    %v1076 = vunpack.c.l.b16 %v347
    %v1077 = vunpack.c.h.b16 %v347
    %v1078 = vunpack.c.l.b16 %v348
    %v1079 = vunpack.c.h.b16 %v348
    %v1080 = vunpack.c.l.b16 %v349
    %v1081 = vunpack.c.h.b16 %v349
    %v1082 = vunpack.c.l.b16 %v350
    %v1083 = vunpack.c.h.b16 %v350
    %v1084 = vunpack.c.l.b16 %v351
    %v1085 = vunpack.c.h.b16 %v351
    %v1086 = vunpack.c.l.b16 %v352
    %v1087 = vunpack.c.h.b16 %v352
    %v1088 = vunpack.c.l.b16 %v353
    %v1089 = vunpack.c.h.b16 %v353
    %v1090 = vunpack.c.l.b16 %v354
    %v1091 = vunpack.c.h.b16 %v354
    %v1092 = vunpack.c.l.b16 %v355
    %v1093 = vunpack.c.h.b16 %v355
    %v1094 = vunpack.c.l.b16 %v356
    %v1095 = vunpack.c.h.b16 %v356
    %v1096 = vunpack.c.l.b16 %v357
    %v1097 = vunpack.c.h.b16 %v357
    %v1098 = vunpack.c.l.b16 %v358
    %v1099 = vunpack.c.h.b16 %v358
    %v1100 = vunpack.c.l.b16 %v359
    %v1101 = vunpack.c.h.b16 %v359
    %v1102 = vunpack.c.l.b16 %v360
    %v1103 = vunpack.c.h.b16 %v360
    %v1104 = vunpack.c.l.b16 %v361
    %v1105 = vunpack.c.h.b16 %v361
    %v1106 = vunpack.c.l.b16 %v362
    %v1107 = vunpack.c.h.b16 %v362
    %v1108 = vunpack.c.l.b16 %v363
    %v1109 = vunpack.c.h.b16 %v363
    %v1110 = vunpack.c.l.b16 %v364
    %v1111 = vunpack.c.h.b16 %v364
    %v1112 = vunpack.c.l.b16 %v365
    %v1113 = vunpack.c.h.b16 %v365
    %v1114 = vunpack.c.l.b16 %v366
    %v1115 = vunpack.c.h.b16 %v366
    %v1116 = vunpack.c.l.b16 %v367
    %v1117 = vunpack.c.h.b16 %v367
    %v1118 = vunpack.c.l.b16 %v368
    %v1119 = vunpack.c.h.b16 %v368
    %v1120 = vunpack.c.l.b16 %v369
    %v1121 = vunpack.c.h.b16 %v369
    %v1122 = vunpack.c.l.b16 %v370
    %v1123 = vunpack.c.h.b16 %v370
    %v1124 = vunpack.c.l.b16 %v371
    %v1125 = vunpack.c.h.b16 %v371
    %v1126 = vunpack.c.l.b16 %v372
    %v1127 = vunpack.c.h.b16 %v372
    %v1128 = vunpack.c.l.b16 %v373
    %v1129 = vunpack.c.h.b16 %v373
    %v1130 = vunpack.c.l.b16 %v374
    %v1131 = vunpack.c.h.b16 %v374
    %v1132 = vunpack.c.l.b16 %v375
    %v1133 = vunpack.c.h.b16 %v375
    %v1134 = vunpack.c.l.b16 %v376
    %v1135 = vunpack.c.h.b16 %v376
    %v1136 = vunpack.c.l.b16 %v377
    %v1137 = vunpack.c.h.b16 %v377
    %v1138 = vunpack.c.l.b16 %v378
    %v1139 = vunpack.c.h.b16 %v378
    %v1140 = vunpack.c.l.b16 %v379
    %v1141 = vunpack.c.h.b16 %v379
    %v1142 = vunpack.c.l.b16 %v380
    %v1143 = vunpack.c.h.b16 %v380
    %v1144 = vunpack.c.l.b16 %v381
    %v1145 = vunpack.c.h.b16 %v381
    %v1146 = vunpack.c.l.b16 %v382
    %v1147 = vunpack.c.h.b16 %v382
    %v1148 = vunpack.c.l.b16 %v383
    %v1149 = vunpack.c.h.b16 %v383
    %v1150 = vunpack.c.l.b16 %v384
    %v1151 = vunpack.c.h.b16 %v384
    %v1152 = vunpack.c.l.b16 %v385
    %v1153 = vunpack.c.h.b16 %v385
    %v1154 = vunpack.c.l.b16 %v386
    %v1155 = vunpack.c.h.b16 %v386
    %v1156 = vunpack.c.l.b16 %v387
    %v1157 = vunpack.c.h.b16 %v387
    %v1158 = vunpack.c.l.b16 %v388
    %v1159 = vunpack.c.h.b16 %v388
    %v1160 = vunpack.c.l.b16 %v389
    %v1161 = vunpack.c.h.b16 %v389
    %v1162 = vunpack.c.l.b16 %v390
    %v1163 = vunpack.c.h.b16 %v390
    %v1164 = vunpack.c.l.b16 %v391
    %v1165 = vunpack.c.h.b16 %v391
    %v1166 = vunpack.c.l.b16 %v392
    %v1167 = vunpack.c.h.b16 %v392
    %v1168 = vunpack.c.l.b16 %v393
    %v1169 = vunpack.c.h.b16 %v393
    %v1170 = vunpack.c.l.b16 %v394
    %v1171 = vunpack.c.h.b16 %v394
    %v1172 = vunpack.c.l.b16 %v395
    %v1173 = vunpack.c.h.b16 %v395
    %v1174 = vunpack.c.l.b16 %v396
    %v1175 = vunpack.c.h.b16 %v396
    %v1176 = vunpack.c.l.b16 %v397
    %v1177 = vunpack.c.h.b16 %v397
    %v1178 = vunpack.c.l.b16 %v398
    %v1179 = vunpack.c.h.b16 %v398
    %v1180 = vunpack.c.l.b16 %v399
    %v1181 = vunpack.c.h.b16 %v399
    %v1182 = vunpack.c.l.b16 %v400
    %v1183 = vunpack.c.h.b16 %v400
    %v1184 = vunpack.c.l.b16 %v401
    %v1185 = vunpack.c.h.b16 %v401
    %v1186 = vunpack.c.l.b16 %v402
    %v1187 = vunpack.c.h.b16 %v402
    %v1188 = vunpack.c.l.b16 %v403
    %v1189 = vunpack.c.h.b16 %v403
    %v1190 = vunpack.c.l.b16 %v404
    %v1191 = vunpack.c.h.b16 %v404
    %v1192 = vunpack.c.l.b16 %v405
    %v1193 = vunpack.c.h.b16 %v405
    %v1194 = vunpack.c.l.b16 %v406
    %v1195 = vunpack.c.h.b16 %v406
    %v1196 = vunpack.c.l.b16 %v407
    %v1197 = vunpack.c.h.b16 %v407
    %v1198 = vpack.c.b16 %v690, %v686
    %v1199 = vpack.c.b16 %v691, %v687
    %v1200 = vpack.c.b16 %v692, %v688
    %v1201 = vpack.c.b16 %v693, %v689
    %v1202 = vpack.c.b16 %v698, %v694
    %v1203 = vpack.c.b16 %v699, %v695
    %v1204 = vpack.c.b16 %v700, %v696
    %v1205 = vpack.c.b16 %v701, %v697
    %v1206 = vpack.c.b16 %v706, %v702
    %v1207 = vpack.c.b16 %v707, %v703
    %v1208 = vpack.c.b16 %v708, %v704
    %v1209 = vpack.c.b16 %v709, %v705
    %v1210 = vpack.c.b16 %v714, %v710
    %v1211 = vpack.c.b16 %v715, %v711
    %v1212 = vpack.c.b16 %v716, %v712
    %v1213 = vpack.c.b16 %v717, %v713
    %v1214 = vpack.c.b16 %v722, %v718
    %v1215 = vpack.c.b16 %v723, %v719
    %v1216 = vpack.c.b16 %v724, %v720
    %v1217 = vpack.c.b16 %v725, %v721
    %v1218 = vpack.c.b16 %v730, %v726
    %v1219 = vpack.c.b16 %v731, %v727
    %v1220 = vpack.c.b16 %v732, %v728
    %v1221 = vpack.c.b16 %v733, %v729
    %v1222 = vpack.c.b16 %v738, %v734
    %v1223 = vpack.c.b16 %v739, %v735
    %v1224 = vpack.c.b16 %v740, %v736
    %v1225 = vpack.c.b16 %v741, %v737
    %v1226 = vpack.c.b16 %v746, %v742
    %v1227 = vpack.c.b16 %v747, %v743
    %v1228 = vpack.c.b16 %v748, %v744
    %v1229 = vpack.c.b16 %v749, %v745
    %v1230 = vpack.c.b16 %v754, %v750
    %v1231 = vpack.c.b16 %v755, %v751
    %v1232 = vpack.c.b16 %v756, %v752
    %v1233 = vpack.c.b16 %v757, %v753
    %v1234 = vpack.c.b16 %v762, %v758
    %v1235 = vpack.c.b16 %v763, %v759
    %v1236 = vpack.c.b16 %v764, %v760
    %v1237 = vpack.c.b16 %v765, %v761
    %v1238 = vpack.c.b16 %v770, %v766
    %v1239 = vpack.c.b16 %v771, %v767
    %v1240 = vpack.c.b16 %v772, %v768
    %v1241 = vpack.c.b16 %v773, %v769
    %v1242 = vpack.c.b16 %v778, %v774
    %v1243 = vpack.c.b16 %v779, %v775
    %v1244 = vpack.c.b16 %v780, %v776
    %v1245 = vpack.c.b16 %v781, %v777
    %v1246 = vpack.c.b16 %v786, %v782
    %v1247 = vpack.c.b16 %v787, %v783
    %v1248 = vpack.c.b16 %v788, %v784
    %v1249 = vpack.c.b16 %v789, %v785
    %v1250 = vpack.c.b16 %v794, %v790
    %v1251 = vpack.c.b16 %v795, %v791
    %v1252 = vpack.c.b16 %v796, %v792
    %v1253 = vpack.c.b16 %v797, %v793
    %v1254 = vpack.c.b16 %v802, %v798
    %v1255 = vpack.c.b16 %v803, %v799
    %v1256 = vpack.c.b16 %v804, %v800
    %v1257 = vpack.c.b16 %v805, %v801
    %v1258 = vpack.c.b16 %v810, %v806
    %v1259 = vpack.c.b16 %v811, %v807
    %v1260 = vpack.c.b16 %v812, %v808
    %v1261 = vpack.c.b16 %v813, %v809
    %v1262 = vpack.c.b16 %v818, %v814
    %v1263 = vpack.c.b16 %v819, %v815
    %v1264 = vpack.c.b16 %v820, %v816
    %v1265 = vpack.c.b16 %v821, %v817
    %v1266 = vpack.c.b16 %v826, %v822
    %v1267 = vpack.c.b16 %v827, %v823
    %v1268 = vpack.c.b16 %v828, %v824
    %v1269 = vpack.c.b16 %v829, %v825
    %v1270 = vpack.c.b16 %v834, %v830
    %v1271 = vpack.c.b16 %v835, %v831
    %v1272 = vpack.c.b16 %v836, %v832
    %v1273 = vpack.c.b16 %v837, %v833
    %v1274 = vpack.c.b16 %v842, %v838
    %v1275 = vpack.c.b16 %v843, %v839
    %v1276 = vpack.c.b16 %v844, %v840
    %v1277 = vpack.c.b16 %v845, %v841
    %v1278 = vpack.c.b16 %v850, %v846
    %v1279 = vpack.c.b16 %v851, %v847
    %v1280 = vpack.c.b16 %v852, %v848
    %v1281 = vpack.c.b16 %v853, %v849
    %v1282 = vpack.c.b16 %v858, %v854
    %v1283 = vpack.c.b16 %v859, %v855
    %v1284 = vpack.c.b16 %v860, %v856
    %v1285 = vpack.c.b16 %v861, %v857
    %v1286 = vpack.c.b16 %v866, %v862
    %v1287 = vpack.c.b16 %v867, %v863
    %v1288 = vpack.c.b16 %v868, %v864
    %v1289 = vpack.c.b16 %v869, %v865
    %v1290 = vpack.c.b16 %v874, %v870
    %v1291 = vpack.c.b16 %v875, %v871
    %v1292 = vpack.c.b16 %v876, %v872
    %v1293 = vpack.c.b16 %v877, %v873
    %v1294 = vpack.c.b16 %v882, %v878
    %v1295 = vpack.c.b16 %v883, %v879
    %v1296 = vpack.c.b16 %v884, %v880
    %v1297 = vpack.c.b16 %v885, %v881
    %v1298 = vpack.c.b16 %v890, %v886
    %v1299 = vpack.c.b16 %v891, %v887
    %v1300 = vpack.c.b16 %v892, %v888
    %v1301 = vpack.c.b16 %v893, %v889
    %v1302 = vpack.c.b16 %v898, %v894
    %v1303 = vpack.c.b16 %v899, %v895
    %v1304 = vpack.c.b16 %v900, %v896
    %v1305 = vpack.c.b16 %v901, %v897
    %v1306 = vpack.c.b16 %v906, %v902
    %v1307 = vpack.c.b16 %v907, %v903
    %v1308 = vpack.c.b16 %v908, %v904
    %v1309 = vpack.c.b16 %v909, %v905
    %v1310 = vpack.c.b16 %v914, %v910
    %v1311 = vpack.c.b16 %v915, %v911
    %v1312 = vpack.c.b16 %v916, %v912
    %v1313 = vpack.c.b16 %v917, %v913
    %v1314 = vpack.c.b16 %v922, %v918
    %v1315 = vpack.c.b16 %v923, %v919
    %v1316 = vpack.c.b16 %v924, %v920
    %v1317 = vpack.c.b16 %v925, %v921
    %v1318 = vpack.c.b16 %v930, %v926
    %v1319 = vpack.c.b16 %v931, %v927
    %v1320 = vpack.c.b16 %v932, %v928
    %v1321 = vpack.c.b16 %v933, %v929
    %v1322 = vpack.c.b16 %v938, %v934
    %v1323 = vpack.c.b16 %v939, %v935
    %v1324 = vpack.c.b16 %v940, %v936
    %v1325 = vpack.c.b16 %v941, %v937
    %v1326 = vpack.c.b16 %v946, %v942
    %v1327 = vpack.c.b16 %v947, %v943
    %v1328 = vpack.c.b16 %v948, %v944
    %v1329 = vpack.c.b16 %v949, %v945
    %v1330 = vpack.c.b16 %v954, %v950
    %v1331 = vpack.c.b16 %v955, %v951
    %v1332 = vpack.c.b16 %v956, %v952
    %v1333 = vpack.c.b16 %v957, %v953
    %v1334 = vpack.c.b16 %v962, %v958
    %v1335 = vpack.c.b16 %v963, %v959
    %v1336 = vpack.c.b16 %v964, %v960
    %v1337 = vpack.c.b16 %v965, %v961
    %v1338 = vpack.c.b16 %v970, %v966
    %v1339 = vpack.c.b16 %v971, %v967
    %v1340 = vpack.c.b16 %v972, %v968
    %v1341 = vpack.c.b16 %v973, %v969
    %v1342 = vpack.c.b16 %v978, %v974
    %v1343 = vpack.c.b16 %v979, %v975
    %v1344 = vpack.c.b16 %v980, %v976
    %v1345 = vpack.c.b16 %v981, %v977
    %v1346 = vpack.c.b16 %v986, %v982
    %v1347 = vpack.c.b16 %v987, %v983
    %v1348 = vpack.c.b16 %v988, %v984
    %v1349 = vpack.c.b16 %v989, %v985
    %v1350 = vpack.c.b16 %v994, %v990
    %v1351 = vpack.c.b16 %v995, %v991
    %v1352 = vpack.c.b16 %v996, %v992
    %v1353 = vpack.c.b16 %v997, %v993
    %v1354 = vpack.c.b16 %v1002, %v998
    %v1355 = vpack.c.b16 %v1003, %v999
    %v1356 = vpack.c.b16 %v1004, %v1000
    %v1357 = vpack.c.b16 %v1005, %v1001
    %v1358 = vpack.c.b16 %v1010, %v1006
    %v1359 = vpack.c.b16 %v1011, %v1007
    %v1360 = vpack.c.b16 %v1012, %v1008
    %v1361 = vpack.c.b16 %v1013, %v1009
    %v1362 = vpack.c.b16 %v1018, %v1014
    %v1363 = vpack.c.b16 %v1019, %v1015
    %v1364 = vpack.c.b16 %v1020, %v1016
    %v1365 = vpack.c.b16 %v1021, %v1017
    %v1366 = vpack.c.b16 %v1026, %v1022
    %v1367 = vpack.c.b16 %v1027, %v1023
    %v1368 = vpack.c.b16 %v1028, %v1024
    %v1369 = vpack.c.b16 %v1029, %v1025
    %v1370 = vpack.c.b16 %v1034, %v1030
    %v1371 = vpack.c.b16 %v1035, %v1031
    %v1372 = vpack.c.b16 %v1036, %v1032
    %v1373 = vpack.c.b16 %v1037, %v1033
    %v1374 = vpack.c.b16 %v1042, %v1038
    %v1375 = vpack.c.b16 %v1043, %v1039
    %v1376 = vpack.c.b16 %v1044, %v1040
    %v1377 = vpack.c.b16 %v1045, %v1041
    %v1378 = vpack.c.b16 %v1050, %v1046
    %v1379 = vpack.c.b16 %v1051, %v1047
    %v1380 = vpack.c.b16 %v1052, %v1048
    %v1381 = vpack.c.b16 %v1053, %v1049
    %v1382 = vpack.c.b16 %v1058, %v1054
    %v1383 = vpack.c.b16 %v1059, %v1055
    %v1384 = vpack.c.b16 %v1060, %v1056
    %v1385 = vpack.c.b16 %v1061, %v1057
    %v1386 = vpack.c.b16 %v1066, %v1062
    %v1387 = vpack.c.b16 %v1067, %v1063
    %v1388 = vpack.c.b16 %v1068, %v1064
    %v1389 = vpack.c.b16 %v1069, %v1065
    %v1390 = vpack.c.b16 %v1074, %v1070
    %v1391 = vpack.c.b16 %v1075, %v1071
    %v1392 = vpack.c.b16 %v1076, %v1072
    %v1393 = vpack.c.b16 %v1077, %v1073
    %v1394 = vpack.c.b16 %v1082, %v1078
    %v1395 = vpack.c.b16 %v1083, %v1079
    %v1396 = vpack.c.b16 %v1084, %v1080
    %v1397 = vpack.c.b16 %v1085, %v1081
    %v1398 = vpack.c.b16 %v1090, %v1086
    %v1399 = vpack.c.b16 %v1091, %v1087
    %v1400 = vpack.c.b16 %v1092, %v1088
    %v1401 = vpack.c.b16 %v1093, %v1089
    %v1402 = vpack.c.b16 %v1098, %v1094
    %v1403 = vpack.c.b16 %v1099, %v1095
    %v1404 = vpack.c.b16 %v1100, %v1096
    %v1405 = vpack.c.b16 %v1101, %v1097
    %v1406 = vpack.c.b16 %v1106, %v1102
    %v1407 = vpack.c.b16 %v1107, %v1103
    %v1408 = vpack.c.b16 %v1108, %v1104
    %v1409 = vpack.c.b16 %v1109, %v1105
    %v1410 = vpack.c.b16 %v1114, %v1110
    %v1411 = vpack.c.b16 %v1115, %v1111
    %v1412 = vpack.c.b16 %v1116, %v1112
    %v1413 = vpack.c.b16 %v1117, %v1113
    %v1414 = vpack.c.b16 %v1122, %v1118
    %v1415 = vpack.c.b16 %v1123, %v1119
    %v1416 = vpack.c.b16 %v1124, %v1120
    %v1417 = vpack.c.b16 %v1125, %v1121
    %v1418 = vpack.c.b16 %v1130, %v1126
    %v1419 = vpack.c.b16 %v1131, %v1127
    %v1420 = vpack.c.b16 %v1132, %v1128
    %v1421 = vpack.c.b16 %v1133, %v1129
    %v1422 = vpack.c.b16 %v1138, %v1134
    %v1423 = vpack.c.b16 %v1139, %v1135
    %v1424 = vpack.c.b16 %v1140, %v1136
    %v1425 = vpack.c.b16 %v1141, %v1137
    %v1426 = vpack.c.b16 %v1146, %v1142
    %v1427 = vpack.c.b16 %v1147, %v1143
    %v1428 = vpack.c.b16 %v1148, %v1144
    %v1429 = vpack.c.b16 %v1149, %v1145
    %v1430 = vpack.c.b16 %v1154, %v1150
    %v1431 = vpack.c.b16 %v1155, %v1151
    %v1432 = vpack.c.b16 %v1156, %v1152
    %v1433 = vpack.c.b16 %v1157, %v1153
    %v1434 = vpack.c.b16 %v1162, %v1158
    %v1435 = vpack.c.b16 %v1163, %v1159
    %v1436 = vpack.c.b16 %v1164, %v1160
    %v1437 = vpack.c.b16 %v1165, %v1161
    %v1438 = vpack.c.b16 %v1170, %v1166
    %v1439 = vpack.c.b16 %v1171, %v1167
    %v1440 = vpack.c.b16 %v1172, %v1168
    %v1441 = vpack.c.b16 %v1173, %v1169
    %v1442 = vpack.c.b16 %v1178, %v1174
    %v1443 = vpack.c.b16 %v1179, %v1175
    %v1444 = vpack.c.b16 %v1180, %v1176
    %v1445 = vpack.c.b16 %v1181, %v1177
    %v1446 = vpack.c.b16 %v1186, %v1182
    %v1447 = vpack.c.b16 %v1187, %v1183
    %v1448 = vpack.c.b16 %v1188, %v1184
    %v1449 = vpack.c.b16 %v1189, %v1185
    %v1450 = vpack.c.b16 %v1194, %v1190
    %v1451 = vpack.c.b16 %v1195, %v1191
    %v1452 = vpack.c.b16 %v1196, %v1192
    %v1453 = vpack.c.b16 %v1197, %v1193
    %1710 = vmatprep.subr.bf16.mxu0 %v1227
    %1711 = vmatpush1.bf16.msra.mxu0 %v1226
    %1712 = vmatprep.subr.bf16.mxu0 %v1223
    %1713 = vmatpush1.bf16.msra.mxu0 %v1222
    %1714 = vmatprep.subr.bf16.mxu0 %v1219
    %1715 = vmatpush1.bf16.msra.mxu0 %v1218
    %1716 = vmatprep.subr.bf16.mxu0 %v1215
    %1717 = vmatpush1.bf16.msra.mxu0 %v1214
    %1718 = vmatprep.subr.bf16.mxu0 %v1211
    %1719 = vmatpush1.bf16.msra.mxu0 %v1210
    %1720 = vmatprep.subr.bf16.mxu0 %v1207
    %1721 = vmatpush1.bf16.msra.mxu0 %v1206
    %1722 = vmatprep.subr.bf16.mxu0 %v1203
    %1723 = vmatpush1.bf16.msra.mxu0 %v1202
    %1724 = vmatprep.subr.bf16.mxu0 %v1199
    %1725 = vmatpush1.bf16.msra.mxu0 %v1198
    %1726 = vmatprep.subr.bf16.mxu0 %v1259
    %1727 = vmatpush2.bf16.msra.mxu0 %v1258
    %1728 = vmatprep.subr.bf16.mxu0 %v1255
    %1729 = vmatpush2.bf16.msra.mxu0 %v1254
    %1730 = vmatprep.subr.bf16.mxu0 %v1251
    %1731 = vmatpush2.bf16.msra.mxu0 %v1250
    %1732 = vmatprep.subr.bf16.mxu0 %v1247
    %1733 = vmatpush2.bf16.msra.mxu0 %v1246
    %1734 = vmatprep.subr.bf16.mxu0 %v1243
    %1735 = vmatpush2.bf16.msra.mxu0 %v1242
    %1736 = vmatprep.subr.bf16.mxu0 %v1239
    %1737 = vmatpush2.bf16.msra.mxu0 %v1238
    %1738 = vmatprep.subr.bf16.mxu0 %v1235
    %1739 = vmatpush2.bf16.msra.mxu0 %v1234
    %1740 = vmatprep.subr.bf16.mxu0 %v1231
    %1741 = vmatpush2.bf16.msra.mxu0 %v1230
    %1742 = vmatprep.mubr.bf16.mxu0 %v145
    %1743 = vmatmul.mubr.bf16.gmra.mxu0 %v144
    %v1744 = vpop.f32.mrf.mxu0
    %v1745 = vadd.f32 %v413, %v1744
    %v1746 = vpop.f32.mrf.mxu0
    %v1747 = vadd.f32 %v417, %v1746
    %v1748 = vpop.f32.mrf.mxu0
    %v1749 = vadd.f32 %v413, %v1748
    %v1750 = vpop.f32.mrf.mxu0
    %v1751 = vadd.f32 %v417, %v1750
    %1752 = vdwg.mxu0
    %1753 = vmatprep.subr.bf16.mxu0 %v1291
    %1754 = vmatpush1.bf16.msra.mxu0 %v1290
    %1755 = vmatprep.subr.bf16.mxu0 %v1287
    %1756 = vmatpush1.bf16.msra.mxu0 %v1286
    %1757 = vmatprep.subr.bf16.mxu0 %v1283
    %1758 = vmatpush1.bf16.msra.mxu0 %v1282
    %1759 = vmatprep.subr.bf16.mxu0 %v1279
    %1760 = vmatpush1.bf16.msra.mxu0 %v1278
    %1761 = vmatprep.subr.bf16.mxu0 %v1275
    %1762 = vmatpush1.bf16.msra.mxu0 %v1274
    %1763 = vmatprep.subr.bf16.mxu0 %v1271
    %1764 = vmatpush1.bf16.msra.mxu0 %v1270
    %1765 = vmatprep.subr.bf16.mxu0 %v1267
    %1766 = vmatpush1.bf16.msra.mxu0 %v1266
    %1767 = vmatprep.subr.bf16.mxu0 %v1263
    %1768 = vmatpush1.bf16.msra.mxu0 %v1262
    %1769 = vmatprep.subr.bf16.mxu0 %v1323
    %1770 = vmatpush2.bf16.msra.mxu0 %v1322
    %1771 = vmatprep.subr.bf16.mxu0 %v1319
    %1772 = vmatpush2.bf16.msra.mxu0 %v1318
    %1773 = vmatprep.subr.bf16.mxu0 %v1315
    %1774 = vmatpush2.bf16.msra.mxu0 %v1314
    %1775 = vmatprep.subr.bf16.mxu0 %v1311
    %1776 = vmatpush2.bf16.msra.mxu0 %v1310
    %1777 = vmatprep.subr.bf16.mxu0 %v1307
    %1778 = vmatpush2.bf16.msra.mxu0 %v1306
    %1779 = vmatprep.subr.bf16.mxu0 %v1303
    %1780 = vmatpush2.bf16.msra.mxu0 %v1302
    %1781 = vmatprep.subr.bf16.mxu0 %v1299
    %1782 = vmatpush2.bf16.msra.mxu0 %v1298
    %1783 = vmatprep.subr.bf16.mxu0 %v1295
    %1784 = vmatpush2.bf16.msra.mxu0 %v1294
    %1785 = vmatprep.mubr.bf16.mxu0 %v147
    %1786 = vmatmul.mubr.bf16.gmra.mxu0 %v146
    %v1787 = vpop.f32.mrf.mxu0
    %v1788 = vadd.f32 %v1745, %v1787
    %v1789 = vpop.f32.mrf.mxu0
    %v1790 = vadd.f32 %v1747, %v1789
    %v1791 = vpop.f32.mrf.mxu0
    %v1792 = vadd.f32 %v1749, %v1791
    %v1793 = vpop.f32.mrf.mxu0
    %v1794 = vadd.f32 %v1751, %v1793
    %1795 = vdwg.mxu0
    %1796 = vmatprep.subr.bf16.mxu0 %v1355
    %1797 = vmatpush1.bf16.msra.mxu0 %v1354
    %1798 = vmatprep.subr.bf16.mxu0 %v1351
    %1799 = vmatpush1.bf16.msra.mxu0 %v1350
    %1800 = vmatprep.subr.bf16.mxu0 %v1347
    %1801 = vmatpush1.bf16.msra.mxu0 %v1346
    %1802 = vmatprep.subr.bf16.mxu0 %v1343
    %1803 = vmatpush1.bf16.msra.mxu0 %v1342
    %1804 = vmatprep.subr.bf16.mxu0 %v1339
    %1805 = vmatpush1.bf16.msra.mxu0 %v1338
    %1806 = vmatprep.subr.bf16.mxu0 %v1335
    %1807 = vmatpush1.bf16.msra.mxu0 %v1334
    %1808 = vmatprep.subr.bf16.mxu0 %v1331
    %1809 = vmatpush1.bf16.msra.mxu0 %v1330
    %1810 = vmatprep.subr.bf16.mxu0 %v1327
    %1811 = vmatpush1.bf16.msra.mxu0 %v1326
    %1812 = vmatprep.subr.bf16.mxu0 %v1387
    %1813 = vmatpush2.bf16.msra.mxu0 %v1386
    %1814 = vmatprep.subr.bf16.mxu0 %v1383
    %1815 = vmatpush2.bf16.msra.mxu0 %v1382
    %1816 = vmatprep.subr.bf16.mxu0 %v1379
    %1817 = vmatpush2.bf16.msra.mxu0 %v1378
    %1818 = vmatprep.subr.bf16.mxu0 %v1375
    %1819 = vmatpush2.bf16.msra.mxu0 %v1374
    %1820 = vmatprep.subr.bf16.mxu0 %v1371
    %1821 = vmatpush2.bf16.msra.mxu0 %v1370
    %1822 = vmatprep.subr.bf16.mxu0 %v1367
    %1823 = vmatpush2.bf16.msra.mxu0 %v1366
    %1824 = vmatprep.subr.bf16.mxu0 %v1363
    %1825 = vmatpush2.bf16.msra.mxu0 %v1362
    %1826 = vmatprep.subr.bf16.mxu0 %v1359
    %1827 = vmatpush2.bf16.msra.mxu0 %v1358
    %1828 = vmatprep.mubr.bf16.mxu0 %v149
    %1829 = vmatmul.mubr.bf16.gmra.mxu0 %v148
    %v1830 = vpop.f32.mrf.mxu0
    %v1831 = vadd.f32 %v1788, %v1830
    %v1832 = vpop.f32.mrf.mxu0
    %v1833 = vadd.f32 %v1790, %v1832
    %v1834 = vpop.f32.mrf.mxu0
    %v1835 = vadd.f32 %v1792, %v1834
    %v1836 = vpop.f32.mrf.mxu0
    %v1837 = vadd.f32 %v1794, %v1836
    %1838 = vdwg.mxu0
    %1839 = vmatprep.subr.bf16.mxu0 %v1419
    %1840 = vmatpush1.bf16.msra.mxu0 %v1418
    %1841 = vmatprep.subr.bf16.mxu0 %v1415
    %1842 = vmatpush1.bf16.msra.mxu0 %v1414
    %1843 = vmatprep.subr.bf16.mxu0 %v1411
    %1844 = vmatpush1.bf16.msra.mxu0 %v1410
    %1845 = vmatprep.subr.bf16.mxu0 %v1407
    %1846 = vmatpush1.bf16.msra.mxu0 %v1406
    %1847 = vmatprep.subr.bf16.mxu0 %v1403
    %1848 = vmatpush1.bf16.msra.mxu0 %v1402
    %1849 = vmatprep.subr.bf16.mxu0 %v1399
    %1850 = vmatpush1.bf16.msra.mxu0 %v1398
    %1851 = vmatprep.subr.bf16.mxu0 %v1395
    %1852 = vmatpush1.bf16.msra.mxu0 %v1394
    %1853 = vmatprep.subr.bf16.mxu0 %v1391
    %1854 = vmatpush1.bf16.msra.mxu0 %v1390
    %1855 = vmatprep.subr.bf16.mxu0 %v1451
    %1856 = vmatpush2.bf16.msra.mxu0 %v1450
    %1857 = vmatprep.subr.bf16.mxu0 %v1447
    %1858 = vmatpush2.bf16.msra.mxu0 %v1446
    %1859 = vmatprep.subr.bf16.mxu0 %v1443
    %1860 = vmatpush2.bf16.msra.mxu0 %v1442
    %1861 = vmatprep.subr.bf16.mxu0 %v1439
    %1862 = vmatpush2.bf16.msra.mxu0 %v1438
    %1863 = vmatprep.subr.bf16.mxu0 %v1435
    %1864 = vmatpush2.bf16.msra.mxu0 %v1434
    %1865 = vmatprep.subr.bf16.mxu0 %v1431
    %1866 = vmatpush2.bf16.msra.mxu0 %v1430
    %1867 = vmatprep.subr.bf16.mxu0 %v1427
    %1868 = vmatpush2.bf16.msra.mxu0 %v1426
    %1869 = vmatprep.subr.bf16.mxu0 %v1423
    %1870 = vmatpush2.bf16.msra.mxu0 %v1422
    %1871 = vmatprep.mubr.bf16.mxu0 %v151
    %1872 = vmatmul.mubr.bf16.gmra.mxu0 %v150
    %v1873 = vpop.f32.mrf.mxu0
    %v1874 = vadd.f32 %v1831, %v1873
    %v1875 = vpop.f32.mrf.mxu0
    %v1876 = vadd.f32 %v1833, %v1875
    %v1877 = vpop.f32.mrf.mxu0
    %v1878 = vadd.f32 %v1835, %v1877
    %v1879 = vpop.f32.mrf.mxu0
    %v1880 = vadd.f32 %v1837, %v1879
    %1881 = vdwg.mxu0
    %1882 = vmatprep.subr.bf16.mxu0 %v1229
    %1883 = vmatpush1.bf16.msra.mxu0 %v1228
    %1884 = vmatprep.subr.bf16.mxu0 %v1225
    %1885 = vmatpush1.bf16.msra.mxu0 %v1224
    %1886 = vmatprep.subr.bf16.mxu0 %v1221
    %1887 = vmatpush1.bf16.msra.mxu0 %v1220
    %1888 = vmatprep.subr.bf16.mxu0 %v1217
    %1889 = vmatpush1.bf16.msra.mxu0 %v1216
    %1890 = vmatprep.subr.bf16.mxu0 %v1213
    %1891 = vmatpush1.bf16.msra.mxu0 %v1212
    %1892 = vmatprep.subr.bf16.mxu0 %v1209
    %1893 = vmatpush1.bf16.msra.mxu0 %v1208
    %1894 = vmatprep.subr.bf16.mxu0 %v1205
    %1895 = vmatpush1.bf16.msra.mxu0 %v1204
    %1896 = vmatprep.subr.bf16.mxu0 %v1201
    %1897 = vmatpush1.bf16.msra.mxu0 %v1200
    %1898 = vmatprep.subr.bf16.mxu0 %v1261
    %1899 = vmatpush2.bf16.msra.mxu0 %v1260
    %1900 = vmatprep.subr.bf16.mxu0 %v1257
    %1901 = vmatpush2.bf16.msra.mxu0 %v1256
    %1902 = vmatprep.subr.bf16.mxu0 %v1253
    %1903 = vmatpush2.bf16.msra.mxu0 %v1252
    %1904 = vmatprep.subr.bf16.mxu0 %v1249
    %1905 = vmatpush2.bf16.msra.mxu0 %v1248
    %1906 = vmatprep.subr.bf16.mxu0 %v1245
    %1907 = vmatpush2.bf16.msra.mxu0 %v1244
    %1908 = vmatprep.subr.bf16.mxu0 %v1241
    %1909 = vmatpush2.bf16.msra.mxu0 %v1240
    %1910 = vmatprep.subr.bf16.mxu0 %v1237
    %1911 = vmatpush2.bf16.msra.mxu0 %v1236
    %1912 = vmatprep.subr.bf16.mxu0 %v1233
    %1913 = vmatpush2.bf16.msra.mxu0 %v1232
    %1914 = vmatprep.mubr.bf16.mxu0 %v145
    %1915 = vmatmul.mubr.bf16.gmra.mxu0 %v144
    %v1916 = vpop.f32.mrf.mxu0
    %v1917 = vadd.f32 %v421, %v1916
    %v1918 = vpop.f32.mrf.mxu0
    %v1919 = vadd.f32 %v425, %v1918
    %v1920 = vpop.f32.mrf.mxu0
    %v1921 = vadd.f32 %v421, %v1920
    %v1922 = vpop.f32.mrf.mxu0
    %v1923 = vadd.f32 %v425, %v1922
    %1924 = vdwg.mxu0
    %1925 = vmatprep.subr.bf16.mxu0 %v1293
    %1926 = vmatpush1.bf16.msra.mxu0 %v1292
    %1927 = vmatprep.subr.bf16.mxu0 %v1289
    %1928 = vmatpush1.bf16.msra.mxu0 %v1288
    %1929 = vmatprep.subr.bf16.mxu0 %v1285
    %1930 = vmatpush1.bf16.msra.mxu0 %v1284
    %1931 = vmatprep.subr.bf16.mxu0 %v1281
    %1932 = vmatpush1.bf16.msra.mxu0 %v1280
    %1933 = vmatprep.subr.bf16.mxu0 %v1277
    %1934 = vmatpush1.bf16.msra.mxu0 %v1276
    %1935 = vmatprep.subr.bf16.mxu0 %v1273
    %1936 = vmatpush1.bf16.msra.mxu0 %v1272
    %1937 = vmatprep.subr.bf16.mxu0 %v1269
    %1938 = vmatpush1.bf16.msra.mxu0 %v1268
    %1939 = vmatprep.subr.bf16.mxu0 %v1265
    %1940 = vmatpush1.bf16.msra.mxu0 %v1264
    %1941 = vmatprep.subr.bf16.mxu0 %v1325
    %1942 = vmatpush2.bf16.msra.mxu0 %v1324
    %1943 = vmatprep.subr.bf16.mxu0 %v1321
    %1944 = vmatpush2.bf16.msra.mxu0 %v1320
    %1945 = vmatprep.subr.bf16.mxu0 %v1317
    %1946 = vmatpush2.bf16.msra.mxu0 %v1316
    %1947 = vmatprep.subr.bf16.mxu0 %v1313
    %1948 = vmatpush2.bf16.msra.mxu0 %v1312
    %1949 = vmatprep.subr.bf16.mxu0 %v1309
    %1950 = vmatpush2.bf16.msra.mxu0 %v1308
    %1951 = vmatprep.subr.bf16.mxu0 %v1305
    %1952 = vmatpush2.bf16.msra.mxu0 %v1304
    %1953 = vmatprep.subr.bf16.mxu0 %v1301
    %1954 = vmatpush2.bf16.msra.mxu0 %v1300
    %1955 = vmatprep.subr.bf16.mxu0 %v1297
    %1956 = vmatpush2.bf16.msra.mxu0 %v1296
    %1957 = vmatprep.mubr.bf16.mxu0 %v147
    %1958 = vmatmul.mubr.bf16.gmra.mxu0 %v146
    %v1959 = vpop.f32.mrf.mxu0
    %v1960 = vadd.f32 %v1917, %v1959
    %v1961 = vpop.f32.mrf.mxu0
    %v1962 = vadd.f32 %v1919, %v1961
    %v1963 = vpop.f32.mrf.mxu0
    %v1964 = vadd.f32 %v1921, %v1963
    %v1965 = vpop.f32.mrf.mxu0
    %v1966 = vadd.f32 %v1923, %v1965
    %1967 = vdwg.mxu0
    %1968 = vmatprep.subr.bf16.mxu0 %v1357
    %1969 = vmatpush1.bf16.msra.mxu0 %v1356
    %1970 = vmatprep.subr.bf16.mxu0 %v1353
    %1971 = vmatpush1.bf16.msra.mxu0 %v1352
    %1972 = vmatprep.subr.bf16.mxu0 %v1349
    %1973 = vmatpush1.bf16.msra.mxu0 %v1348
    %1974 = vmatprep.subr.bf16.mxu0 %v1345
    %1975 = vmatpush1.bf16.msra.mxu0 %v1344
    %1976 = vmatprep.subr.bf16.mxu0 %v1341
    %1977 = vmatpush1.bf16.msra.mxu0 %v1340
    %1978 = vmatprep.subr.bf16.mxu0 %v1337
    %1979 = vmatpush1.bf16.msra.mxu0 %v1336
    %1980 = vmatprep.subr.bf16.mxu0 %v1333
    %1981 = vmatpush1.bf16.msra.mxu0 %v1332
    %1982 = vmatprep.subr.bf16.mxu0 %v1329
    %1983 = vmatpush1.bf16.msra.mxu0 %v1328
    %1984 = vmatprep.subr.bf16.mxu0 %v1389
    %1985 = vmatpush2.bf16.msra.mxu0 %v1388
    %1986 = vmatprep.subr.bf16.mxu0 %v1385
    %1987 = vmatpush2.bf16.msra.mxu0 %v1384
    %1988 = vmatprep.subr.bf16.mxu0 %v1381
    %1989 = vmatpush2.bf16.msra.mxu0 %v1380
    %1990 = vmatprep.subr.bf16.mxu0 %v1377
    %1991 = vmatpush2.bf16.msra.mxu0 %v1376
    %1992 = vmatprep.subr.bf16.mxu0 %v1373
    %1993 = vmatpush2.bf16.msra.mxu0 %v1372
    %1994 = vmatprep.subr.bf16.mxu0 %v1369
    %1995 = vmatpush2.bf16.msra.mxu0 %v1368
    %1996 = vmatprep.subr.bf16.mxu0 %v1365
    %1997 = vmatpush2.bf16.msra.mxu0 %v1364
    %1998 = vmatprep.subr.bf16.mxu0 %v1361
    %1999 = vmatpush2.bf16.msra.mxu0 %v1360
    %2000 = vmatprep.mubr.bf16.mxu0 %v149
    %2001 = vmatmul.mubr.bf16.gmra.mxu0 %v148
    %v2002 = vpop.f32.mrf.mxu0
    %v2003 = vadd.f32 %v1960, %v2002
    %v2004 = vpop.f32.mrf.mxu0
    %v2005 = vadd.f32 %v1962, %v2004
    %v2006 = vpop.f32.mrf.mxu0
    %v2007 = vadd.f32 %v1964, %v2006
    %v2008 = vpop.f32.mrf.mxu0
    %v2009 = vadd.f32 %v1966, %v2008
    %2010 = vdwg.mxu0
    %2011 = vmatprep.subr.bf16.mxu0 %v1421
    %2012 = vmatpush1.bf16.msra.mxu0 %v1420
    %2013 = vmatprep.subr.bf16.mxu0 %v1417
    %2014 = vmatpush1.bf16.msra.mxu0 %v1416
    %2015 = vmatprep.subr.bf16.mxu0 %v1413
    %2016 = vmatpush1.bf16.msra.mxu0 %v1412
    %2017 = vmatprep.subr.bf16.mxu0 %v1409
    %2018 = vmatpush1.bf16.msra.mxu0 %v1408
    %2019 = vmatprep.subr.bf16.mxu0 %v1405
    %2020 = vmatpush1.bf16.msra.mxu0 %v1404
    %2021 = vmatprep.subr.bf16.mxu0 %v1401
    %2022 = vmatpush1.bf16.msra.mxu0 %v1400
    %2023 = vmatprep.subr.bf16.mxu0 %v1397
    %2024 = vmatpush1.bf16.msra.mxu0 %v1396
    %2025 = vmatprep.subr.bf16.mxu0 %v1393
    %2026 = vmatpush1.bf16.msra.mxu0 %v1392
    %2027 = vmatprep.subr.bf16.mxu0 %v1453
    %2028 = vmatpush2.bf16.msra.mxu0 %v1452
    %2029 = vmatprep.subr.bf16.mxu0 %v1449
    %2030 = vmatpush2.bf16.msra.mxu0 %v1448
    %2031 = vmatprep.subr.bf16.mxu0 %v1445
    %2032 = vmatpush2.bf16.msra.mxu0 %v1444
    %2033 = vmatprep.subr.bf16.mxu0 %v1441
    %2034 = vmatpush2.bf16.msra.mxu0 %v1440
    %2035 = vmatprep.subr.bf16.mxu0 %v1437
    %2036 = vmatpush2.bf16.msra.mxu0 %v1436
    %2037 = vmatprep.subr.bf16.mxu0 %v1433
    %2038 = vmatpush2.bf16.msra.mxu0 %v1432
    %2039 = vmatprep.subr.bf16.mxu0 %v1429
    %2040 = vmatpush2.bf16.msra.mxu0 %v1428
    %2041 = vmatprep.subr.bf16.mxu0 %v1425
    %2042 = vmatpush2.bf16.msra.mxu0 %v1424
    %2043 = vmatprep.mubr.bf16.mxu0 %v151
    %2044 = vmatmul.mubr.bf16.gmra.mxu0 %v150
    %v2045 = vpop.f32.mrf.mxu0
    %v2046 = vadd.f32 %v2003, %v2045
    %v2047 = vpop.f32.mrf.mxu0
    %v2048 = vadd.f32 %v2005, %v2047
    %v2049 = vpop.f32.mrf.mxu0
    %v2050 = vadd.f32 %v2007, %v2049
    %v2051 = vpop.f32.mrf.mxu0
    %v2052 = vadd.f32 %v2009, %v2051
    %2053 = vdwg.mxu0
    %v2054 = vmul.f32 %v1874, 0.5
    %v2055 = vmul.f32 %v1876, 0.5
    %v2056 = vmul.f32 %v2046, 0.5
    %v2057 = vmul.f32 %v2048, 0.5
    %v2058 = vmul.f32 %v1878, 0.5
    %v2059 = vmul.f32 %v1880, 0.5
    %v2060 = vmul.f32 %v2050, 0.5
    %v2061 = vmul.f32 %v2052, 0.5
    %v2062 = vmul.f32 %v1874, 0.70710677
    %v2063 = vmul.f32 %v1876, 0.70710677
    %v2064 = vmul.f32 %v2046, 0.70710677
    %v2065 = vmul.f32 %v2048, 0.70710677
    %v2066 = vmul.f32 %v1878, 0.70710677
    %v2067 = vmul.f32 %v1880, 0.70710677
    %v2068 = vmul.f32 %v2050, 0.70710677
    %v2069 = vmul.f32 %v2052, 0.70710677
    %v2070 = verf.f32.pop %v2062
    %v2071 = verf.f32.pop %v2063
    %v2072 = verf.f32.pop %v2064
    %v2073 = verf.f32.pop %v2065
    %v2074 = verf.f32.pop %v2066
    %v2075 = verf.f32.pop %v2067
    %v2076 = verf.f32.pop %v2068
    %v2077 = verf.f32.pop %v2069
    %v2078 = vadd.f32 %v2070, 1.0
    %v2079 = vadd.f32 %v2071, 1.0
    %v2080 = vadd.f32 %v2072, 1.0
    %v2081 = vadd.f32 %v2073, 1.0
    %v2082 = vadd.f32 %v2074, 1.0
    %v2083 = vadd.f32 %v2075, 1.0
    %v2084 = vadd.f32 %v2076, 1.0
    %v2085 = vadd.f32 %v2077, 1.0
    %v2086 = vmul.f32 %v2054, %v2078
    %v2087 = vmul.f32 %v2055, %v2079
    %v2088 = vmul.f32 %v2056, %v2080
    %v2089 = vmul.f32 %v2057, %v2081
    %v2090 = vmul.f32 %v2058, %v2082
    %v2091 = vmul.f32 %v2059, %v2083
    %v2092 = vmul.f32 %v2060, %v2084
    %v2093 = vmul.f32 %v2061, %v2085
    %v2094 = vpack.c.bf16 %v2090, %v2086
    %v2095 = vpack.c.bf16 %v2091, %v2087
    %v2096 = vpack.c.bf16 %v2092, %v2088
    %v2097 = vpack.c.bf16 %v2093, %v2089
    %v2098 = vld [vmem:[#allocation10] sm:$0xff]
    %v2099 = vld [vmem:[#allocation10 + $0x8] sm:$0xff]
    %v2100 = vld [vmem:[#allocation10 + $0x10] sm:$0xff]
    %v2101 = vld [vmem:[#allocation10 + $0x18] sm:$0xff]
    %v2102 = vld [vmem:[#allocation10 + $0x20] sm:$0xff]
    %v2103 = vld [vmem:[#allocation10 + $0x28] sm:$0xff]
    %v2104 = vld [vmem:[#allocation10 + $0x30] sm:$0xff]
    %v2105 = vld [vmem:[#allocation10 + $0x38] sm:$0xff]
    %v2106 = vld [vmem:[#allocation10 + $0x40] sm:$0xff]
    %v2107 = vld [vmem:[#allocation10 + $0x48] sm:$0xff]
    %v2108 = vld [vmem:[#allocation10 + $0x50] sm:$0xff]
    %v2109 = vld [vmem:[#allocation10 + $0x58] sm:$0xff]
    %v2110 = vld [vmem:[#allocation10 + $0x60] sm:$0xff]
    %v2111 = vld [vmem:[#allocation10 + $0x68] sm:$0xff]
    %v2112 = vld [vmem:[#allocation10 + $0x70] sm:$0xff]
    %v2113 = vld [vmem:[#allocation10 + $0x78] sm:$0xff]
    %v2114 = vld [vmem:[#allocation10 + $0x80] sm:$0xff]
    %v2115 = vld [vmem:[#allocation10 + $0x88] sm:$0xff]
    %v2116 = vld [vmem:[#allocation10 + $0x90] sm:$0xff]
    %v2117 = vld [vmem:[#allocation10 + $0x98] sm:$0xff]
    %v2118 = vld [vmem:[#allocation10 + $0xa0] sm:$0xff]
    %v2119 = vld [vmem:[#allocation10 + $0xa8] sm:$0xff]
    %v2120 = vld [vmem:[#allocation10 + $0xb0] sm:$0xff]
    %v2121 = vld [vmem:[#allocation10 + $0xb8] sm:$0xff]
    %v2122 = vld [vmem:[#allocation10 + $0xc0] sm:$0xff]
    %v2123 = vld [vmem:[#allocation10 + $0xc8] sm:$0xff]
    %v2124 = vld [vmem:[#allocation10 + $0xd0] sm:$0xff]
    %v2125 = vld [vmem:[#allocation10 + $0xd8] sm:$0xff]
    %v2126 = vld [vmem:[#allocation10 + $0xe0] sm:$0xff]
    %v2127 = vld [vmem:[#allocation10 + $0xe8] sm:$0xff]
    %v2128 = vld [vmem:[#allocation10 + $0xf0] sm:$0xff]
    %v2129 = vld [vmem:[#allocation10 + $0xf8] sm:$0xff]
    %v2130 = vld [vmem:[#allocation10 + $0x100] sm:$0xff]
    %v2131 = vld [vmem:[#allocation10 + $0x108] sm:$0xff]
    %v2132 = vld [vmem:[#allocation10 + $0x110] sm:$0xff]
    %v2133 = vld [vmem:[#allocation10 + $0x118] sm:$0xff]
    %v2134 = vld [vmem:[#allocation10 + $0x120] sm:$0xff]
    %v2135 = vld [vmem:[#allocation10 + $0x128] sm:$0xff]
    %v2136 = vld [vmem:[#allocation10 + $0x130] sm:$0xff]
    %v2137 = vld [vmem:[#allocation10 + $0x138] sm:$0xff]
    %v2138 = vld [vmem:[#allocation10 + $0x140] sm:$0xff]
    %v2139 = vld [vmem:[#allocation10 + $0x148] sm:$0xff]
    %v2140 = vld [vmem:[#allocation10 + $0x150] sm:$0xff]
    %v2141 = vld [vmem:[#allocation10 + $0x158] sm:$0xff]
    %v2142 = vld [vmem:[#allocation10 + $0x160] sm:$0xff]
    %v2143 = vld [vmem:[#allocation10 + $0x168] sm:$0xff]
    %v2144 = vld [vmem:[#allocation10 + $0x170] sm:$0xff]
    %v2145 = vld [vmem:[#allocation10 + $0x178] sm:$0xff]
    %v2146 = vld [vmem:[#allocation10 + $0x180] sm:$0xff]
    %v2147 = vld [vmem:[#allocation10 + $0x188] sm:$0xff]
    %v2148 = vld [vmem:[#allocation10 + $0x190] sm:$0xff]
    %v2149 = vld [vmem:[#allocation10 + $0x198] sm:$0xff]
    %v2150 = vld [vmem:[#allocation10 + $0x1a0] sm:$0xff]
    %v2151 = vld [vmem:[#allocation10 + $0x1a8] sm:$0xff]
    %v2152 = vld [vmem:[#allocation10 + $0x1b0] sm:$0xff]
    %v2153 = vld [vmem:[#allocation10 + $0x1b8] sm:$0xff]
    %v2154 = vld [vmem:[#allocation10 + $0x1c0] sm:$0xff]
    %v2155 = vld [vmem:[#allocation10 + $0x1c8] sm:$0xff]
    %v2156 = vld [vmem:[#allocation10 + $0x1d0] sm:$0xff]
    %v2157 = vld [vmem:[#allocation10 + $0x1d8] sm:$0xff]
    %v2158 = vld [vmem:[#allocation10 + $0x1e0] sm:$0xff]
    %v2159 = vld [vmem:[#allocation10 + $0x1e8] sm:$0xff]
    %v2160 = vld [vmem:[#allocation10 + $0x1f0] sm:$0xff]
    %v2161 = vld [vmem:[#allocation10 + $0x1f8] sm:$0xff]
    %v2162 = vld [vmem:[#allocation10 + $0x200] sm:$0xff]
    %v2163 = vld [vmem:[#allocation10 + $0x208] sm:$0xff]
    %v2164 = vld [vmem:[#allocation10 + $0x210] sm:$0xff]
    %v2165 = vld [vmem:[#allocation10 + $0x218] sm:$0xff]
    %v2166 = vld [vmem:[#allocation10 + $0x220] sm:$0xff]
    %v2167 = vld [vmem:[#allocation10 + $0x228] sm:$0xff]
    %v2168 = vld [vmem:[#allocation10 + $0x230] sm:$0xff]
    %v2169 = vld [vmem:[#allocation10 + $0x238] sm:$0xff]
    %v2170 = vld [vmem:[#allocation10 + $0x240] sm:$0xff]
    %v2171 = vld [vmem:[#allocation10 + $0x248] sm:$0xff]
    %v2172 = vld [vmem:[#allocation10 + $0x250] sm:$0xff]
    %v2173 = vld [vmem:[#allocation10 + $0x258] sm:$0xff]
    %v2174 = vld [vmem:[#allocation10 + $0x260] sm:$0xff]
    %v2175 = vld [vmem:[#allocation10 + $0x268] sm:$0xff]
    %v2176 = vld [vmem:[#allocation10 + $0x270] sm:$0xff]
    %v2177 = vld [vmem:[#allocation10 + $0x278] sm:$0xff]
    %v2178 = vld [vmem:[#allocation10 + $0x280] sm:$0xff]
    %v2179 = vld [vmem:[#allocation10 + $0x288] sm:$0xff]
    %v2180 = vld [vmem:[#allocation10 + $0x290] sm:$0xff]
    %v2181 = vld [vmem:[#allocation10 + $0x298] sm:$0xff]
    %v2182 = vld [vmem:[#allocation10 + $0x2a0] sm:$0xff]
    %v2183 = vld [vmem:[#allocation10 + $0x2a8] sm:$0xff]
    %v2184 = vld [vmem:[#allocation10 + $0x2b0] sm:$0xff]
    %v2185 = vld [vmem:[#allocation10 + $0x2b8] sm:$0xff]
    %v2186 = vld [vmem:[#allocation10 + $0x2c0] sm:$0xff]
    %v2187 = vld [vmem:[#allocation10 + $0x2c8] sm:$0xff]
    %v2188 = vld [vmem:[#allocation10 + $0x2d0] sm:$0xff]
    %v2189 = vld [vmem:[#allocation10 + $0x2d8] sm:$0xff]
    %v2190 = vld [vmem:[#allocation10 + $0x2e0] sm:$0xff]
    %v2191 = vld [vmem:[#allocation10 + $0x2e8] sm:$0xff]
    %v2192 = vld [vmem:[#allocation10 + $0x2f0] sm:$0xff]
    %v2193 = vld [vmem:[#allocation10 + $0x2f8] sm:$0xff]
    %v2194 = vld [vmem:[#allocation10 + $0x300] sm:$0xff]
    %v2195 = vld [vmem:[#allocation10 + $0x308] sm:$0xff]
    %v2196 = vld [vmem:[#allocation10 + $0x310] sm:$0xff]
    %v2197 = vld [vmem:[#allocation10 + $0x318] sm:$0xff]
    %v2198 = vld [vmem:[#allocation10 + $0x320] sm:$0xff]
    %v2199 = vld [vmem:[#allocation10 + $0x328] sm:$0xff]
    %v2200 = vld [vmem:[#allocation10 + $0x330] sm:$0xff]
    %v2201 = vld [vmem:[#allocation10 + $0x338] sm:$0xff]
    %v2202 = vld [vmem:[#allocation10 + $0x340] sm:$0xff]
    %v2203 = vld [vmem:[#allocation10 + $0x348] sm:$0xff]
    %v2204 = vld [vmem:[#allocation10 + $0x350] sm:$0xff]
    %v2205 = vld [vmem:[#allocation10 + $0x358] sm:$0xff]
    %v2206 = vld [vmem:[#allocation10 + $0x360] sm:$0xff]
    %v2207 = vld [vmem:[#allocation10 + $0x368] sm:$0xff]
    %v2208 = vld [vmem:[#allocation10 + $0x370] sm:$0xff]
    %v2209 = vld [vmem:[#allocation10 + $0x378] sm:$0xff]
    %v2210 = vld [vmem:[#allocation10 + $0x380] sm:$0xff]
    %v2211 = vld [vmem:[#allocation10 + $0x388] sm:$0xff]
    %v2212 = vld [vmem:[#allocation10 + $0x390] sm:$0xff]
    %v2213 = vld [vmem:[#allocation10 + $0x398] sm:$0xff]
    %v2214 = vld [vmem:[#allocation10 + $0x3a0] sm:$0xff]
    %v2215 = vld [vmem:[#allocation10 + $0x3a8] sm:$0xff]
    %v2216 = vld [vmem:[#allocation10 + $0x3b0] sm:$0xff]
    %v2217 = vld [vmem:[#allocation10 + $0x3b8] sm:$0xff]
    %v2218 = vld [vmem:[#allocation10 + $0x3c0] sm:$0xff]
    %v2219 = vld [vmem:[#allocation10 + $0x3c8] sm:$0xff]
    %v2220 = vld [vmem:[#allocation10 + $0x3d0] sm:$0xff]
    %v2221 = vld [vmem:[#allocation10 + $0x3d8] sm:$0xff]
    %v2222 = vld [vmem:[#allocation10 + $0x3e0] sm:$0xff]
    %v2223 = vld [vmem:[#allocation10 + $0x3e8] sm:$0xff]
    %v2224 = vld [vmem:[#allocation10 + $0x3f0] sm:$0xff]
    %v2225 = vld [vmem:[#allocation10 + $0x3f8] sm:$0xff]
    %v2226 = vld [vmem:[#allocation10 + $0x400] sm:$0xff]
    %v2227 = vld [vmem:[#allocation10 + $0x408] sm:$0xff]
    %v2228 = vld [vmem:[#allocation10 + $0x410] sm:$0xff]
    %v2229 = vld [vmem:[#allocation10 + $0x418] sm:$0xff]
    %v2230 = vld [vmem:[#allocation10 + $0x420] sm:$0xff]
    %v2231 = vld [vmem:[#allocation10 + $0x428] sm:$0xff]
    %v2232 = vld [vmem:[#allocation10 + $0x430] sm:$0xff]
    %v2233 = vld [vmem:[#allocation10 + $0x438] sm:$0xff]
    %v2234 = vld [vmem:[#allocation10 + $0x440] sm:$0xff]
    %v2235 = vld [vmem:[#allocation10 + $0x448] sm:$0xff]
    %v2236 = vld [vmem:[#allocation10 + $0x450] sm:$0xff]
    %v2237 = vld [vmem:[#allocation10 + $0x458] sm:$0xff]
    %v2238 = vld [vmem:[#allocation10 + $0x460] sm:$0xff]
    %v2239 = vld [vmem:[#allocation10 + $0x468] sm:$0xff]
    %v2240 = vld [vmem:[#allocation10 + $0x470] sm:$0xff]
    %v2241 = vld [vmem:[#allocation10 + $0x478] sm:$0xff]
    %v2242 = vld [vmem:[#allocation10 + $0x480] sm:$0xff]
    %v2243 = vld [vmem:[#allocation10 + $0x488] sm:$0xff]
    %v2244 = vld [vmem:[#allocation10 + $0x490] sm:$0xff]
    %v2245 = vld [vmem:[#allocation10 + $0x498] sm:$0xff]
    %v2246 = vld [vmem:[#allocation10 + $0x4a0] sm:$0xff]
    %v2247 = vld [vmem:[#allocation10 + $0x4a8] sm:$0xff]
    %v2248 = vld [vmem:[#allocation10 + $0x4b0] sm:$0xff]
    %v2249 = vld [vmem:[#allocation10 + $0x4b8] sm:$0xff]
    %v2250 = vld [vmem:[#allocation10 + $0x4c0] sm:$0xff]
    %v2251 = vld [vmem:[#allocation10 + $0x4c8] sm:$0xff]
    %v2252 = vld [vmem:[#allocation10 + $0x4d0] sm:$0xff]
    %v2253 = vld [vmem:[#allocation10 + $0x4d8] sm:$0xff]
    %v2254 = vld [vmem:[#allocation10 + $0x4e0] sm:$0xff]
    %v2255 = vld [vmem:[#allocation10 + $0x4e8] sm:$0xff]
    %v2256 = vld [vmem:[#allocation10 + $0x4f0] sm:$0xff]
    %v2257 = vld [vmem:[#allocation10 + $0x4f8] sm:$0xff]
    %v2258 = vld [vmem:[#allocation10 + $0x500] sm:$0xff]
    %v2259 = vld [vmem:[#allocation10 + $0x508] sm:$0xff]
    %v2260 = vld [vmem:[#allocation10 + $0x510] sm:$0xff]
    %v2261 = vld [vmem:[#allocation10 + $0x518] sm:$0xff]
    %v2262 = vld [vmem:[#allocation10 + $0x520] sm:$0xff]
    %v2263 = vld [vmem:[#allocation10 + $0x528] sm:$0xff]
    %v2264 = vld [vmem:[#allocation10 + $0x530] sm:$0xff]
    %v2265 = vld [vmem:[#allocation10 + $0x538] sm:$0xff]
    %v2266 = vld [vmem:[#allocation10 + $0x540] sm:$0xff]
    %v2267 = vld [vmem:[#allocation10 + $0x548] sm:$0xff]
    %v2268 = vld [vmem:[#allocation10 + $0x550] sm:$0xff]
    %v2269 = vld [vmem:[#allocation10 + $0x558] sm:$0xff]
    %v2270 = vld [vmem:[#allocation10 + $0x560] sm:$0xff]
    %v2271 = vld [vmem:[#allocation10 + $0x568] sm:$0xff]
    %v2272 = vld [vmem:[#allocation10 + $0x570] sm:$0xff]
    %v2273 = vld [vmem:[#allocation10 + $0x578] sm:$0xff]
    %v2274 = vld [vmem:[#allocation10 + $0x580] sm:$0xff]
    %v2275 = vld [vmem:[#allocation10 + $0x588] sm:$0xff]
    %v2276 = vld [vmem:[#allocation10 + $0x590] sm:$0xff]
    %v2277 = vld [vmem:[#allocation10 + $0x598] sm:$0xff]
    %v2278 = vld [vmem:[#allocation10 + $0x5a0] sm:$0xff]
    %v2279 = vld [vmem:[#allocation10 + $0x5a8] sm:$0xff]
    %v2280 = vld [vmem:[#allocation10 + $0x5b0] sm:$0xff]
    %v2281 = vld [vmem:[#allocation10 + $0x5b8] sm:$0xff]
    %v2282 = vld [vmem:[#allocation10 + $0x5c0] sm:$0xff]
    %v2283 = vld [vmem:[#allocation10 + $0x5c8] sm:$0xff]
    %v2284 = vld [vmem:[#allocation10 + $0x5d0] sm:$0xff]
    %v2285 = vld [vmem:[#allocation10 + $0x5d8] sm:$0xff]
    %v2286 = vld [vmem:[#allocation10 + $0x5e0] sm:$0xff]
    %v2287 = vld [vmem:[#allocation10 + $0x5e8] sm:$0xff]
    %v2288 = vld [vmem:[#allocation10 + $0x5f0] sm:$0xff]
    %v2289 = vld [vmem:[#allocation10 + $0x5f8] sm:$0xff]
    %v2290 = vld [vmem:[#allocation10 + $0x600] sm:$0xff]
    %v2291 = vld [vmem:[#allocation10 + $0x608] sm:$0xff]
    %v2292 = vld [vmem:[#allocation10 + $0x610] sm:$0xff]
    %v2293 = vld [vmem:[#allocation10 + $0x618] sm:$0xff]
    %v2294 = vld [vmem:[#allocation10 + $0x620] sm:$0xff]
    %v2295 = vld [vmem:[#allocation10 + $0x628] sm:$0xff]
    %v2296 = vld [vmem:[#allocation10 + $0x630] sm:$0xff]
    %v2297 = vld [vmem:[#allocation10 + $0x638] sm:$0xff]
    %v2298 = vld [vmem:[#allocation10 + $0x640] sm:$0xff]
    %v2299 = vld [vmem:[#allocation10 + $0x648] sm:$0xff]
    %v2300 = vld [vmem:[#allocation10 + $0x650] sm:$0xff]
    %v2301 = vld [vmem:[#allocation10 + $0x658] sm:$0xff]
    %v2302 = vld [vmem:[#allocation10 + $0x660] sm:$0xff]
    %v2303 = vld [vmem:[#allocation10 + $0x668] sm:$0xff]
    %v2304 = vld [vmem:[#allocation10 + $0x670] sm:$0xff]
    %v2305 = vld [vmem:[#allocation10 + $0x678] sm:$0xff]
    %v2306 = vld [vmem:[#allocation10 + $0x680] sm:$0xff]
    %v2307 = vld [vmem:[#allocation10 + $0x688] sm:$0xff]
    %v2308 = vld [vmem:[#allocation10 + $0x690] sm:$0xff]
    %v2309 = vld [vmem:[#allocation10 + $0x698] sm:$0xff]
    %v2310 = vld [vmem:[#allocation10 + $0x6a0] sm:$0xff]
    %v2311 = vld [vmem:[#allocation10 + $0x6a8] sm:$0xff]
    %v2312 = vld [vmem:[#allocation10 + $0x6b0] sm:$0xff]
    %v2313 = vld [vmem:[#allocation10 + $0x6b8] sm:$0xff]
    %v2314 = vld [vmem:[#allocation10 + $0x6c0] sm:$0xff]
    %v2315 = vld [vmem:[#allocation10 + $0x6c8] sm:$0xff]
    %v2316 = vld [vmem:[#allocation10 + $0x6d0] sm:$0xff]
    %v2317 = vld [vmem:[#allocation10 + $0x6d8] sm:$0xff]
    %v2318 = vld [vmem:[#allocation10 + $0x6e0] sm:$0xff]
    %v2319 = vld [vmem:[#allocation10 + $0x6e8] sm:$0xff]
    %v2320 = vld [vmem:[#allocation10 + $0x6f0] sm:$0xff]
    %v2321 = vld [vmem:[#allocation10 + $0x6f8] sm:$0xff]
    %v2322 = vld [vmem:[#allocation10 + $0x700] sm:$0xff]
    %v2323 = vld [vmem:[#allocation10 + $0x708] sm:$0xff]
    %v2324 = vld [vmem:[#allocation10 + $0x710] sm:$0xff]
    %v2325 = vld [vmem:[#allocation10 + $0x718] sm:$0xff]
    %v2326 = vld [vmem:[#allocation10 + $0x720] sm:$0xff]
    %v2327 = vld [vmem:[#allocation10 + $0x728] sm:$0xff]
    %v2328 = vld [vmem:[#allocation10 + $0x730] sm:$0xff]
    %v2329 = vld [vmem:[#allocation10 + $0x738] sm:$0xff]
    %v2330 = vld [vmem:[#allocation10 + $0x740] sm:$0xff]
    %v2331 = vld [vmem:[#allocation10 + $0x748] sm:$0xff]
    %v2332 = vld [vmem:[#allocation10 + $0x750] sm:$0xff]
    %v2333 = vld [vmem:[#allocation10 + $0x758] sm:$0xff]
    %v2334 = vld [vmem:[#allocation10 + $0x760] sm:$0xff]
    %v2335 = vld [vmem:[#allocation10 + $0x768] sm:$0xff]
    %v2336 = vld [vmem:[#allocation10 + $0x770] sm:$0xff]
    %v2337 = vld [vmem:[#allocation10 + $0x778] sm:$0xff]
    %v2338 = vld [vmem:[#allocation10 + $0x780] sm:$0xff]
    %v2339 = vld [vmem:[#allocation10 + $0x788] sm:$0xff]
    %v2340 = vld [vmem:[#allocation10 + $0x790] sm:$0xff]
    %v2341 = vld [vmem:[#allocation10 + $0x798] sm:$0xff]
    %v2342 = vld [vmem:[#allocation10 + $0x7a0] sm:$0xff]
    %v2343 = vld [vmem:[#allocation10 + $0x7a8] sm:$0xff]
    %v2344 = vld [vmem:[#allocation10 + $0x7b0] sm:$0xff]
    %v2345 = vld [vmem:[#allocation10 + $0x7b8] sm:$0xff]
    %v2346 = vld [vmem:[#allocation10 + $0x7c0] sm:$0xff]
    %v2347 = vld [vmem:[#allocation10 + $0x7c8] sm:$0xff]
    %v2348 = vld [vmem:[#allocation10 + $0x7d0] sm:$0xff]
    %v2349 = vld [vmem:[#allocation10 + $0x7d8] sm:$0xff]
    %v2350 = vld [vmem:[#allocation10 + $0x7e0] sm:$0xff]
    %v2351 = vld [vmem:[#allocation10 + $0x7e8] sm:$0xff]
    %v2352 = vld [vmem:[#allocation10 + $0x7f0] sm:$0xff]
    %v2353 = vld [vmem:[#allocation10 + $0x7f8] sm:$0xff]
    %v2354 = vld [vmem:[%s5] sm:$0xff]
    %v2356 = vlaneseq
    %v2357 = vshrl.u32 %v2356, 7
    %v2358 = vsub.s32 0, %v2357
    %v2359 = vrot.slane %v2354, %v2358
    %v2360 = vlaneseq
    %v2361 = vshrl.u32 %v2360, 7
    %v2362 = vsub.s32 1, %v2361
    %v2363 = vrot.slane %v2354, %v2362
    %v2364 = vlaneseq
    %v2365 = vshrl.u32 %v2364, 7
    %v2366 = vsub.s32 2, %v2365
    %v2367 = vrot.slane %v2354, %v2366
    %v2368 = vlaneseq
    %v2369 = vshrl.u32 %v2368, 7
    %v2370 = vsub.s32 3, %v2369
    %v2371 = vrot.slane %v2354, %v2370
    %v2372 = vlaneseq
    %v2373 = vshrl.u32 %v2372, 7
    %v2374 = vsub.s32 4, %v2373
    %v2375 = vrot.slane %v2354, %v2374
    %v2376 = vlaneseq
    %v2377 = vshrl.u32 %v2376, 7
    %v2378 = vsub.s32 5, %v2377
    %v2379 = vrot.slane %v2354, %v2378
    %v2380 = vlaneseq
    %v2381 = vshrl.u32 %v2380, 7
    %v2382 = vsub.s32 6, %v2381
    %v2383 = vrot.slane %v2354, %v2382
    %v2384 = vlaneseq
    %v2385 = vshrl.u32 %v2384, 7
    %v2386 = vsub.s32 7, %v2385
    %v2387 = vrot.slane %v2354, %v2386
    %v2652 = vunpack.c.l.b16 %v2098
    %v2653 = vunpack.c.h.b16 %v2098
    %v2654 = vunpack.c.l.b16 %v2099
    %v2655 = vunpack.c.h.b16 %v2099
    %v2656 = vunpack.c.l.b16 %v2100
    %v2657 = vunpack.c.h.b16 %v2100
    %v2658 = vunpack.c.l.b16 %v2101
    %v2659 = vunpack.c.h.b16 %v2101
    %v2660 = vunpack.c.l.b16 %v2102
    %v2661 = vunpack.c.h.b16 %v2102
    %v2662 = vunpack.c.l.b16 %v2103
    %v2663 = vunpack.c.h.b16 %v2103
    %v2664 = vunpack.c.l.b16 %v2104
    %v2665 = vunpack.c.h.b16 %v2104
    %v2666 = vunpack.c.l.b16 %v2105
    %v2667 = vunpack.c.h.b16 %v2105
    %v2668 = vunpack.c.l.b16 %v2106
    %v2669 = vunpack.c.h.b16 %v2106
    %v2670 = vunpack.c.l.b16 %v2107
    %v2671 = vunpack.c.h.b16 %v2107
    %v2672 = vunpack.c.l.b16 %v2108
    %v2673 = vunpack.c.h.b16 %v2108
    %v2674 = vunpack.c.l.b16 %v2109
    %v2675 = vunpack.c.h.b16 %v2109
    %v2676 = vunpack.c.l.b16 %v2110
    %v2677 = vunpack.c.h.b16 %v2110
    %v2678 = vunpack.c.l.b16 %v2111
    %v2679 = vunpack.c.h.b16 %v2111
    %v2680 = vunpack.c.l.b16 %v2112
    %v2681 = vunpack.c.h.b16 %v2112
    %v2682 = vunpack.c.l.b16 %v2113
    %v2683 = vunpack.c.h.b16 %v2113
    %v2684 = vunpack.c.l.b16 %v2114
    %v2685 = vunpack.c.h.b16 %v2114
    %v2686 = vunpack.c.l.b16 %v2115
    %v2687 = vunpack.c.h.b16 %v2115
    %v2688 = vunpack.c.l.b16 %v2116
    %v2689 = vunpack.c.h.b16 %v2116
    %v2690 = vunpack.c.l.b16 %v2117
    %v2691 = vunpack.c.h.b16 %v2117
    %v2692 = vunpack.c.l.b16 %v2118
    %v2693 = vunpack.c.h.b16 %v2118
    %v2694 = vunpack.c.l.b16 %v2119
    %v2695 = vunpack.c.h.b16 %v2119
    %v2696 = vunpack.c.l.b16 %v2120
    %v2697 = vunpack.c.h.b16 %v2120
    %v2698 = vunpack.c.l.b16 %v2121
    %v2699 = vunpack.c.h.b16 %v2121
    %v2700 = vunpack.c.l.b16 %v2122
    %v2701 = vunpack.c.h.b16 %v2122
    %v2702 = vunpack.c.l.b16 %v2123
    %v2703 = vunpack.c.h.b16 %v2123
    %v2704 = vunpack.c.l.b16 %v2124
    %v2705 = vunpack.c.h.b16 %v2124
    %v2706 = vunpack.c.l.b16 %v2125
    %v2707 = vunpack.c.h.b16 %v2125
    %v2708 = vunpack.c.l.b16 %v2126
    %v2709 = vunpack.c.h.b16 %v2126
    %v2710 = vunpack.c.l.b16 %v2127
    %v2711 = vunpack.c.h.b16 %v2127
    %v2712 = vunpack.c.l.b16 %v2128
    %v2713 = vunpack.c.h.b16 %v2128
    %v2714 = vunpack.c.l.b16 %v2129
    %v2715 = vunpack.c.h.b16 %v2129
    %v2716 = vunpack.c.l.b16 %v2130
    %v2717 = vunpack.c.h.b16 %v2130
    %v2718 = vunpack.c.l.b16 %v2131
    %v2719 = vunpack.c.h.b16 %v2131
    %v2720 = vunpack.c.l.b16 %v2132
    %v2721 = vunpack.c.h.b16 %v2132
    %v2722 = vunpack.c.l.b16 %v2133
    %v2723 = vunpack.c.h.b16 %v2133
    %v2724 = vunpack.c.l.b16 %v2134
    %v2725 = vunpack.c.h.b16 %v2134
    %v2726 = vunpack.c.l.b16 %v2135
    %v2727 = vunpack.c.h.b16 %v2135
    %v2728 = vunpack.c.l.b16 %v2136
    %v2729 = vunpack.c.h.b16 %v2136
    %v2730 = vunpack.c.l.b16 %v2137
    %v2731 = vunpack.c.h.b16 %v2137
    %v2732 = vunpack.c.l.b16 %v2138
    %v2733 = vunpack.c.h.b16 %v2138
    %v2734 = vunpack.c.l.b16 %v2139
    %v2735 = vunpack.c.h.b16 %v2139
    %v2736 = vunpack.c.l.b16 %v2140
    %v2737 = vunpack.c.h.b16 %v2140
    %v2738 = vunpack.c.l.b16 %v2141
    %v2739 = vunpack.c.h.b16 %v2141
    %v2740 = vunpack.c.l.b16 %v2142
    %v2741 = vunpack.c.h.b16 %v2142
    %v2742 = vunpack.c.l.b16 %v2143
    %v2743 = vunpack.c.h.b16 %v2143
    %v2744 = vunpack.c.l.b16 %v2144
    %v2745 = vunpack.c.h.b16 %v2144
    %v2746 = vunpack.c.l.b16 %v2145
    %v2747 = vunpack.c.h.b16 %v2145
    %v2748 = vunpack.c.l.b16 %v2146
    %v2749 = vunpack.c.h.b16 %v2146
    %v2750 = vunpack.c.l.b16 %v2147
    %v2751 = vunpack.c.h.b16 %v2147
    %v2752 = vunpack.c.l.b16 %v2148
    %v2753 = vunpack.c.h.b16 %v2148
    %v2754 = vunpack.c.l.b16 %v2149
    %v2755 = vunpack.c.h.b16 %v2149
    %v2756 = vunpack.c.l.b16 %v2150
    %v2757 = vunpack.c.h.b16 %v2150
    %v2758 = vunpack.c.l.b16 %v2151
    %v2759 = vunpack.c.h.b16 %v2151
    %v2760 = vunpack.c.l.b16 %v2152
    %v2761 = vunpack.c.h.b16 %v2152
    %v2762 = vunpack.c.l.b16 %v2153
    %v2763 = vunpack.c.h.b16 %v2153
    %v2764 = vunpack.c.l.b16 %v2154
    %v2765 = vunpack.c.h.b16 %v2154
    %v2766 = vunpack.c.l.b16 %v2155
    %v2767 = vunpack.c.h.b16 %v2155
    %v2768 = vunpack.c.l.b16 %v2156
    %v2769 = vunpack.c.h.b16 %v2156
    %v2770 = vunpack.c.l.b16 %v2157
    %v2771 = vunpack.c.h.b16 %v2157
    %v2772 = vunpack.c.l.b16 %v2158
    %v2773 = vunpack.c.h.b16 %v2158
    %v2774 = vunpack.c.l.b16 %v2159
    %v2775 = vunpack.c.h.b16 %v2159
    %v2776 = vunpack.c.l.b16 %v2160
    %v2777 = vunpack.c.h.b16 %v2160
    %v2778 = vunpack.c.l.b16 %v2161
    %v2779 = vunpack.c.h.b16 %v2161
    %v2780 = vunpack.c.l.b16 %v2162
    %v2781 = vunpack.c.h.b16 %v2162
    %v2782 = vunpack.c.l.b16 %v2163
    %v2783 = vunpack.c.h.b16 %v2163
    %v2784 = vunpack.c.l.b16 %v2164
    %v2785 = vunpack.c.h.b16 %v2164
    %v2786 = vunpack.c.l.b16 %v2165
    %v2787 = vunpack.c.h.b16 %v2165
    %v2788 = vunpack.c.l.b16 %v2166
    %v2789 = vunpack.c.h.b16 %v2166
    %v2790 = vunpack.c.l.b16 %v2167
    %v2791 = vunpack.c.h.b16 %v2167
    %v2792 = vunpack.c.l.b16 %v2168
    %v2793 = vunpack.c.h.b16 %v2168
    %v2794 = vunpack.c.l.b16 %v2169
    %v2795 = vunpack.c.h.b16 %v2169
    %v2796 = vunpack.c.l.b16 %v2170
    %v2797 = vunpack.c.h.b16 %v2170
    %v2798 = vunpack.c.l.b16 %v2171
    %v2799 = vunpack.c.h.b16 %v2171
    %v2800 = vunpack.c.l.b16 %v2172
    %v2801 = vunpack.c.h.b16 %v2172
    %v2802 = vunpack.c.l.b16 %v2173
    %v2803 = vunpack.c.h.b16 %v2173
    %v2804 = vunpack.c.l.b16 %v2174
    %v2805 = vunpack.c.h.b16 %v2174
    %v2806 = vunpack.c.l.b16 %v2175
    %v2807 = vunpack.c.h.b16 %v2175
    %v2808 = vunpack.c.l.b16 %v2176
    %v2809 = vunpack.c.h.b16 %v2176
    %v2810 = vunpack.c.l.b16 %v2177
    %v2811 = vunpack.c.h.b16 %v2177
    %v2812 = vunpack.c.l.b16 %v2178
    %v2813 = vunpack.c.h.b16 %v2178
    %v2814 = vunpack.c.l.b16 %v2179
    %v2815 = vunpack.c.h.b16 %v2179
    %v2816 = vunpack.c.l.b16 %v2180
    %v2817 = vunpack.c.h.b16 %v2180
    %v2818 = vunpack.c.l.b16 %v2181
    %v2819 = vunpack.c.h.b16 %v2181
    %v2820 = vunpack.c.l.b16 %v2182
    %v2821 = vunpack.c.h.b16 %v2182
    %v2822 = vunpack.c.l.b16 %v2183
    %v2823 = vunpack.c.h.b16 %v2183
    %v2824 = vunpack.c.l.b16 %v2184
    %v2825 = vunpack.c.h.b16 %v2184
    %v2826 = vunpack.c.l.b16 %v2185
    %v2827 = vunpack.c.h.b16 %v2185
    %v2828 = vunpack.c.l.b16 %v2186
    %v2829 = vunpack.c.h.b16 %v2186
    %v2830 = vunpack.c.l.b16 %v2187
    %v2831 = vunpack.c.h.b16 %v2187
    %v2832 = vunpack.c.l.b16 %v2188
    %v2833 = vunpack.c.h.b16 %v2188
    %v2834 = vunpack.c.l.b16 %v2189
    %v2835 = vunpack.c.h.b16 %v2189
    %v2836 = vunpack.c.l.b16 %v2190
    %v2837 = vunpack.c.h.b16 %v2190
    %v2838 = vunpack.c.l.b16 %v2191
    %v2839 = vunpack.c.h.b16 %v2191
    %v2840 = vunpack.c.l.b16 %v2192
    %v2841 = vunpack.c.h.b16 %v2192
    %v2842 = vunpack.c.l.b16 %v2193
    %v2843 = vunpack.c.h.b16 %v2193
    %v2844 = vunpack.c.l.b16 %v2194
    %v2845 = vunpack.c.h.b16 %v2194
    %v2846 = vunpack.c.l.b16 %v2195
    %v2847 = vunpack.c.h.b16 %v2195
    %v2848 = vunpack.c.l.b16 %v2196
    %v2849 = vunpack.c.h.b16 %v2196
    %v2850 = vunpack.c.l.b16 %v2197
    %v2851 = vunpack.c.h.b16 %v2197
    %v2852 = vunpack.c.l.b16 %v2198
    %v2853 = vunpack.c.h.b16 %v2198
    %v2854 = vunpack.c.l.b16 %v2199
    %v2855 = vunpack.c.h.b16 %v2199
    %v2856 = vunpack.c.l.b16 %v2200
    %v2857 = vunpack.c.h.b16 %v2200
    %v2858 = vunpack.c.l.b16 %v2201
    %v2859 = vunpack.c.h.b16 %v2201
    %v2860 = vunpack.c.l.b16 %v2202
    %v2861 = vunpack.c.h.b16 %v2202
    %v2862 = vunpack.c.l.b16 %v2203
    %v2863 = vunpack.c.h.b16 %v2203
    %v2864 = vunpack.c.l.b16 %v2204
    %v2865 = vunpack.c.h.b16 %v2204
    %v2866 = vunpack.c.l.b16 %v2205
    %v2867 = vunpack.c.h.b16 %v2205
    %v2868 = vunpack.c.l.b16 %v2206
    %v2869 = vunpack.c.h.b16 %v2206
    %v2870 = vunpack.c.l.b16 %v2207
    %v2871 = vunpack.c.h.b16 %v2207
    %v2872 = vunpack.c.l.b16 %v2208
    %v2873 = vunpack.c.h.b16 %v2208
    %v2874 = vunpack.c.l.b16 %v2209
    %v2875 = vunpack.c.h.b16 %v2209
    %v2876 = vunpack.c.l.b16 %v2210
    %v2877 = vunpack.c.h.b16 %v2210
    %v2878 = vunpack.c.l.b16 %v2211
    %v2879 = vunpack.c.h.b16 %v2211
    %v2880 = vunpack.c.l.b16 %v2212
    %v2881 = vunpack.c.h.b16 %v2212
    %v2882 = vunpack.c.l.b16 %v2213
    %v2883 = vunpack.c.h.b16 %v2213
    %v2884 = vunpack.c.l.b16 %v2214
    %v2885 = vunpack.c.h.b16 %v2214
    %v2886 = vunpack.c.l.b16 %v2215
    %v2887 = vunpack.c.h.b16 %v2215
    %v2888 = vunpack.c.l.b16 %v2216
    %v2889 = vunpack.c.h.b16 %v2216
    %v2890 = vunpack.c.l.b16 %v2217
    %v2891 = vunpack.c.h.b16 %v2217
    %v2892 = vunpack.c.l.b16 %v2218
    %v2893 = vunpack.c.h.b16 %v2218
    %v2894 = vunpack.c.l.b16 %v2219
    %v2895 = vunpack.c.h.b16 %v2219
    %v2896 = vunpack.c.l.b16 %v2220
    %v2897 = vunpack.c.h.b16 %v2220
    %v2898 = vunpack.c.l.b16 %v2221
    %v2899 = vunpack.c.h.b16 %v2221
    %v2900 = vunpack.c.l.b16 %v2222
    %v2901 = vunpack.c.h.b16 %v2222
    %v2902 = vunpack.c.l.b16 %v2223
    %v2903 = vunpack.c.h.b16 %v2223
    %v2904 = vunpack.c.l.b16 %v2224
    %v2905 = vunpack.c.h.b16 %v2224
    %v2906 = vunpack.c.l.b16 %v2225
    %v2907 = vunpack.c.h.b16 %v2225
    %v2908 = vunpack.c.l.b16 %v2226
    %v2909 = vunpack.c.h.b16 %v2226
    %v2910 = vunpack.c.l.b16 %v2227
    %v2911 = vunpack.c.h.b16 %v2227
    %v2912 = vunpack.c.l.b16 %v2228
    %v2913 = vunpack.c.h.b16 %v2228
    %v2914 = vunpack.c.l.b16 %v2229
    %v2915 = vunpack.c.h.b16 %v2229
    %v2916 = vunpack.c.l.b16 %v2230
    %v2917 = vunpack.c.h.b16 %v2230
    %v2918 = vunpack.c.l.b16 %v2231
    %v2919 = vunpack.c.h.b16 %v2231
    %v2920 = vunpack.c.l.b16 %v2232
    %v2921 = vunpack.c.h.b16 %v2232
    %v2922 = vunpack.c.l.b16 %v2233
    %v2923 = vunpack.c.h.b16 %v2233
    %v2924 = vunpack.c.l.b16 %v2234
    %v2925 = vunpack.c.h.b16 %v2234
    %v2926 = vunpack.c.l.b16 %v2235
    %v2927 = vunpack.c.h.b16 %v2235
    %v2928 = vunpack.c.l.b16 %v2236
    %v2929 = vunpack.c.h.b16 %v2236
    %v2930 = vunpack.c.l.b16 %v2237
    %v2931 = vunpack.c.h.b16 %v2237
    %v2932 = vunpack.c.l.b16 %v2238
    %v2933 = vunpack.c.h.b16 %v2238
    %v2934 = vunpack.c.l.b16 %v2239
    %v2935 = vunpack.c.h.b16 %v2239
    %v2936 = vunpack.c.l.b16 %v2240
    %v2937 = vunpack.c.h.b16 %v2240
    %v2938 = vunpack.c.l.b16 %v2241
    %v2939 = vunpack.c.h.b16 %v2241
    %v2940 = vunpack.c.l.b16 %v2242
    %v2941 = vunpack.c.h.b16 %v2242
    %v2942 = vunpack.c.l.b16 %v2243
    %v2943 = vunpack.c.h.b16 %v2243
    %v2944 = vunpack.c.l.b16 %v2244
    %v2945 = vunpack.c.h.b16 %v2244
    %v2946 = vunpack.c.l.b16 %v2245
    %v2947 = vunpack.c.h.b16 %v2245
    %v2948 = vunpack.c.l.b16 %v2246
    %v2949 = vunpack.c.h.b16 %v2246
    %v2950 = vunpack.c.l.b16 %v2247
    %v2951 = vunpack.c.h.b16 %v2247
    %v2952 = vunpack.c.l.b16 %v2248
    %v2953 = vunpack.c.h.b16 %v2248
    %v2954 = vunpack.c.l.b16 %v2249
    %v2955 = vunpack.c.h.b16 %v2249
    %v2956 = vunpack.c.l.b16 %v2250
    %v2957 = vunpack.c.h.b16 %v2250
    %v2958 = vunpack.c.l.b16 %v2251
    %v2959 = vunpack.c.h.b16 %v2251
    %v2960 = vunpack.c.l.b16 %v2252
    %v2961 = vunpack.c.h.b16 %v2252
    %v2962 = vunpack.c.l.b16 %v2253
    %v2963 = vunpack.c.h.b16 %v2253
    %v2964 = vunpack.c.l.b16 %v2254
    %v2965 = vunpack.c.h.b16 %v2254
    %v2966 = vunpack.c.l.b16 %v2255
    %v2967 = vunpack.c.h.b16 %v2255
    %v2968 = vunpack.c.l.b16 %v2256
    %v2969 = vunpack.c.h.b16 %v2256
    %v2970 = vunpack.c.l.b16 %v2257
    %v2971 = vunpack.c.h.b16 %v2257
    %v2972 = vunpack.c.l.b16 %v2258
    %v2973 = vunpack.c.h.b16 %v2258
    %v2974 = vunpack.c.l.b16 %v2259
    %v2975 = vunpack.c.h.b16 %v2259
    %v2976 = vunpack.c.l.b16 %v2260
    %v2977 = vunpack.c.h.b16 %v2260
    %v2978 = vunpack.c.l.b16 %v2261
    %v2979 = vunpack.c.h.b16 %v2261
    %v2980 = vunpack.c.l.b16 %v2262
    %v2981 = vunpack.c.h.b16 %v2262
    %v2982 = vunpack.c.l.b16 %v2263
    %v2983 = vunpack.c.h.b16 %v2263
    %v2984 = vunpack.c.l.b16 %v2264
    %v2985 = vunpack.c.h.b16 %v2264
    %v2986 = vunpack.c.l.b16 %v2265
    %v2987 = vunpack.c.h.b16 %v2265
    %v2988 = vunpack.c.l.b16 %v2266
    %v2989 = vunpack.c.h.b16 %v2266
    %v2990 = vunpack.c.l.b16 %v2267
    %v2991 = vunpack.c.h.b16 %v2267
    %v2992 = vunpack.c.l.b16 %v2268
    %v2993 = vunpack.c.h.b16 %v2268
    %v2994 = vunpack.c.l.b16 %v2269
    %v2995 = vunpack.c.h.b16 %v2269
    %v2996 = vunpack.c.l.b16 %v2270
    %v2997 = vunpack.c.h.b16 %v2270
    %v2998 = vunpack.c.l.b16 %v2271
    %v2999 = vunpack.c.h.b16 %v2271
    %v3000 = vunpack.c.l.b16 %v2272
    %v3001 = vunpack.c.h.b16 %v2272
    %v3002 = vunpack.c.l.b16 %v2273
    %v3003 = vunpack.c.h.b16 %v2273
    %v3004 = vunpack.c.l.b16 %v2274
    %v3005 = vunpack.c.h.b16 %v2274
    %v3006 = vunpack.c.l.b16 %v2275
    %v3007 = vunpack.c.h.b16 %v2275
    %v3008 = vunpack.c.l.b16 %v2276
    %v3009 = vunpack.c.h.b16 %v2276
    %v3010 = vunpack.c.l.b16 %v2277
    %v3011 = vunpack.c.h.b16 %v2277
    %v3012 = vunpack.c.l.b16 %v2278
    %v3013 = vunpack.c.h.b16 %v2278
    %v3014 = vunpack.c.l.b16 %v2279
    %v3015 = vunpack.c.h.b16 %v2279
    %v3016 = vunpack.c.l.b16 %v2280
    %v3017 = vunpack.c.h.b16 %v2280
    %v3018 = vunpack.c.l.b16 %v2281
    %v3019 = vunpack.c.h.b16 %v2281
    %v3020 = vunpack.c.l.b16 %v2282
    %v3021 = vunpack.c.h.b16 %v2282
    %v3022 = vunpack.c.l.b16 %v2283
    %v3023 = vunpack.c.h.b16 %v2283
    %v3024 = vunpack.c.l.b16 %v2284
    %v3025 = vunpack.c.h.b16 %v2284
    %v3026 = vunpack.c.l.b16 %v2285
    %v3027 = vunpack.c.h.b16 %v2285
    %v3028 = vunpack.c.l.b16 %v2286
    %v3029 = vunpack.c.h.b16 %v2286
    %v3030 = vunpack.c.l.b16 %v2287
    %v3031 = vunpack.c.h.b16 %v2287
    %v3032 = vunpack.c.l.b16 %v2288
    %v3033 = vunpack.c.h.b16 %v2288
    %v3034 = vunpack.c.l.b16 %v2289
    %v3035 = vunpack.c.h.b16 %v2289
    %v3036 = vunpack.c.l.b16 %v2290
    %v3037 = vunpack.c.h.b16 %v2290
    %v3038 = vunpack.c.l.b16 %v2291
    %v3039 = vunpack.c.h.b16 %v2291
    %v3040 = vunpack.c.l.b16 %v2292
    %v3041 = vunpack.c.h.b16 %v2292
    %v3042 = vunpack.c.l.b16 %v2293
    %v3043 = vunpack.c.h.b16 %v2293
    %v3044 = vunpack.c.l.b16 %v2294
    %v3045 = vunpack.c.h.b16 %v2294
    %v3046 = vunpack.c.l.b16 %v2295
    %v3047 = vunpack.c.h.b16 %v2295
    %v3048 = vunpack.c.l.b16 %v2296
    %v3049 = vunpack.c.h.b16 %v2296
    %v3050 = vunpack.c.l.b16 %v2297
    %v3051 = vunpack.c.h.b16 %v2297
    %v3052 = vunpack.c.l.b16 %v2298
    %v3053 = vunpack.c.h.b16 %v2298
    %v3054 = vunpack.c.l.b16 %v2299
    %v3055 = vunpack.c.h.b16 %v2299
    %v3056 = vunpack.c.l.b16 %v2300
    %v3057 = vunpack.c.h.b16 %v2300
    %v3058 = vunpack.c.l.b16 %v2301
    %v3059 = vunpack.c.h.b16 %v2301
    %v3060 = vunpack.c.l.b16 %v2302
    %v3061 = vunpack.c.h.b16 %v2302
    %v3062 = vunpack.c.l.b16 %v2303
    %v3063 = vunpack.c.h.b16 %v2303
    %v3064 = vunpack.c.l.b16 %v2304
    %v3065 = vunpack.c.h.b16 %v2304
    %v3066 = vunpack.c.l.b16 %v2305
    %v3067 = vunpack.c.h.b16 %v2305
    %v3068 = vunpack.c.l.b16 %v2306
    %v3069 = vunpack.c.h.b16 %v2306
    %v3070 = vunpack.c.l.b16 %v2307
    %v3071 = vunpack.c.h.b16 %v2307
    %v3072 = vunpack.c.l.b16 %v2308
    %v3073 = vunpack.c.h.b16 %v2308
    %v3074 = vunpack.c.l.b16 %v2309
    %v3075 = vunpack.c.h.b16 %v2309
    %v3076 = vunpack.c.l.b16 %v2310
    %v3077 = vunpack.c.h.b16 %v2310
    %v3078 = vunpack.c.l.b16 %v2311
    %v3079 = vunpack.c.h.b16 %v2311
    %v3080 = vunpack.c.l.b16 %v2312
    %v3081 = vunpack.c.h.b16 %v2312
    %v3082 = vunpack.c.l.b16 %v2313
    %v3083 = vunpack.c.h.b16 %v2313
    %v3084 = vunpack.c.l.b16 %v2314
    %v3085 = vunpack.c.h.b16 %v2314
    %v3086 = vunpack.c.l.b16 %v2315
    %v3087 = vunpack.c.h.b16 %v2315
    %v3088 = vunpack.c.l.b16 %v2316
    %v3089 = vunpack.c.h.b16 %v2316
    %v3090 = vunpack.c.l.b16 %v2317
    %v3091 = vunpack.c.h.b16 %v2317
    %v3092 = vunpack.c.l.b16 %v2318
    %v3093 = vunpack.c.h.b16 %v2318
    %v3094 = vunpack.c.l.b16 %v2319
    %v3095 = vunpack.c.h.b16 %v2319
    %v3096 = vunpack.c.l.b16 %v2320
    %v3097 = vunpack.c.h.b16 %v2320
    %v3098 = vunpack.c.l.b16 %v2321
    %v3099 = vunpack.c.h.b16 %v2321
    %v3100 = vunpack.c.l.b16 %v2322
    %v3101 = vunpack.c.h.b16 %v2322
    %v3102 = vunpack.c.l.b16 %v2323
    %v3103 = vunpack.c.h.b16 %v2323
    %v3104 = vunpack.c.l.b16 %v2324
    %v3105 = vunpack.c.h.b16 %v2324
    %v3106 = vunpack.c.l.b16 %v2325
    %v3107 = vunpack.c.h.b16 %v2325
    %v3108 = vunpack.c.l.b16 %v2326
    %v3109 = vunpack.c.h.b16 %v2326
    %v3110 = vunpack.c.l.b16 %v2327
    %v3111 = vunpack.c.h.b16 %v2327
    %v3112 = vunpack.c.l.b16 %v2328
    %v3113 = vunpack.c.h.b16 %v2328
    %v3114 = vunpack.c.l.b16 %v2329
    %v3115 = vunpack.c.h.b16 %v2329
    %v3116 = vunpack.c.l.b16 %v2330
    %v3117 = vunpack.c.h.b16 %v2330
    %v3118 = vunpack.c.l.b16 %v2331
    %v3119 = vunpack.c.h.b16 %v2331
    %v3120 = vunpack.c.l.b16 %v2332
    %v3121 = vunpack.c.h.b16 %v2332
    %v3122 = vunpack.c.l.b16 %v2333
    %v3123 = vunpack.c.h.b16 %v2333
    %v3124 = vunpack.c.l.b16 %v2334
    %v3125 = vunpack.c.h.b16 %v2334
    %v3126 = vunpack.c.l.b16 %v2335
    %v3127 = vunpack.c.h.b16 %v2335
    %v3128 = vunpack.c.l.b16 %v2336
    %v3129 = vunpack.c.h.b16 %v2336
    %v3130 = vunpack.c.l.b16 %v2337
    %v3131 = vunpack.c.h.b16 %v2337
    %v3132 = vunpack.c.l.b16 %v2338
    %v3133 = vunpack.c.h.b16 %v2338
    %v3134 = vunpack.c.l.b16 %v2339
    %v3135 = vunpack.c.h.b16 %v2339
    %v3136 = vunpack.c.l.b16 %v2340
    %v3137 = vunpack.c.h.b16 %v2340
    %v3138 = vunpack.c.l.b16 %v2341
    %v3139 = vunpack.c.h.b16 %v2341
    %v3140 = vunpack.c.l.b16 %v2342
    %v3141 = vunpack.c.h.b16 %v2342
    %v3142 = vunpack.c.l.b16 %v2343
    %v3143 = vunpack.c.h.b16 %v2343
    %v3144 = vunpack.c.l.b16 %v2344
    %v3145 = vunpack.c.h.b16 %v2344
    %v3146 = vunpack.c.l.b16 %v2345
    %v3147 = vunpack.c.h.b16 %v2345
    %v3148 = vunpack.c.l.b16 %v2346
    %v3149 = vunpack.c.h.b16 %v2346
    %v3150 = vunpack.c.l.b16 %v2347
    %v3151 = vunpack.c.h.b16 %v2347
    %v3152 = vunpack.c.l.b16 %v2348
    %v3153 = vunpack.c.h.b16 %v2348
    %v3154 = vunpack.c.l.b16 %v2349
    %v3155 = vunpack.c.h.b16 %v2349
    %v3156 = vunpack.c.l.b16 %v2350
    %v3157 = vunpack.c.h.b16 %v2350
    %v3158 = vunpack.c.l.b16 %v2351
    %v3159 = vunpack.c.h.b16 %v2351
    %v3160 = vunpack.c.l.b16 %v2352
    %v3161 = vunpack.c.h.b16 %v2352
    %v3162 = vunpack.c.l.b16 %v2353
    %v3163 = vunpack.c.h.b16 %v2353
    %v3164 = vpack.c.b16 %v2660, %v2652
    %v3165 = vpack.c.b16 %v2661, %v2653
    %v3166 = vpack.c.b16 %v2662, %v2654
    %v3167 = vpack.c.b16 %v2663, %v2655
    %v3168 = vpack.c.b16 %v2664, %v2656
    %v3169 = vpack.c.b16 %v2665, %v2657
    %v3170 = vpack.c.b16 %v2666, %v2658
    %v3171 = vpack.c.b16 %v2667, %v2659
    %v3172 = vpack.c.b16 %v2676, %v2668
    %v3173 = vpack.c.b16 %v2677, %v2669
    %v3174 = vpack.c.b16 %v2678, %v2670
    %v3175 = vpack.c.b16 %v2679, %v2671
    %v3176 = vpack.c.b16 %v2680, %v2672
    %v3177 = vpack.c.b16 %v2681, %v2673
    %v3178 = vpack.c.b16 %v2682, %v2674
    %v3179 = vpack.c.b16 %v2683, %v2675
    %v3180 = vpack.c.b16 %v2692, %v2684
    %v3181 = vpack.c.b16 %v2693, %v2685
    %v3182 = vpack.c.b16 %v2694, %v2686
    %v3183 = vpack.c.b16 %v2695, %v2687
    %v3184 = vpack.c.b16 %v2696, %v2688
    %v3185 = vpack.c.b16 %v2697, %v2689
    %v3186 = vpack.c.b16 %v2698, %v2690
    %v3187 = vpack.c.b16 %v2699, %v2691
    %v3188 = vpack.c.b16 %v2708, %v2700
    %v3189 = vpack.c.b16 %v2709, %v2701
    %v3190 = vpack.c.b16 %v2710, %v2702
    %v3191 = vpack.c.b16 %v2711, %v2703
    %v3192 = vpack.c.b16 %v2712, %v2704
    %v3193 = vpack.c.b16 %v2713, %v2705
    %v3194 = vpack.c.b16 %v2714, %v2706
    %v3195 = vpack.c.b16 %v2715, %v2707
    %v3196 = vpack.c.b16 %v2724, %v2716
    %v3197 = vpack.c.b16 %v2725, %v2717
    %v3198 = vpack.c.b16 %v2726, %v2718
    %v3199 = vpack.c.b16 %v2727, %v2719
    %v3200 = vpack.c.b16 %v2728, %v2720
    %v3201 = vpack.c.b16 %v2729, %v2721
    %v3202 = vpack.c.b16 %v2730, %v2722
    %v3203 = vpack.c.b16 %v2731, %v2723
    %v3204 = vpack.c.b16 %v2740, %v2732
    %v3205 = vpack.c.b16 %v2741, %v2733
    %v3206 = vpack.c.b16 %v2742, %v2734
    %v3207 = vpack.c.b16 %v2743, %v2735
    %v3208 = vpack.c.b16 %v2744, %v2736
    %v3209 = vpack.c.b16 %v2745, %v2737
    %v3210 = vpack.c.b16 %v2746, %v2738
    %v3211 = vpack.c.b16 %v2747, %v2739
    %v3212 = vpack.c.b16 %v2756, %v2748
    %v3213 = vpack.c.b16 %v2757, %v2749
    %v3214 = vpack.c.b16 %v2758, %v2750
    %v3215 = vpack.c.b16 %v2759, %v2751
    %v3216 = vpack.c.b16 %v2760, %v2752
    %v3217 = vpack.c.b16 %v2761, %v2753
    %v3218 = vpack.c.b16 %v2762, %v2754
    %v3219 = vpack.c.b16 %v2763, %v2755
    %v3220 = vpack.c.b16 %v2772, %v2764
    %v3221 = vpack.c.b16 %v2773, %v2765
    %v3222 = vpack.c.b16 %v2774, %v2766
    %v3223 = vpack.c.b16 %v2775, %v2767
    %v3224 = vpack.c.b16 %v2776, %v2768
    %v3225 = vpack.c.b16 %v2777, %v2769
    %v3226 = vpack.c.b16 %v2778, %v2770
    %v3227 = vpack.c.b16 %v2779, %v2771
    %v3228 = vpack.c.b16 %v2788, %v2780
    %v3229 = vpack.c.b16 %v2789, %v2781
    %v3230 = vpack.c.b16 %v2790, %v2782
    %v3231 = vpack.c.b16 %v2791, %v2783
    %v3232 = vpack.c.b16 %v2792, %v2784
    %v3233 = vpack.c.b16 %v2793, %v2785
    %v3234 = vpack.c.b16 %v2794, %v2786
    %v3235 = vpack.c.b16 %v2795, %v2787
    %v3236 = vpack.c.b16 %v2804, %v2796
    %v3237 = vpack.c.b16 %v2805, %v2797
    %v3238 = vpack.c.b16 %v2806, %v2798
    %v3239 = vpack.c.b16 %v2807, %v2799
    %v3240 = vpack.c.b16 %v2808, %v2800
    %v3241 = vpack.c.b16 %v2809, %v2801
    %v3242 = vpack.c.b16 %v2810, %v2802
    %v3243 = vpack.c.b16 %v2811, %v2803
    %v3244 = vpack.c.b16 %v2820, %v2812
    %v3245 = vpack.c.b16 %v2821, %v2813
    %v3246 = vpack.c.b16 %v2822, %v2814
    %v3247 = vpack.c.b16 %v2823, %v2815
    %v3248 = vpack.c.b16 %v2824, %v2816
    %v3249 = vpack.c.b16 %v2825, %v2817
    %v3250 = vpack.c.b16 %v2826, %v2818
    %v3251 = vpack.c.b16 %v2827, %v2819
    %v3252 = vpack.c.b16 %v2836, %v2828
    %v3253 = vpack.c.b16 %v2837, %v2829
    %v3254 = vpack.c.b16 %v2838, %v2830
    %v3255 = vpack.c.b16 %v2839, %v2831
    %v3256 = vpack.c.b16 %v2840, %v2832
    %v3257 = vpack.c.b16 %v2841, %v2833
    %v3258 = vpack.c.b16 %v2842, %v2834
    %v3259 = vpack.c.b16 %v2843, %v2835
    %v3260 = vpack.c.b16 %v2852, %v2844
    %v3261 = vpack.c.b16 %v2853, %v2845
    %v3262 = vpack.c.b16 %v2854, %v2846
    %v3263 = vpack.c.b16 %v2855, %v2847
    %v3264 = vpack.c.b16 %v2856, %v2848
    %v3265 = vpack.c.b16 %v2857, %v2849
    %v3266 = vpack.c.b16 %v2858, %v2850
    %v3267 = vpack.c.b16 %v2859, %v2851
    %v3268 = vpack.c.b16 %v2868, %v2860
    %v3269 = vpack.c.b16 %v2869, %v2861
    %v3270 = vpack.c.b16 %v2870, %v2862
    %v3271 = vpack.c.b16 %v2871, %v2863
    %v3272 = vpack.c.b16 %v2872, %v2864
    %v3273 = vpack.c.b16 %v2873, %v2865
    %v3274 = vpack.c.b16 %v2874, %v2866
    %v3275 = vpack.c.b16 %v2875, %v2867
    %v3276 = vpack.c.b16 %v2884, %v2876
    %v3277 = vpack.c.b16 %v2885, %v2877
    %v3278 = vpack.c.b16 %v2886, %v2878
    %v3279 = vpack.c.b16 %v2887, %v2879
    %v3280 = vpack.c.b16 %v2888, %v2880
    %v3281 = vpack.c.b16 %v2889, %v2881
    %v3282 = vpack.c.b16 %v2890, %v2882
    %v3283 = vpack.c.b16 %v2891, %v2883
    %v3284 = vpack.c.b16 %v2900, %v2892
    %v3285 = vpack.c.b16 %v2901, %v2893
    %v3286 = vpack.c.b16 %v2902, %v2894
    %v3287 = vpack.c.b16 %v2903, %v2895
    %v3288 = vpack.c.b16 %v2904, %v2896
    %v3289 = vpack.c.b16 %v2905, %v2897
    %v3290 = vpack.c.b16 %v2906, %v2898
    %v3291 = vpack.c.b16 %v2907, %v2899
    %v3292 = vpack.c.b16 %v2916, %v2908
    %v3293 = vpack.c.b16 %v2917, %v2909
    %v3294 = vpack.c.b16 %v2918, %v2910
    %v3295 = vpack.c.b16 %v2919, %v2911
    %v3296 = vpack.c.b16 %v2920, %v2912
    %v3297 = vpack.c.b16 %v2921, %v2913
    %v3298 = vpack.c.b16 %v2922, %v2914
    %v3299 = vpack.c.b16 %v2923, %v2915
    %v3300 = vpack.c.b16 %v2932, %v2924
    %v3301 = vpack.c.b16 %v2933, %v2925
    %v3302 = vpack.c.b16 %v2934, %v2926
    %v3303 = vpack.c.b16 %v2935, %v2927
    %v3304 = vpack.c.b16 %v2936, %v2928
    %v3305 = vpack.c.b16 %v2937, %v2929
    %v3306 = vpack.c.b16 %v2938, %v2930
    %v3307 = vpack.c.b16 %v2939, %v2931
    %v3308 = vpack.c.b16 %v2948, %v2940
    %v3309 = vpack.c.b16 %v2949, %v2941
    %v3310 = vpack.c.b16 %v2950, %v2942
    %v3311 = vpack.c.b16 %v2951, %v2943
    %v3312 = vpack.c.b16 %v2952, %v2944
    %v3313 = vpack.c.b16 %v2953, %v2945
    %v3314 = vpack.c.b16 %v2954, %v2946
    %v3315 = vpack.c.b16 %v2955, %v2947
    %v3316 = vpack.c.b16 %v2964, %v2956
    %v3317 = vpack.c.b16 %v2965, %v2957
    %v3318 = vpack.c.b16 %v2966, %v2958
    %v3319 = vpack.c.b16 %v2967, %v2959
    %v3320 = vpack.c.b16 %v2968, %v2960
    %v3321 = vpack.c.b16 %v2969, %v2961
    %v3322 = vpack.c.b16 %v2970, %v2962
    %v3323 = vpack.c.b16 %v2971, %v2963
    %v3324 = vpack.c.b16 %v2980, %v2972
    %v3325 = vpack.c.b16 %v2981, %v2973
    %v3326 = vpack.c.b16 %v2982, %v2974
    %v3327 = vpack.c.b16 %v2983, %v2975
    %v3328 = vpack.c.b16 %v2984, %v2976
    %v3329 = vpack.c.b16 %v2985, %v2977
    %v3330 = vpack.c.b16 %v2986, %v2978
    %v3331 = vpack.c.b16 %v2987, %v2979
    %v3332 = vpack.c.b16 %v2996, %v2988
    %v3333 = vpack.c.b16 %v2997, %v2989
    %v3334 = vpack.c.b16 %v2998, %v2990
    %v3335 = vpack.c.b16 %v2999, %v2991
    %v3336 = vpack.c.b16 %v3000, %v2992
    %v3337 = vpack.c.b16 %v3001, %v2993
    %v3338 = vpack.c.b16 %v3002, %v2994
    %v3339 = vpack.c.b16 %v3003, %v2995
    %v3340 = vpack.c.b16 %v3012, %v3004
    %v3341 = vpack.c.b16 %v3013, %v3005
    %v3342 = vpack.c.b16 %v3014, %v3006
    %v3343 = vpack.c.b16 %v3015, %v3007
    %v3344 = vpack.c.b16 %v3016, %v3008
    %v3345 = vpack.c.b16 %v3017, %v3009
    %v3346 = vpack.c.b16 %v3018, %v3010
    %v3347 = vpack.c.b16 %v3019, %v3011
    %v3348 = vpack.c.b16 %v3028, %v3020
    %v3349 = vpack.c.b16 %v3029, %v3021
    %v3350 = vpack.c.b16 %v3030, %v3022
    %v3351 = vpack.c.b16 %v3031, %v3023
    %v3352 = vpack.c.b16 %v3032, %v3024
    %v3353 = vpack.c.b16 %v3033, %v3025
    %v3354 = vpack.c.b16 %v3034, %v3026
    %v3355 = vpack.c.b16 %v3035, %v3027
    %v3356 = vpack.c.b16 %v3044, %v3036
    %v3357 = vpack.c.b16 %v3045, %v3037
    %v3358 = vpack.c.b16 %v3046, %v3038
    %v3359 = vpack.c.b16 %v3047, %v3039
    %v3360 = vpack.c.b16 %v3048, %v3040
    %v3361 = vpack.c.b16 %v3049, %v3041
    %v3362 = vpack.c.b16 %v3050, %v3042
    %v3363 = vpack.c.b16 %v3051, %v3043
    %v3364 = vpack.c.b16 %v3060, %v3052
    %v3365 = vpack.c.b16 %v3061, %v3053
    %v3366 = vpack.c.b16 %v3062, %v3054
    %v3367 = vpack.c.b16 %v3063, %v3055
    %v3368 = vpack.c.b16 %v3064, %v3056
    %v3369 = vpack.c.b16 %v3065, %v3057
    %v3370 = vpack.c.b16 %v3066, %v3058
    %v3371 = vpack.c.b16 %v3067, %v3059
    %v3372 = vpack.c.b16 %v3076, %v3068
    %v3373 = vpack.c.b16 %v3077, %v3069
    %v3374 = vpack.c.b16 %v3078, %v3070
    %v3375 = vpack.c.b16 %v3079, %v3071
    %v3376 = vpack.c.b16 %v3080, %v3072
    %v3377 = vpack.c.b16 %v3081, %v3073
    %v3378 = vpack.c.b16 %v3082, %v3074
    %v3379 = vpack.c.b16 %v3083, %v3075
    %v3380 = vpack.c.b16 %v3092, %v3084
    %v3381 = vpack.c.b16 %v3093, %v3085
    %v3382 = vpack.c.b16 %v3094, %v3086
    %v3383 = vpack.c.b16 %v3095, %v3087
    %v3384 = vpack.c.b16 %v3096, %v3088
    %v3385 = vpack.c.b16 %v3097, %v3089
    %v3386 = vpack.c.b16 %v3098, %v3090
    %v3387 = vpack.c.b16 %v3099, %v3091
    %v3388 = vpack.c.b16 %v3108, %v3100
    %v3389 = vpack.c.b16 %v3109, %v3101
    %v3390 = vpack.c.b16 %v3110, %v3102
    %v3391 = vpack.c.b16 %v3111, %v3103
    %v3392 = vpack.c.b16 %v3112, %v3104
    %v3393 = vpack.c.b16 %v3113, %v3105
    %v3394 = vpack.c.b16 %v3114, %v3106
    %v3395 = vpack.c.b16 %v3115, %v3107
    %v3396 = vpack.c.b16 %v3124, %v3116
    %v3397 = vpack.c.b16 %v3125, %v3117
    %v3398 = vpack.c.b16 %v3126, %v3118
    %v3399 = vpack.c.b16 %v3127, %v3119
    %v3400 = vpack.c.b16 %v3128, %v3120
    %v3401 = vpack.c.b16 %v3129, %v3121
    %v3402 = vpack.c.b16 %v3130, %v3122
    %v3403 = vpack.c.b16 %v3131, %v3123
    %v3404 = vpack.c.b16 %v3140, %v3132
    %v3405 = vpack.c.b16 %v3141, %v3133
    %v3406 = vpack.c.b16 %v3142, %v3134
    %v3407 = vpack.c.b16 %v3143, %v3135
    %v3408 = vpack.c.b16 %v3144, %v3136
    %v3409 = vpack.c.b16 %v3145, %v3137
    %v3410 = vpack.c.b16 %v3146, %v3138
    %v3411 = vpack.c.b16 %v3147, %v3139
    %v3412 = vpack.c.b16 %v3156, %v3148
    %v3413 = vpack.c.b16 %v3157, %v3149
    %v3414 = vpack.c.b16 %v3158, %v3150
    %v3415 = vpack.c.b16 %v3159, %v3151
    %v3416 = vpack.c.b16 %v3160, %v3152
    %v3417 = vpack.c.b16 %v3161, %v3153
    %v3418 = vpack.c.b16 %v3162, %v3154
    %v3419 = vpack.c.b16 %v3163, %v3155
    %3676 = vmatprep.subr.bf16.mxu0 %v3221
    %3677 = vmatpush1.bf16.msra.mxu0 %v3220
    %3678 = vmatprep.subr.bf16.mxu0 %v3213
    %3679 = vmatpush1.bf16.msra.mxu0 %v3212
    %3680 = vmatprep.subr.bf16.mxu0 %v3205
    %3681 = vmatpush1.bf16.msra.mxu0 %v3204
    %3682 = vmatprep.subr.bf16.mxu0 %v3197
    %3683 = vmatpush1.bf16.msra.mxu0 %v3196
    %3684 = vmatprep.subr.bf16.mxu0 %v3189
    %3685 = vmatpush1.bf16.msra.mxu0 %v3188
    %3686 = vmatprep.subr.bf16.mxu0 %v3181
    %3687 = vmatpush1.bf16.msra.mxu0 %v3180
    %3688 = vmatprep.subr.bf16.mxu0 %v3173
    %3689 = vmatpush1.bf16.msra.mxu0 %v3172
    %3690 = vmatprep.subr.bf16.mxu0 %v3165
    %3691 = vmatpush1.bf16.msra.mxu0 %v3164
    %3692 = vmatprep.subr.bf16.mxu0 %v3285
    %3693 = vmatpush2.bf16.msra.mxu0 %v3284
    %3694 = vmatprep.subr.bf16.mxu0 %v3277
    %3695 = vmatpush2.bf16.msra.mxu0 %v3276
    %3696 = vmatprep.subr.bf16.mxu0 %v3269
    %3697 = vmatpush2.bf16.msra.mxu0 %v3268
    %3698 = vmatprep.subr.bf16.mxu0 %v3261
    %3699 = vmatpush2.bf16.msra.mxu0 %v3260
    %3700 = vmatprep.subr.bf16.mxu0 %v3253
    %3701 = vmatpush2.bf16.msra.mxu0 %v3252
    %3702 = vmatprep.subr.bf16.mxu0 %v3245
    %3703 = vmatpush2.bf16.msra.mxu0 %v3244
    %3704 = vmatprep.subr.bf16.mxu0 %v3237
    %3705 = vmatpush2.bf16.msra.mxu0 %v3236
    %3706 = vmatprep.subr.bf16.mxu0 %v3229
    %3707 = vmatpush2.bf16.msra.mxu0 %v3228
    %3708 = vmatprep.mubr.bf16.mxu0 %v2095
    %3709 = vmatmul.mubr.bf16.gmra.mxu0 %v2094
    %v3710 = vpop.f32.mrf.mxu0
    %v3711 = vadd.f32 %v2359, %v3710
    %v3712 = vpop.f32.mrf.mxu0
    %v3713 = vadd.f32 %v2363, %v3712
    %v3714 = vpop.f32.mrf.mxu0
    %v3715 = vadd.f32 %v2359, %v3714
    %v3716 = vpop.f32.mrf.mxu0
    %v3717 = vadd.f32 %v2363, %v3716
    %3718 = vdwg.mxu0
    %3719 = vmatprep.subr.bf16.mxu0 %v3349
    %3720 = vmatpush1.bf16.msra.mxu0 %v3348
    %3721 = vmatprep.subr.bf16.mxu0 %v3341
    %3722 = vmatpush1.bf16.msra.mxu0 %v3340
    %3723 = vmatprep.subr.bf16.mxu0 %v3333
    %3724 = vmatpush1.bf16.msra.mxu0 %v3332
    %3725 = vmatprep.subr.bf16.mxu0 %v3325
    %3726 = vmatpush1.bf16.msra.mxu0 %v3324
    %3727 = vmatprep.subr.bf16.mxu0 %v3317
    %3728 = vmatpush1.bf16.msra.mxu0 %v3316
    %3729 = vmatprep.subr.bf16.mxu0 %v3309
    %3730 = vmatpush1.bf16.msra.mxu0 %v3308
    %3731 = vmatprep.subr.bf16.mxu0 %v3301
    %3732 = vmatpush1.bf16.msra.mxu0 %v3300
    %3733 = vmatprep.subr.bf16.mxu0 %v3293
    %3734 = vmatpush1.bf16.msra.mxu0 %v3292
    %3735 = vmatprep.subr.bf16.mxu0 %v3413
    %3736 = vmatpush2.bf16.msra.mxu0 %v3412
    %3737 = vmatprep.subr.bf16.mxu0 %v3405
    %3738 = vmatpush2.bf16.msra.mxu0 %v3404
    %3739 = vmatprep.subr.bf16.mxu0 %v3397
    %3740 = vmatpush2.bf16.msra.mxu0 %v3396
    %3741 = vmatprep.subr.bf16.mxu0 %v3389
    %3742 = vmatpush2.bf16.msra.mxu0 %v3388
    %3743 = vmatprep.subr.bf16.mxu0 %v3381
    %3744 = vmatpush2.bf16.msra.mxu0 %v3380
    %3745 = vmatprep.subr.bf16.mxu0 %v3373
    %3746 = vmatpush2.bf16.msra.mxu0 %v3372
    %3747 = vmatprep.subr.bf16.mxu0 %v3365
    %3748 = vmatpush2.bf16.msra.mxu0 %v3364
    %3749 = vmatprep.subr.bf16.mxu0 %v3357
    %3750 = vmatpush2.bf16.msra.mxu0 %v3356
    %3751 = vmatprep.mubr.bf16.mxu0 %v2097
    %3752 = vmatmul.mubr.bf16.gmra.mxu0 %v2096
    %v3753 = vpop.f32.mrf.mxu0
    %v3754 = vadd.f32 %v3711, %v3753
    %v3755 = vpop.f32.mrf.mxu0
    %v3756 = vadd.f32 %v3713, %v3755
    %v3757 = vpop.f32.mrf.mxu0
    %v3758 = vadd.f32 %v3715, %v3757
    %v3759 = vpop.f32.mrf.mxu0
    %v3760 = vadd.f32 %v3717, %v3759
    %3761 = vdwg.mxu0
    %3762 = vmatprep.subr.bf16.mxu0 %v3223
    %3763 = vmatpush1.bf16.msra.mxu0 %v3222
    %3764 = vmatprep.subr.bf16.mxu0 %v3215
    %3765 = vmatpush1.bf16.msra.mxu0 %v3214
    %3766 = vmatprep.subr.bf16.mxu0 %v3207
    %3767 = vmatpush1.bf16.msra.mxu0 %v3206
    %3768 = vmatprep.subr.bf16.mxu0 %v3199
    %3769 = vmatpush1.bf16.msra.mxu0 %v3198
    %3770 = vmatprep.subr.bf16.mxu0 %v3191
    %3771 = vmatpush1.bf16.msra.mxu0 %v3190
    %3772 = vmatprep.subr.bf16.mxu0 %v3183
    %3773 = vmatpush1.bf16.msra.mxu0 %v3182
    %3774 = vmatprep.subr.bf16.mxu0 %v3175
    %3775 = vmatpush1.bf16.msra.mxu0 %v3174
    %3776 = vmatprep.subr.bf16.mxu0 %v3167
    %3777 = vmatpush1.bf16.msra.mxu0 %v3166
    %3778 = vmatprep.subr.bf16.mxu0 %v3287
    %3779 = vmatpush2.bf16.msra.mxu0 %v3286
    %3780 = vmatprep.subr.bf16.mxu0 %v3279
    %3781 = vmatpush2.bf16.msra.mxu0 %v3278
    %3782 = vmatprep.subr.bf16.mxu0 %v3271
    %3783 = vmatpush2.bf16.msra.mxu0 %v3270
    %3784 = vmatprep.subr.bf16.mxu0 %v3263
    %3785 = vmatpush2.bf16.msra.mxu0 %v3262
    %3786 = vmatprep.subr.bf16.mxu0 %v3255
    %3787 = vmatpush2.bf16.msra.mxu0 %v3254
    %3788 = vmatprep.subr.bf16.mxu0 %v3247
    %3789 = vmatpush2.bf16.msra.mxu0 %v3246
    %3790 = vmatprep.subr.bf16.mxu0 %v3239
    %3791 = vmatpush2.bf16.msra.mxu0 %v3238
    %3792 = vmatprep.subr.bf16.mxu0 %v3231
    %3793 = vmatpush2.bf16.msra.mxu0 %v3230
    %3794 = vmatprep.mubr.bf16.mxu0 %v2095
    %3795 = vmatmul.mubr.bf16.gmra.mxu0 %v2094
    %v3796 = vpop.f32.mrf.mxu0
    %v3797 = vadd.f32 %v2367, %v3796
    %v3798 = vpop.f32.mrf.mxu0
    %v3799 = vadd.f32 %v2371, %v3798
    %v3800 = vpop.f32.mrf.mxu0
    %v3801 = vadd.f32 %v2367, %v3800
    %v3802 = vpop.f32.mrf.mxu0
    %v3803 = vadd.f32 %v2371, %v3802
    %3804 = vdwg.mxu0
    %3805 = vmatprep.subr.bf16.mxu0 %v3351
    %3806 = vmatpush1.bf16.msra.mxu0 %v3350
    %3807 = vmatprep.subr.bf16.mxu0 %v3343
    %3808 = vmatpush1.bf16.msra.mxu0 %v3342
    %3809 = vmatprep.subr.bf16.mxu0 %v3335
    %3810 = vmatpush1.bf16.msra.mxu0 %v3334
    %3811 = vmatprep.subr.bf16.mxu0 %v3327
    %3812 = vmatpush1.bf16.msra.mxu0 %v3326
    %3813 = vmatprep.subr.bf16.mxu0 %v3319
    %3814 = vmatpush1.bf16.msra.mxu0 %v3318
    %3815 = vmatprep.subr.bf16.mxu0 %v3311
    %3816 = vmatpush1.bf16.msra.mxu0 %v3310
    %3817 = vmatprep.subr.bf16.mxu0 %v3303
    %3818 = vmatpush1.bf16.msra.mxu0 %v3302
    %3819 = vmatprep.subr.bf16.mxu0 %v3295
    %3820 = vmatpush1.bf16.msra.mxu0 %v3294
    %3821 = vmatprep.subr.bf16.mxu0 %v3415
    %3822 = vmatpush2.bf16.msra.mxu0 %v3414
    %3823 = vmatprep.subr.bf16.mxu0 %v3407
    %3824 = vmatpush2.bf16.msra.mxu0 %v3406
    %3825 = vmatprep.subr.bf16.mxu0 %v3399
    %3826 = vmatpush2.bf16.msra.mxu0 %v3398
    %3827 = vmatprep.subr.bf16.mxu0 %v3391
    %3828 = vmatpush2.bf16.msra.mxu0 %v3390
    %3829 = vmatprep.subr.bf16.mxu0 %v3383
    %3830 = vmatpush2.bf16.msra.mxu0 %v3382
    %3831 = vmatprep.subr.bf16.mxu0 %v3375
    %3832 = vmatpush2.bf16.msra.mxu0 %v3374
    %3833 = vmatprep.subr.bf16.mxu0 %v3367
    %3834 = vmatpush2.bf16.msra.mxu0 %v3366
    %3835 = vmatprep.subr.bf16.mxu0 %v3359
    %3836 = vmatpush2.bf16.msra.mxu0 %v3358
    %3837 = vmatprep.mubr.bf16.mxu0 %v2097
    %3838 = vmatmul.mubr.bf16.gmra.mxu0 %v2096
    %v3839 = vpop.f32.mrf.mxu0
    %v3840 = vadd.f32 %v3797, %v3839
    %v3841 = vpop.f32.mrf.mxu0
    %v3842 = vadd.f32 %v3799, %v3841
    %v3843 = vpop.f32.mrf.mxu0
    %v3844 = vadd.f32 %v3801, %v3843
    %v3845 = vpop.f32.mrf.mxu0
    %v3846 = vadd.f32 %v3803, %v3845
    %3847 = vdwg.mxu0
    %3848 = vmatprep.subr.bf16.mxu0 %v3225
    %3849 = vmatpush1.bf16.msra.mxu0 %v3224
    %3850 = vmatprep.subr.bf16.mxu0 %v3217
    %3851 = vmatpush1.bf16.msra.mxu0 %v3216
    %3852 = vmatprep.subr.bf16.mxu0 %v3209
    %3853 = vmatpush1.bf16.msra.mxu0 %v3208
    %3854 = vmatprep.subr.bf16.mxu0 %v3201
    %3855 = vmatpush1.bf16.msra.mxu0 %v3200
    %3856 = vmatprep.subr.bf16.mxu0 %v3193
    %3857 = vmatpush1.bf16.msra.mxu0 %v3192
    %3858 = vmatprep.subr.bf16.mxu0 %v3185
    %3859 = vmatpush1.bf16.msra.mxu0 %v3184
    %3860 = vmatprep.subr.bf16.mxu0 %v3177
    %3861 = vmatpush1.bf16.msra.mxu0 %v3176
    %3862 = vmatprep.subr.bf16.mxu0 %v3169
    %3863 = vmatpush1.bf16.msra.mxu0 %v3168
    %3864 = vmatprep.subr.bf16.mxu0 %v3289
    %3865 = vmatpush2.bf16.msra.mxu0 %v3288
    %3866 = vmatprep.subr.bf16.mxu0 %v3281
    %3867 = vmatpush2.bf16.msra.mxu0 %v3280
    %3868 = vmatprep.subr.bf16.mxu0 %v3273
    %3869 = vmatpush2.bf16.msra.mxu0 %v3272
    %3870 = vmatprep.subr.bf16.mxu0 %v3265
    %3871 = vmatpush2.bf16.msra.mxu0 %v3264
    %3872 = vmatprep.subr.bf16.mxu0 %v3257
    %3873 = vmatpush2.bf16.msra.mxu0 %v3256
    %3874 = vmatprep.subr.bf16.mxu0 %v3249
    %3875 = vmatpush2.bf16.msra.mxu0 %v3248
    %3876 = vmatprep.subr.bf16.mxu0 %v3241
    %3877 = vmatpush2.bf16.msra.mxu0 %v3240
    %3878 = vmatprep.subr.bf16.mxu0 %v3233
    %3879 = vmatpush2.bf16.msra.mxu0 %v3232
    %3880 = vmatprep.mubr.bf16.mxu0 %v2095
    %3881 = vmatmul.mubr.bf16.gmra.mxu0 %v2094
    %v3882 = vpop.f32.mrf.mxu0
    %v3883 = vadd.f32 %v2375, %v3882
    %v3884 = vpop.f32.mrf.mxu0
    %v3885 = vadd.f32 %v2379, %v3884
    %v3886 = vpop.f32.mrf.mxu0
    %v3887 = vadd.f32 %v2375, %v3886
    %v3888 = vpop.f32.mrf.mxu0
    %v3889 = vadd.f32 %v2379, %v3888
    %3890 = vdwg.mxu0
    %3891 = vmatprep.subr.bf16.mxu0 %v3353
    %3892 = vmatpush1.bf16.msra.mxu0 %v3352
    %3893 = vmatprep.subr.bf16.mxu0 %v3345
    %3894 = vmatpush1.bf16.msra.mxu0 %v3344
    %3895 = vmatprep.subr.bf16.mxu0 %v3337
    %3896 = vmatpush1.bf16.msra.mxu0 %v3336
    %3897 = vmatprep.subr.bf16.mxu0 %v3329
    %3898 = vmatpush1.bf16.msra.mxu0 %v3328
    %3899 = vmatprep.subr.bf16.mxu0 %v3321
    %3900 = vmatpush1.bf16.msra.mxu0 %v3320
    %3901 = vmatprep.subr.bf16.mxu0 %v3313
    %3902 = vmatpush1.bf16.msra.mxu0 %v3312
    %3903 = vmatprep.subr.bf16.mxu0 %v3305
    %3904 = vmatpush1.bf16.msra.mxu0 %v3304
    %3905 = vmatprep.subr.bf16.mxu0 %v3297
    %3906 = vmatpush1.bf16.msra.mxu0 %v3296
    %3907 = vmatprep.subr.bf16.mxu0 %v3417
    %3908 = vmatpush2.bf16.msra.mxu0 %v3416
    %3909 = vmatprep.subr.bf16.mxu0 %v3409
    %3910 = vmatpush2.bf16.msra.mxu0 %v3408
    %3911 = vmatprep.subr.bf16.mxu0 %v3401
    %3912 = vmatpush2.bf16.msra.mxu0 %v3400
    %3913 = vmatprep.subr.bf16.mxu0 %v3393
    %3914 = vmatpush2.bf16.msra.mxu0 %v3392
    %3915 = vmatprep.subr.bf16.mxu0 %v3385
    %3916 = vmatpush2.bf16.msra.mxu0 %v3384
    %3917 = vmatprep.subr.bf16.mxu0 %v3377
    %3918 = vmatpush2.bf16.msra.mxu0 %v3376
    %3919 = vmatprep.subr.bf16.mxu0 %v3369
    %3920 = vmatpush2.bf16.msra.mxu0 %v3368
    %3921 = vmatprep.subr.bf16.mxu0 %v3361
    %3922 = vmatpush2.bf16.msra.mxu0 %v3360
    %3923 = vmatprep.mubr.bf16.mxu0 %v2097
    %3924 = vmatmul.mubr.bf16.gmra.mxu0 %v2096
    %v3925 = vpop.f32.mrf.mxu0
    %v3926 = vadd.f32 %v3883, %v3925
    %v3927 = vpop.f32.mrf.mxu0
    %v3928 = vadd.f32 %v3885, %v3927
    %v3929 = vpop.f32.mrf.mxu0
    %v3930 = vadd.f32 %v3887, %v3929
    %v3931 = vpop.f32.mrf.mxu0
    %v3932 = vadd.f32 %v3889, %v3931
    %3933 = vdwg.mxu0
    %3934 = vmatprep.subr.bf16.mxu0 %v3227
    %3935 = vmatpush1.bf16.msra.mxu0 %v3226
    %3936 = vmatprep.subr.bf16.mxu0 %v3219
    %3937 = vmatpush1.bf16.msra.mxu0 %v3218
    %3938 = vmatprep.subr.bf16.mxu0 %v3211
    %3939 = vmatpush1.bf16.msra.mxu0 %v3210
    %3940 = vmatprep.subr.bf16.mxu0 %v3203
    %3941 = vmatpush1.bf16.msra.mxu0 %v3202
    %3942 = vmatprep.subr.bf16.mxu0 %v3195
    %3943 = vmatpush1.bf16.msra.mxu0 %v3194
    %3944 = vmatprep.subr.bf16.mxu0 %v3187
    %3945 = vmatpush1.bf16.msra.mxu0 %v3186
    %3946 = vmatprep.subr.bf16.mxu0 %v3179
    %3947 = vmatpush1.bf16.msra.mxu0 %v3178
    %3948 = vmatprep.subr.bf16.mxu0 %v3171
    %3949 = vmatpush1.bf16.msra.mxu0 %v3170
    %3950 = vmatprep.subr.bf16.mxu0 %v3291
    %3951 = vmatpush2.bf16.msra.mxu0 %v3290
    %3952 = vmatprep.subr.bf16.mxu0 %v3283
    %3953 = vmatpush2.bf16.msra.mxu0 %v3282
    %3954 = vmatprep.subr.bf16.mxu0 %v3275
    %3955 = vmatpush2.bf16.msra.mxu0 %v3274
    %3956 = vmatprep.subr.bf16.mxu0 %v3267
    %3957 = vmatpush2.bf16.msra.mxu0 %v3266
    %3958 = vmatprep.subr.bf16.mxu0 %v3259
    %3959 = vmatpush2.bf16.msra.mxu0 %v3258
    %3960 = vmatprep.subr.bf16.mxu0 %v3251
    %3961 = vmatpush2.bf16.msra.mxu0 %v3250
    %3962 = vmatprep.subr.bf16.mxu0 %v3243
    %3963 = vmatpush2.bf16.msra.mxu0 %v3242
    %3964 = vmatprep.subr.bf16.mxu0 %v3235
    %3965 = vmatpush2.bf16.msra.mxu0 %v3234
    %3966 = vmatprep.mubr.bf16.mxu0 %v2095
    %3967 = vmatmul.mubr.bf16.gmra.mxu0 %v2094
    %v3968 = vpop.f32.mrf.mxu0
    %v3969 = vadd.f32 %v2383, %v3968
    %v3970 = vpop.f32.mrf.mxu0
    %v3971 = vadd.f32 %v2387, %v3970
    %v3972 = vpop.f32.mrf.mxu0
    %v3973 = vadd.f32 %v2383, %v3972
    %v3974 = vpop.f32.mrf.mxu0
    %v3975 = vadd.f32 %v2387, %v3974
    %3976 = vdwg.mxu0
    %3977 = vmatprep.subr.bf16.mxu0 %v3355
    %3978 = vmatpush1.bf16.msra.mxu0 %v3354
    %3979 = vmatprep.subr.bf16.mxu0 %v3347
    %3980 = vmatpush1.bf16.msra.mxu0 %v3346
    %3981 = vmatprep.subr.bf16.mxu0 %v3339
    %3982 = vmatpush1.bf16.msra.mxu0 %v3338
    %3983 = vmatprep.subr.bf16.mxu0 %v3331
    %3984 = vmatpush1.bf16.msra.mxu0 %v3330
    %3985 = vmatprep.subr.bf16.mxu0 %v3323
    %3986 = vmatpush1.bf16.msra.mxu0 %v3322
    %3987 = vmatprep.subr.bf16.mxu0 %v3315
    %3988 = vmatpush1.bf16.msra.mxu0 %v3314
    %3989 = vmatprep.subr.bf16.mxu0 %v3307
    %3990 = vmatpush1.bf16.msra.mxu0 %v3306
    %3991 = vmatprep.subr.bf16.mxu0 %v3299
    %3992 = vmatpush1.bf16.msra.mxu0 %v3298
    %3993 = vmatprep.subr.bf16.mxu0 %v3419
    %3994 = vmatpush2.bf16.msra.mxu0 %v3418
    %3995 = vmatprep.subr.bf16.mxu0 %v3411
    %3996 = vmatpush2.bf16.msra.mxu0 %v3410
    %3997 = vmatprep.subr.bf16.mxu0 %v3403
    %3998 = vmatpush2.bf16.msra.mxu0 %v3402
    %3999 = vmatprep.subr.bf16.mxu0 %v3395
    %4000 = vmatpush2.bf16.msra.mxu0 %v3394
    %4001 = vmatprep.subr.bf16.mxu0 %v3387
    %4002 = vmatpush2.bf16.msra.mxu0 %v3386
    %4003 = vmatprep.subr.bf16.mxu0 %v3379
    %4004 = vmatpush2.bf16.msra.mxu0 %v3378
    %4005 = vmatprep.subr.bf16.mxu0 %v3371
    %4006 = vmatpush2.bf16.msra.mxu0 %v3370
    %4007 = vmatprep.subr.bf16.mxu0 %v3363
    %4008 = vmatpush2.bf16.msra.mxu0 %v3362
    %4009 = vmatprep.mubr.bf16.mxu0 %v2097
    %4010 = vmatmul.mubr.bf16.gmra.mxu0 %v2096
    %v4011 = vpop.f32.mrf.mxu0
    %v4012 = vadd.f32 %v3969, %v4011
    %v4013 = vpop.f32.mrf.mxu0
    %v4014 = vadd.f32 %v3971, %v4013
    %v4015 = vpop.f32.mrf.mxu0
    %v4016 = vadd.f32 %v3973, %v4015
    %v4017 = vpop.f32.mrf.mxu0
    %v4018 = vadd.f32 %v3975, %v4017
    %4019 = vdwg.mxu0
    %v4020 = vadd.f32 %v3754, %v128
    %v4021 = vadd.f32 %v3756, %v129
    %v4022 = vadd.f32 %v3840, %v130
    %v4023 = vadd.f32 %v3842, %v131
    %v4024 = vadd.f32 %v3758, %v132
    %v4025 = vadd.f32 %v3760, %v133
    %v4026 = vadd.f32 %v3844, %v134
    %v4027 = vadd.f32 %v3846, %v135
    %v4028 = vld [vmem:[#allocation11] sm:$0xf]
    %v4029 = vld [vmem:[%s7] sm:$0xf]
    %v4030 = vadd.f32 %v4020, %v4021
    %v4031 = vadd.f32 %v4030, %v4022
    %v4032 = vadd.f32 %v4031, %v4023
    %4033 = vadd.xlane.f32.xlu0 %v4032
    %v4034 = vpop.xlane.xlu0 %4033
    %v4035 = vadd.f32 %v4024, %v4025
    %v4036 = vadd.f32 %v4035, %v4026
    %v4037 = vadd.f32 %v4036, %v4027
    %4038 = vadd.xlane.f32.xlu0 %v4037
    %v4039 = vpop.xlane.xlu0 %4038
    %v4040 = vrcp.pop 512.0
    %v4041 = vmul.f32 %v4034, %v4040
    %v4042 = vmul.f32 %v4039, %v4040
    %v4043 = vsub.f32 %v4020, %v4041
    %v4044 = vsub.f32 %v4021, %v4041
    %v4045 = vsub.f32 %v4022, %v4041
    %v4046 = vsub.f32 %v4023, %v4041
    %v4047 = vsub.f32 %v4024, %v4042
    %v4048 = vsub.f32 %v4025, %v4042
    %v4049 = vsub.f32 %v4026, %v4042
    %v4050 = vsub.f32 %v4027, %v4042
    %v4051 = vmul.f32 %v4043, %v4043
    %v4052 = vmul.f32 %v4044, %v4044
    %v4053 = vmul.f32 %v4045, %v4045
    %v4054 = vmul.f32 %v4046, %v4046
    %v4055 = vmul.f32 %v4047, %v4047
    %v4056 = vmul.f32 %v4048, %v4048
    %v4057 = vmul.f32 %v4049, %v4049
    %v4058 = vmul.f32 %v4050, %v4050
    %v4059 = vadd.f32 %v4051, %v4052
    %v4060 = vadd.f32 %v4059, %v4053
    %v4061 = vadd.f32 %v4060, %v4054
    %4062 = vadd.xlane.f32.xlu0 %v4061
    %v4063 = vpop.xlane.xlu0 %4062
    %v4064 = vadd.f32 %v4055, %v4056
    %v4065 = vadd.f32 %v4064, %v4057
    %v4066 = vadd.f32 %v4065, %v4058
    %4067 = vadd.xlane.f32.xlu0 %v4066
    %v4068 = vpop.xlane.xlu0 %4067
    %v4069 = vmul.f32 %v4063, 0.0019569471
    %v4070 = vmul.f32 %v4068, 0.0019569471
    %v4071 = vrsqrt.pop %v4069
    %v4072 = vmul.f32 %v4069, %v4071
    %vm4073 = vcmp.eq.f32.partialorder %v4069, inf
    %v4074 = vsel %vm4073, %v4069, %v4072
    %vm4075 = vcmp.eq.f32.partialorder %v4069, 0.0
    %v4076 = vand.u32 %v4069, 2147483648
    %v4077 = vsel %vm4075, %v4076, %v4074
    %v4078 = vrsqrt.pop %v4070
    %v4079 = vmul.f32 %v4070, %v4078
    %vm4080 = vcmp.eq.f32.partialorder %v4070, inf
    %v4081 = vsel %vm4080, %v4070, %v4079
    %vm4082 = vcmp.eq.f32.partialorder %v4070, 0.0
    %v4083 = vand.u32 %v4070, 2147483648
    %v4084 = vsel %vm4082, %v4083, %v4081
    %v4085 = vadd.f32 %v4077, 1e-06
    %v4086 = vadd.f32 %v4084, 1e-06
    %v4087 = vrcp.pop %v4085
    %v4088 = vrcp.pop %v4086
    %v4090 = vlaneseq
    %v4091 = vshrl.u32 %v4090, 7
    %v4092 = vsub.s32 0, %v4091
    %v4093 = vrot.slane %v4028, %v4092
    %v4094 = vlaneseq
    %v4095 = vshrl.u32 %v4094, 7
    %v4096 = vsub.s32 1, %v4095
    %v4097 = vrot.slane %v4028, %v4096
    %v4098 = vlaneseq
    %v4099 = vshrl.u32 %v4098, 7
    %v4100 = vsub.s32 2, %v4099
    %v4101 = vrot.slane %v4028, %v4100
    %v4102 = vlaneseq
    %v4103 = vshrl.u32 %v4102, 7
    %v4104 = vsub.s32 3, %v4103
    %v4105 = vrot.slane %v4028, %v4104
    %v4110 = vmul.f32 %v4093, %v4043
    %v4111 = vmul.f32 %v4097, %v4044
    %v4112 = vmul.f32 %v4101, %v4045
    %v4113 = vmul.f32 %v4105, %v4046
    %v4114 = vmul.f32 %v4093, %v4047
    %v4115 = vmul.f32 %v4097, %v4048
    %v4116 = vmul.f32 %v4101, %v4049
    %v4117 = vmul.f32 %v4105, %v4050
    %v4118 = vmul.f32 %v4110, %v4087
    %v4119 = vmul.f32 %v4111, %v4087
    %v4120 = vmul.f32 %v4112, %v4087
    %v4121 = vmul.f32 %v4113, %v4087
    %v4122 = vmul.f32 %v4114, %v4088
    %v4123 = vmul.f32 %v4115, %v4088
    %v4124 = vmul.f32 %v4116, %v4088
    %v4125 = vmul.f32 %v4117, %v4088
    %v4127 = vlaneseq
    %v4128 = vshrl.u32 %v4127, 7
    %v4129 = vsub.s32 0, %v4128
    %v4130 = vrot.slane %v4029, %v4129
    %v4131 = vlaneseq
    %v4132 = vshrl.u32 %v4131, 7
    %v4133 = vsub.s32 1, %v4132
    %v4134 = vrot.slane %v4029, %v4133
    %v4135 = vlaneseq
    %v4136 = vshrl.u32 %v4135, 7
    %v4137 = vsub.s32 2, %v4136
    %v4138 = vrot.slane %v4029, %v4137
    %v4139 = vlaneseq
    %v4140 = vshrl.u32 %v4139, 7
    %v4141 = vsub.s32 3, %v4140
    %v4142 = vrot.slane %v4029, %v4141
    %v4147 = vadd.f32 %v4118, %v4130
    %v4148 = vadd.f32 %v4119, %v4134
    %v4149 = vadd.f32 %v4120, %v4138
    %v4150 = vadd.f32 %v4121, %v4142
    %v4151 = vadd.f32 %v4122, %v4130
    %v4152 = vadd.f32 %v4123, %v4134
    %v4153 = vadd.f32 %v4124, %v4138
    %v4154 = vadd.f32 %v4125, %v4142
    %4155 = vst [vmem:[#allocation14] sm:$0xff] %v4147
    %4156 = vst [vmem:[#allocation14 + $0x8] sm:$0xff] %v4148
    %4157 = vst [vmem:[#allocation14 + $0x10] sm:$0xff] %v4149
    %4158 = vst [vmem:[#allocation14 + $0x18] sm:$0xff] %v4150
    %4159 = vst [vmem:[#allocation14 + $0x20] sm:$0xff] %v4151
    %4160 = vst [vmem:[#allocation14 + $0x28] sm:$0xff] %v4152
    %4161 = vst [vmem:[#allocation14 + $0x30] sm:$0xff] %v4153
    %4162 = vst [vmem:[#allocation14 + $0x38] sm:$0xff] %v4154
    %v4163 = vadd.f32 %v3926, %v136
    %v4164 = vadd.f32 %v3928, %v137
    %v4165 = vadd.f32 %v4012, %v138
    %v4166 = vadd.f32 %v4014, %v139
    %v4167 = vadd.f32 %v3930, %v140
    %v4168 = vadd.f32 %v3932, %v141
    %v4169 = vadd.f32 %v4016, %v142
    %v4170 = vadd.f32 %v4018, %v143
    %v4171 = vld [vmem:[#allocation13] sm:$0xf]
    %v4172 = vld [vmem:[%s9] sm:$0xf]
    %v4173 = vadd.f32 %v4163, %v4164
    %v4174 = vadd.f32 %v4173, %v4165
    %v4175 = vadd.f32 %v4174, %v4166
    %4176 = vadd.xlane.f32.xlu0 %v4175
    %v4177 = vpop.xlane.xlu0 %4176
    %v4178 = vadd.f32 %v4167, %v4168
    %v4179 = vadd.f32 %v4178, %v4169
    %v4180 = vadd.f32 %v4179, %v4170
    %4181 = vadd.xlane.f32.xlu0 %v4180
    %v4182 = vpop.xlane.xlu0 %4181
    %v4183 = vmul.f32 %v4177, %v4040
    %v4184 = vmul.f32 %v4182, %v4040
    %v4185 = vsub.f32 %v4163, %v4183
    %v4186 = vsub.f32 %v4164, %v4183
    %v4187 = vsub.f32 %v4165, %v4183
    %v4188 = vsub.f32 %v4166, %v4183
    %v4189 = vsub.f32 %v4167, %v4184
    %v4190 = vsub.f32 %v4168, %v4184
    %v4191 = vsub.f32 %v4169, %v4184
    %v4192 = vsub.f32 %v4170, %v4184
    %v4193 = vmul.f32 %v4185, %v4185
    %v4194 = vmul.f32 %v4186, %v4186
    %v4195 = vmul.f32 %v4187, %v4187
    %v4196 = vmul.f32 %v4188, %v4188
    %v4197 = vmul.f32 %v4189, %v4189
    %v4198 = vmul.f32 %v4190, %v4190
    %v4199 = vmul.f32 %v4191, %v4191
    %v4200 = vmul.f32 %v4192, %v4192
    %v4201 = vadd.f32 %v4193, %v4194
    %v4202 = vadd.f32 %v4201, %v4195
    %v4203 = vadd.f32 %v4202, %v4196
    %4204 = vadd.xlane.f32.xlu0 %v4203
    %v4205 = vpop.xlane.xlu0 %4204
    %v4206 = vadd.f32 %v4197, %v4198
    %v4207 = vadd.f32 %v4206, %v4199
    %v4208 = vadd.f32 %v4207, %v4200
    %4209 = vadd.xlane.f32.xlu0 %v4208
    %v4210 = vpop.xlane.xlu0 %4209
    %v4211 = vmul.f32 %v4205, 0.0019569471
    %v4212 = vmul.f32 %v4210, 0.0019569471
    %v4213 = vrsqrt.pop %v4211
    %v4214 = vmul.f32 %v4211, %v4213
    %vm4215 = vcmp.eq.f32.partialorder %v4211, inf
    %v4216 = vsel %vm4215, %v4211, %v4214
    %vm4217 = vcmp.eq.f32.partialorder %v4211, 0.0
    %v4218 = vand.u32 %v4211, 2147483648
    %v4219 = vsel %vm4217, %v4218, %v4216
    %v4220 = vrsqrt.pop %v4212
    %v4221 = vmul.f32 %v4212, %v4220
    %vm4222 = vcmp.eq.f32.partialorder %v4212, inf
    %v4223 = vsel %vm4222, %v4212, %v4221
    %vm4224 = vcmp.eq.f32.partialorder %v4212, 0.0
    %v4225 = vand.u32 %v4212, 2147483648
    %v4226 = vsel %vm4224, %v4225, %v4223
    %v4227 = vadd.f32 %v4219, 1e-06
    %v4228 = vadd.f32 %v4226, 1e-06
    %v4229 = vrcp.pop %v4227
    %v4230 = vrcp.pop %v4228
    %v4232 = vlaneseq
    %v4233 = vshrl.u32 %v4232, 7
    %v4234 = vsub.s32 0, %v4233
    %v4235 = vrot.slane %v4171, %v4234
    %v4236 = vlaneseq
    %v4237 = vshrl.u32 %v4236, 7
    %v4238 = vsub.s32 1, %v4237
    %v4239 = vrot.slane %v4171, %v4238
    %v4240 = vlaneseq
    %v4241 = vshrl.u32 %v4240, 7
    %v4242 = vsub.s32 2, %v4241
    %v4243 = vrot.slane %v4171, %v4242
    %v4244 = vlaneseq
    %v4245 = vshrl.u32 %v4244, 7
    %v4246 = vsub.s32 3, %v4245
    %v4247 = vrot.slane %v4171, %v4246
    %v4252 = vmul.f32 %v4235, %v4185
    %v4253 = vmul.f32 %v4239, %v4186
    %v4254 = vmul.f32 %v4243, %v4187
    %v4255 = vmul.f32 %v4247, %v4188
    %v4256 = vmul.f32 %v4235, %v4189
    %v4257 = vmul.f32 %v4239, %v4190
    %v4258 = vmul.f32 %v4243, %v4191
    %v4259 = vmul.f32 %v4247, %v4192
    %v4260 = vmul.f32 %v4252, %v4229
    %v4261 = vmul.f32 %v4253, %v4229
    %v4262 = vmul.f32 %v4254, %v4229
    %v4263 = vmul.f32 %v4255, %v4229
    %v4264 = vmul.f32 %v4256, %v4230
    %v4265 = vmul.f32 %v4257, %v4230
    %v4266 = vmul.f32 %v4258, %v4230
    %v4267 = vmul.f32 %v4259, %v4230
    %v4269 = vlaneseq
    %v4270 = vshrl.u32 %v4269, 7
    %v4271 = vsub.s32 0, %v4270
    %v4272 = vrot.slane %v4172, %v4271
    %v4273 = vlaneseq
    %v4274 = vshrl.u32 %v4273, 7
    %v4275 = vsub.s32 1, %v4274
    %v4276 = vrot.slane %v4172, %v4275
    %v4277 = vlaneseq
    %v4278 = vshrl.u32 %v4277, 7
    %v4279 = vsub.s32 2, %v4278
    %v4280 = vrot.slane %v4172, %v4279
    %v4281 = vlaneseq
    %v4282 = vshrl.u32 %v4281, 7
    %v4283 = vsub.s32 3, %v4282
    %v4284 = vrot.slane %v4172, %v4283
    %v4289 = vadd.f32 %v4260, %v4272
    %v4290 = vadd.f32 %v4261, %v4276
    %v4291 = vadd.f32 %v4262, %v4280
    %v4292 = vadd.f32 %v4263, %v4284
    %v4293 = vadd.f32 %v4264, %v4272
    %v4294 = vadd.f32 %v4265, %v4276
    %v4295 = vadd.f32 %v4266, %v4280
    %v4296 = vadd.f32 %v4267, %v4284
    %4297 = vst [vmem:[#allocation15] sm:$0xff] %v4289
    %4298 = vst [vmem:[#allocation15 + $0x8] sm:$0xff] %v4290
    %4299 = vst [vmem:[#allocation15 + $0x10] sm:$0xff] %v4291
    %4300 = vst [vmem:[#allocation15 + $0x18] sm:$0xff] %v4292
    %4301 = vst [vmem:[#allocation15 + $0x20] sm:$0xff] %v4293
    %4302 = vst [vmem:[#allocation15 + $0x28] sm:$0xff] %v4294
    %4303 = vst [vmem:[#allocation15 + $0x30] sm:$0xff] %v4295
    %4304 = vst [vmem:[#allocation15 + $0x38] sm:$0xff] %v4296
    // Predicated region
    $region70: #{tpu_custom_call.1} parent=1 // pred_check
      _
    $region71: #{tpu_custom_call.1} parent=1 // pred_check_branch
      %4306 = sbr.rel (0) target = $region73
    $region72: #{tpu_custom_call.1} parent=1 // pred_region
      %s4308 = ssub.s32 1024, 1024
      %4309 = vsyncadd [#allocation4], %s4308
      %s4310 = sshll.u32 [#allocation14], 4
      %s4311 = int_to_ptr.vmem [resolvable:$true] %s4310
      %4316 = dma.vmem_to_hbm [thread:$0]  %s4311, 1024, %s10, [#allocation4], 512, 512, 32
    $region73: #{tpu_custom_call.1} parent=1 // pred_fallthru
      _
    // Predicated region
    $region74: #{tpu_custom_call.1} parent=1 // pred_check
      _
    $region75: #{tpu_custom_call.1} parent=1 // pred_check_branch
      %4318 = sbr.rel (0) target = $region77
    $region76: #{tpu_custom_call.1} parent=1 // pred_region
      %s4320 = ssub.s32 1024, 1024
      %4321 = vsyncadd [#allocation16], %s4320
      %s4322 = sshll.u32 [#allocation15], 4
      %s4323 = int_to_ptr.vmem [resolvable:$true] %s4322
      %4328 = dma.vmem_to_hbm [thread:$0]  %s4323, 1024, %s11, [#allocation16], 512, 512, 32
    $region77: #{tpu_custom_call.1} parent=1 // pred_fallthru
      _
    // Predicated region
    $region78: #{tpu_custom_call.1} parent=1 // pred_check
      _
    $region79: #{tpu_custom_call.1} parent=1 // pred_check_branch
      %4330 = sbr.rel (0) target = $region81
    $region80: #{tpu_custom_call.1} parent=1 // pred_region
      %4331 = dma.done [#allocation4], 1024
    $region81: #{tpu_custom_call.1} parent=1 // pred_fallthru
      _
    // Predicated region
    $region82: #{tpu_custom_call.1} parent=1 // pred_check
      _
    $region83: #{tpu_custom_call.1} parent=1 // pred_check_branch
      %4333 = sbr.rel (0) target = $region85
    $region84: #{tpu_custom_call.1} parent=1 // pred_region
      %4334 = dma.done [#allocation16], 1024
    $region85: #{tpu_custom_call.1} parent=1 // pred_fallthru
      _
    %4335 = vsyncpa [#allocation3], 1
    %4336 = vsyncpa [#allocation6], 1
    %4337 = vsyncpa [#allocation9], 1
    %4338 = vsyncpa [#allocation12], 1
    %4339 = vsyncpa [#allocation4], 1
    %4340 = vsyncpa [#allocation16], 1

</llo_original>
